<compile_context>
chip_gen: v5e
topology: v5e:2x2
jax: 0.10.0
libtpu: 0.0.40
codegen_flags: <defaults>
</compile_context>

<pallas_src>
import numpy as np
import jax
import jax.numpy as jnp
from jax.experimental import pallas as pl
from jax.experimental.pallas import tpu as pltpu


# ---------------------------------------------------------------------------
# The fused kernel (one grid step == `sb` samples, fully unrolled)
# ---------------------------------------------------------------------------
def _make_net_kernel(sb):
    def kernel(x_ref, w1b_ref, b1_ref, r1e_ref, r1o_ref,
               w2b_ref, b2_ref, r2e_ref, r2o_ref,
               wf1_ref, bf1_ref, wf2_ref, bf2_ref, wf3_ref, bf3_ref,
               o_ref, p1_ref, p2_ref):
        f32 = jnp.float32

        for s in range(sb):
            # ---- conv1 (3->6, 5x5) + bias + ReLU ----------------------------
            # x_ref[s] : [40, 256]  rows = input row h (32 valid + zero pad),
            #                       lanes = ci*32 + w  (ci padded 3->8).
            # y1       : [32, 256]  rows = oh (28 valid),
            #                       lanes = (ow % 2)*128 + co*16 + ow//2.
            y1 = jnp.dot(x_ref[s, 0:32, :], w1b_ref[0], preferred_element_type=f32)
            for kh in range(1, 5):
                y1 = y1 + jnp.dot(x_ref[s, kh:kh + 32, :], w1b_ref[kh],
                                  preferred_element_type=f32)
            y1 = jnp.maximum(y1 + b1_ref[...], 0.0)

            # ---- maxpool 2x2 -------------------------------------------------
            # column pairs = the two 128-lane parity halves; row pairs via 0/1
            # selector matmuls (XLU-free, lane-aligned).
            c1 = jnp.maximum(y1[:, :128], y1[:, 128:])                    # [32, 128]
            p1_ref[...] = jnp.maximum(
                jnp.dot(r1e_ref[...], c1, preferred_element_type=f32),
                jnp.dot(r1o_ref[...], c1, preferred_element_type=f32))    # [24, 128]

            # ---- conv2 (6->16, 5x5) + bias + ReLU ----------------------------
            # p1 : rows = pooled row (14 valid + zeros), lanes = ci*16 + w2.
            # y2 : [16, 256]  rows = oh (10 valid),
            #                 lanes = (ow % 2)*128 + co*8 + ow//2.
            y2 = jnp.dot(p1_ref[0:16, :], w2b_ref[0], preferred_element_type=f32)
            for kh in range(1, 5):
                y2 = y2 + jnp.dot(p1_ref[kh:kh + 16, :], w2b_ref[kh],
                                  preferred_element_type=f32)
            y2 = jnp.maximum(y2 + b2_ref[...], 0.0)

            # ---- maxpool 2x2 -------------------------------------------------
            c2 = jnp.maximum(y2[:, :128], y2[:, 128:])                    # [16, 128]
            p2_ref[...] = jnp.maximum(
                jnp.dot(r2e_ref[...], c2, preferred_element_type=f32),
                jnp.dot(r2o_ref[...], c2, preferred_element_type=f32))    # [8, 128]

            # ---- fc1 + ReLU (PyTorch CHW flatten folded into per-row slabs) --
            h = jnp.dot(p2_ref[0:1, :], wf1_ref[0], preferred_element_type=f32)
            for hh in range(1, 5):
                h = h + jnp.dot(p2_ref[hh:hh + 1, :], wf1_ref[hh],
                                preferred_element_type=f32)
            h = jnp.maximum(h + bf1_ref[...], 0.0)                        # [1, 128]

            # ---- fc2 + ReLU, fc3 ----------------------------------------------
            h = jnp.broadcast_to(h, (8, 128))        # sublane replicate -> full tile
            h = jnp.maximum(jnp.dot(h, wf2_ref[...], preferred_element_type=f32)
                            + bf2_ref[...], 0.0)
            o_ref[s] = (jnp.dot(h, wf3_ref[...], preferred_element_type=f32)
                        + bf3_ref[...])

    return kernel


def _pick_samples_per_step(batch):
    # Amortize per-grid-step overhead at larger batches while keeping the grid
    # length >= 2 so a v7x megacore can still shard samples across its 2 TCs.
    for sb in (8, 4, 2):
        if batch % sb == 0 and batch // sb >= 2:
            return sb
    return 1


# ---------------------------------------------------------------------------
# Wrapper: one pallas_call for the whole net, gridded over sample groups
# ---------------------------------------------------------------------------
def net_forward(x_nchw, params):
    B = x_nchw.shape[0]
    x = x_nchw.astype(jnp.float32)
    # One-time layout prep (tiny): pad Cin 3->8, go to [B, H, Cin*W] with
    # channel-major lanes, pad H 32->40 so every kh-shifted 32-row slice is valid.
    x = jnp.pad(x, ((0, 0), (0, 5), (0, 0), (0, 0)))            # [B, 8, 32, 32]
    x = x.transpose(0, 2, 1, 3).reshape(B, 32, 256)             # [B, 32, 256]
    x = jnp.pad(x, ((0, 0), (0, 8), (0, 0)))                    # [B, 40, 256]

    sb = _pick_samples_per_step(B)
    grid = (B // sb,)
    p = params

    def full(name):
        a = p[name]
        return pl.BlockSpec(a.shape, lambda b, _nd=a.ndim: (0,) * _nd)

    out = pl.pallas_call(
        _make_net_kernel(sb),
        out_shape=jax.ShapeDtypeStruct((B, 8, 128), jnp.float32),
        grid=grid,
        in_specs=[
            pl.BlockSpec((sb, 40, 256), lambda b: (b, 0, 0)),
            full("w1band"), full("b1v"), full("r1e"), full("r1o"),
            full("w2band"), full("b2v"), full("r2e"), full("r2o"),
            full("wf1"), full("bf1"), full("wf2"), full("bf2"),
            full("wf3"), full("bf3"),
        ],
        out_specs=pl.BlockSpec((sb, 8, 128), lambda b: (b, 0, 0)),
        scratch_shapes=[
            pltpu.VMEM((24, 128), jnp.float32),   # pooled conv1 activations
            pltpu.VMEM((8, 128), jnp.float32),    # pooled conv2 activations
        ],
        compiler_params=pltpu.CompilerParams(
            dimension_semantics=("parallel",)),
    )(x, p["w1band"], p["b1v"], p["r1e"], p["r1o"],
      p["w2band"], p["b2v"], p["r2e"], p["r2o"],
      p["wf1"], p["bf1"], p["wf2"], p["bf2"], p["wf3"], p["bf3"])
    return out[:, 0, :2]


# ---------------------------------------------------------------------------
# Raw parameters in PyTorch layout (synthetic, deterministic)
# ---------------------------------------------------------------------------
def init_raw_params(key):
    ks = jax.random.split(key, 10)

    def u(k, shape, fan_in):
        bound = float(1.0 / np.sqrt(fan_in))
        return jax.random.uniform(k, shape, dtype=jnp.float32,
                                  minval=-bound, maxval=bound)

    return {
        "conv1_w": u(ks[0], (6, 3, 5, 5), 3 * 25),
        "conv1_b": u(ks[1], (6,), 3 * 25),
        "conv2_w": u(ks[2], (16, 6, 5, 5), 6 * 25),
        "conv2_b": u(ks[3], (16,), 6 * 25),
        "fc1_w": u(ks[4], (120, 400), 400),
        "fc1_b": u(ks[5], (120,), 400),
        "fc2_w": u(ks[6], (84, 120), 120),
        "fc2_b": u(ks[7], (84,), 120),
        "fc3_w": u(ks[8], (2, 84), 84),
        "fc3_b": u(ks[9], (2,), 84),
    }


# ---------------------------------------------------------------------------
# Pack raw PyTorch-layout weights into banded / padded kernel operands (once).
# ---------------------------------------------------------------------------
def pack_params(raw):
    w1 = np.asarray(raw["conv1_w"]); b1 = np.asarray(raw["conv1_b"])
    w2 = np.asarray(raw["conv2_w"]); b2 = np.asarray(raw["conv2_b"])
    f1w = np.asarray(raw["fc1_w"]); f1b = np.asarray(raw["fc1_b"])
    f2w = np.asarray(raw["fc2_w"]); f2b = np.asarray(raw["fc2_b"])
    f3w = np.asarray(raw["fc3_w"]); f3b = np.asarray(raw["fc3_b"])

    # conv1 banded weights: [5(kh), 256, 256]
    #   row  = ci*32 + (ow + kw)              (input lane layout, ci padded 3->8)
    #   col  = (ow % 2)*128 + co*16 + ow//2   (parity-split output lane layout)
    w1band = np.zeros((5, 256, 256), np.float32)
    ow = np.arange(28)
    cols1 = (ow % 2) * 128 + ow // 2
    for kh in range(5):
        for kw in range(5):
            for ci in range(3):
                for co in range(6):
                    w1band[kh, ci * 32 + ow + kw, cols1 + co * 16] = w1[co, ci, kh, kw]
    b1v = np.zeros((1, 256), np.float32)
    for co in range(6):
        b1v[0, cols1 + co * 16] = b1[co]

    # conv2 banded weights: [5(kh), 128, 256]
    #   row = ci*16 + (ow + kw),  col = (ow % 2)*128 + co*8 + ow//2
    w2band = np.zeros((5, 128, 256), np.float32)
    ow2 = np.arange(10)
    cols2 = (ow2 % 2) * 128 + ow2 // 2
    for kh in range(5):
        for kw in range(5):
            for ci in range(6):
                for co in range(16):
                    w2band[kh, ci * 16 + ow2 + kw, cols2 + co * 8] = w2[co, ci, kh, kw]
    b2v = np.zeros((1, 256), np.float32)
    for co in range(16):
        b2v[0, cols2 + co * 8] = b2[co]

    # max-pool row selectors (even / odd rows)
    r1e = np.zeros((24, 32), np.float32)
    r1o = np.zeros((24, 32), np.float32)
    for i in range(14):
        r1e[i, 2 * i] = 1.0
        r1o[i, 2 * i + 1] = 1.0
    r2e = np.zeros((8, 16), np.float32)
    r2o = np.zeros((8, 16), np.float32)
    for i in range(5):
        r2e[i, 2 * i] = 1.0
        r2o[i, 2 * i + 1] = 1.0

    # fc1: PyTorch CHW flatten (idx = co*25 + h*5 + w) folded into per-h slabs.
    wf1 = np.zeros((5, 128, 128), np.float32)
    for h in range(5):
        for co in range(16):
            for w in range(5):
                wf1[h, co * 8 + w, :120] = f1w[:, co * 25 + h * 5 + w]
    bf1 = np.zeros((1, 128), np.float32); bf1[0, :120] = f1b
    wf2 = np.zeros((128, 128), np.float32); wf2[:120, :84] = f2w.T
    bf2 = np.zeros((1, 128), np.float32); bf2[0, :84] = f2b
    wf3 = np.zeros((128, 128), np.float32); wf3[:84, :2] = f3w.T
    bf3 = np.zeros((1, 128), np.float32); bf3[0, :2] = f3b

    packed = {
        "w1band": w1band, "b1v": b1v, "r1e": r1e, "r1o": r1o,
        "w2band": w2band, "b2v": b2v, "r2e": r2e, "r2o": r2o,
        "wf1": wf1, "bf1": bf1, "wf2": wf2, "bf2": bf2, "wf3": wf3, "bf3": bf3,
    }
    return {k: jnp.asarray(v) for k, v in packed.items()}


# ---------------------------------------------------------------------------
# Pure-JAX reference (mirrors the PyTorch module) for a correctness check
# ---------------------------------------------------------------------------
def reference_forward(x, raw):
    hp = jax.lax.Precision.HIGHEST
    dn = ("NCHW", "OIHW", "NCHW")

    def pool(y):
        b, c, h, w = y.shape
        return y.reshape(b, c, h // 2, 2, w // 2, 2).max(axis=(3, 5))

    y = jax.lax.conv_general_dilated(x, raw["conv1_w"], (1, 1), "VALID",
                                     dimension_numbers=dn, precision=hp)
    y = pool(jnp.maximum(y + raw["conv1_b"][None, :, None, None], 0.0))
    y = jax.lax.conv_general_dilated(y, raw["conv2_w"], (1, 1), "VALID",
                                     dimension_numbers=dn, precision=hp)
    y = pool(jnp.maximum(y + raw["conv2_b"][None, :, None, None], 0.0))
    y = y.reshape(y.shape[0], -1)                                  # CHW flatten
    y = jnp.maximum(jnp.dot(y, raw["fc1_w"].T, precision=hp) + raw["fc1_b"], 0.0)
    y = jnp.maximum(jnp.dot(y, raw["fc2_w"].T, precision=hp) + raw["fc2_b"], 0.0)
    return jnp.dot(y, raw["fc3_w"].T, precision=hp) + raw["fc3_b"]


if __name__ == "__main__":
    raw = init_raw_params(jax.random.PRNGKey(42))
    params = pack_params(raw)

    # Net.__init__ implies 3-channel 32x32 input (16*5*5 flatten).
    x = jax.random.normal(jax.random.PRNGKey(0), (2, 3, 32, 32), jnp.float32)

    fwd = jax.jit(net_forward)
    out = jax.block_until_ready(fwd(x, params))
    assert out.shape == (2, 2)

    ref = jax.block_until_ready(jax.jit(reference_forward)(x, raw))
    np.testing.assert_allclose(np.asarray(out), np.asarray(ref),
                               rtol=5e-3, atol=5e-3)

    print("KERNEL_OK")
</pallas_src>

<mosaic_0001>
module attributes {stable_mosaic.version = 11 : i64} {
  func.func @kernel(%arg0: i32, %arg1: memref<1x40x256xf32, #tpu.memory_space<vmem>>, %arg2: memref<5x256x256xf32, #tpu.memory_space<vmem>>, %arg3: memref<1x256xf32, #tpu.memory_space<vmem>>, %arg4: memref<24x32xf32, #tpu.memory_space<vmem>>, %arg5: memref<24x32xf32, #tpu.memory_space<vmem>>, %arg6: memref<5x128x256xf32, #tpu.memory_space<vmem>>, %arg7: memref<1x256xf32, #tpu.memory_space<vmem>>, %arg8: memref<8x16xf32, #tpu.memory_space<vmem>>, %arg9: memref<8x16xf32, #tpu.memory_space<vmem>>, %arg10: memref<5x128x128xf32, #tpu.memory_space<vmem>>, %arg11: memref<1x128xf32, #tpu.memory_space<vmem>>, %arg12: memref<128x128xf32, #tpu.memory_space<vmem>>, %arg13: memref<1x128xf32, #tpu.memory_space<vmem>>, %arg14: memref<128x128xf32, #tpu.memory_space<vmem>>, %arg15: memref<1x128xf32, #tpu.memory_space<vmem>>, %arg16: memref<1x8x128xf32, #tpu.memory_space<vmem>>, %arg17: memref<24x128xf32, #tpu.memory_space<vmem>>, %arg18: memref<8x128xf32, #tpu.memory_space<vmem>>) attributes {dimension_semantics = [#tpu.dimension_semantics<parallel>], iteration_bounds = array<i64: 2>, scalar_prefetch = 0 : i64, scratch_operands = 2 : i64, tpu.core_type = #tpu.core_type<tc>, window_params = [{transform_indices = @transform_0, window_bounds = array<i64: 1, 40, 256>}, {pipeline_mode = #tpu.pipeline_mode<synchronous>, transform_indices = @transform_1, window_bounds = array<i64: 5, 256, 256>}, {pipeline_mode = #tpu.pipeline_mode<synchronous>, transform_indices = @transform_2, window_bounds = array<i64: 1, 256>}, {pipeline_mode = #tpu.pipeline_mode<synchronous>, transform_indices = @transform_3, window_bounds = array<i64: 24, 32>}, {pipeline_mode = #tpu.pipeline_mode<synchronous>, transform_indices = @transform_4, window_bounds = array<i64: 24, 32>}, {pipeline_mode = #tpu.pipeline_mode<synchronous>, transform_indices = @transform_5, window_bounds = array<i64: 5, 128, 256>}, {pipeline_mode = #tpu.pipeline_mode<synchronous>, transform_indices = @transform_6, window_bounds = array<i64: 1, 256>}, {pipeline_mode = #tpu.pipeline_mode<synchronous>, transform_indices = @transform_7, window_bounds = array<i64: 8, 16>}, {pipeline_mode = #tpu.pipeline_mode<synchronous>, transform_indices = @transform_8, window_bounds = array<i64: 8, 16>}, {pipeline_mode = #tpu.pipeline_mode<synchronous>, transform_indices = @transform_9, window_bounds = array<i64: 5, 128, 128>}, {pipeline_mode = #tpu.pipeline_mode<synchronous>, transform_indices = @transform_10, window_bounds = array<i64: 1, 128>}, {pipeline_mode = #tpu.pipeline_mode<synchronous>, transform_indices = @transform_11, window_bounds = array<i64: 128, 128>}, {pipeline_mode = #tpu.pipeline_mode<synchronous>, transform_indices = @transform_12, window_bounds = array<i64: 1, 128>}, {pipeline_mode = #tpu.pipeline_mode<synchronous>, transform_indices = @transform_13, window_bounds = array<i64: 128, 128>}, {pipeline_mode = #tpu.pipeline_mode<synchronous>, transform_indices = @transform_14, window_bounds = array<i64: 1, 128>}, {transform_indices = @transform_15, window_bounds = array<i64: 1, 8, 128>}]} {
    %c0 = arith.constant 0 : index
    %c0_0 = arith.constant 0 : index
    %c0_1 = arith.constant 0 : index
    %0 = vector.load %arg1[%c0, %c0_0, %c0_1] : memref<1x40x256xf32, #tpu.memory_space<vmem>>, vector<1x32x256xf32>
    %1 = vector.shape_cast %0 : vector<1x32x256xf32> to vector<32x256xf32>
    %c0_2 = arith.constant 0 : index
    %c0_3 = arith.constant 0 : index
    %c0_4 = arith.constant 0 : index
    %2 = vector.load %arg2[%c0_2, %c0_3, %c0_4] : memref<5x256x256xf32, #tpu.memory_space<vmem>>, vector<1x256x256xf32>
    %3 = vector.shape_cast %2 : vector<1x256x256xf32> to vector<256x256xf32>
    %cst = arith.constant dense<0.000000e+00> : vector<32x256xf32>
    %4 = tpu.matmul %1, %3, %cst {dimension_numbers = #tpu.dot_dimension_numbers<[1], [0], [0], [1], [0, 0, 1, 1], [], []>} : vector<32x256xf32>, vector<256x256xf32>, vector<32x256xf32> -> vector<32x256xf32>
    %c0_5 = arith.constant 0 : index
    %c1 = arith.constant 1 : index
    %c0_6 = arith.constant 0 : index
    %5 = vector.load %arg1[%c0_5, %c1, %c0_6] : memref<1x40x256xf32, #tpu.memory_space<vmem>>, vector<1x32x256xf32>
    %6 = vector.shape_cast %5 : vector<1x32x256xf32> to vector<32x256xf32>
    %c1_7 = arith.constant 1 : index
    %c0_8 = arith.constant 0 : index
    %c0_9 = arith.constant 0 : index
    %7 = vector.load %arg2[%c1_7, %c0_8, %c0_9] : memref<5x256x256xf32, #tpu.memory_space<vmem>>, vector<1x256x256xf32>
    %8 = vector.shape_cast %7 : vector<1x256x256xf32> to vector<256x256xf32>
    %cst_10 = arith.constant dense<0.000000e+00> : vector<32x256xf32>
    %9 = tpu.matmul %6, %8, %cst_10 {dimension_numbers = #tpu.dot_dimension_numbers<[1], [0], [0], [1], [0, 0, 1, 1], [], []>} : vector<32x256xf32>, vector<256x256xf32>, vector<32x256xf32> -> vector<32x256xf32>
    %10 = arith.addf %4, %9 : vector<32x256xf32>
    %c0_11 = arith.constant 0 : index
    %c2 = arith.constant 2 : index
    %c0_12 = arith.constant 0 : index
    %11 = vector.load %arg1[%c0_11, %c2, %c0_12] : memref<1x40x256xf32, #tpu.memory_space<vmem>>, vector<1x32x256xf32>
    %12 = vector.shape_cast %11 : vector<1x32x256xf32> to vector<32x256xf32>
    %c2_13 = arith.constant 2 : index
    %c0_14 = arith.constant 0 : index
    %c0_15 = arith.constant 0 : index
    %13 = vector.load %arg2[%c2_13, %c0_14, %c0_15] : memref<5x256x256xf32, #tpu.memory_space<vmem>>, vector<1x256x256xf32>
    %14 = vector.shape_cast %13 : vector<1x256x256xf32> to vector<256x256xf32>
    %cst_16 = arith.constant dense<0.000000e+00> : vector<32x256xf32>
    %15 = tpu.matmul %12, %14, %cst_16 {dimension_numbers = #tpu.dot_dimension_numbers<[1], [0], [0], [1], [0, 0, 1, 1], [], []>} : vector<32x256xf32>, vector<256x256xf32>, vector<32x256xf32> -> vector<32x256xf32>
    %16 = arith.addf %10, %15 : vector<32x256xf32>
    %c0_17 = arith.constant 0 : index
    %c3 = arith.constant 3 : index
    %c0_18 = arith.constant 0 : index
    %17 = vector.load %arg1[%c0_17, %c3, %c0_18] : memref<1x40x256xf32, #tpu.memory_space<vmem>>, vector<1x32x256xf32>
    %18 = vector.shape_cast %17 : vector<1x32x256xf32> to vector<32x256xf32>
    %c3_19 = arith.constant 3 : index
    %c0_20 = arith.constant 0 : index
    %c0_21 = arith.constant 0 : index
    %19 = vector.load %arg2[%c3_19, %c0_20, %c0_21] : memref<5x256x256xf32, #tpu.memory_space<vmem>>, vector<1x256x256xf32>
    %20 = vector.shape_cast %19 : vector<1x256x256xf32> to vector<256x256xf32>
    %cst_22 = arith.constant dense<0.000000e+00> : vector<32x256xf32>
    %21 = tpu.matmul %18, %20, %cst_22 {dimension_numbers = #tpu.dot_dimension_numbers<[1], [0], [0], [1], [0, 0, 1, 1], [], []>} : vector<32x256xf32>, vector<256x256xf32>, vector<32x256xf32> -> vector<32x256xf32>
    %22 = arith.addf %16, %21 : vector<32x256xf32>
    %c0_23 = arith.constant 0 : index
    %c4 = arith.constant 4 : index
    %c0_24 = arith.constant 0 : index
    %23 = vector.load %arg1[%c0_23, %c4, %c0_24] : memref<1x40x256xf32, #tpu.memory_space<vmem>>, vector<1x32x256xf32>
    %24 = vector.shape_cast %23 : vector<1x32x256xf32> to vector<32x256xf32>
    %c4_25 = arith.constant 4 : index
    %c0_26 = arith.constant 0 : index
    %c0_27 = arith.constant 0 : index
    %25 = vector.load %arg2[%c4_25, %c0_26, %c0_27] : memref<5x256x256xf32, #tpu.memory_space<vmem>>, vector<1x256x256xf32>
    %26 = vector.shape_cast %25 : vector<1x256x256xf32> to vector<256x256xf32>
    %cst_28 = arith.constant dense<0.000000e+00> : vector<32x256xf32>
    %27 = tpu.matmul %24, %26, %cst_28 {dimension_numbers = #tpu.dot_dimension_numbers<[1], [0], [0], [1], [0, 0, 1, 1], [], []>} : vector<32x256xf32>, vector<256x256xf32>, vector<32x256xf32> -> vector<32x256xf32>
    %28 = arith.addf %22, %27 : vector<32x256xf32>
    %c0_29 = arith.constant 0 : index
    %c0_30 = arith.constant 0 : index
    %29 = vector.load %arg3[%c0_29, %c0_30] : memref<1x256xf32, #tpu.memory_space<vmem>>, vector<1x256xf32>
    %30 = vector.broadcast %29 : vector<1x256xf32> to vector<32x256xf32>
    %31 = arith.addf %28, %30 : vector<32x256xf32>
    %cst_31 = arith.constant 0.000000e+00 : f32
    %32 = vector.broadcast %cst_31 : f32 to vector<32x256xf32>
    %33 = arith.maximumf %31, %32 : vector<32x256xf32>
    %34 = vector.extract_strided_slice %33 {offsets = [0, 0], sizes = [32, 128], strides = [1, 1]} : vector<32x256xf32> to vector<32x128xf32>
    %35 = vector.extract_strided_slice %33 {offsets = [0, 128], sizes = [32, 128], strides = [1, 1]} : vector<32x256xf32> to vector<32x128xf32>
    %36 = arith.maximumf %34, %35 : vector<32x128xf32>
    %c0_32 = arith.constant 0 : index
    %c0_33 = arith.constant 0 : index
    %37 = vector.load %arg4[%c0_32, %c0_33] : memref<24x32xf32, #tpu.memory_space<vmem>>, vector<24x32xf32>
    %cst_34 = arith.constant dense<0.000000e+00> : vector<24x128xf32>
    %38 = tpu.matmul %37, %36, %cst_34 {dimension_numbers = #tpu.dot_dimension_numbers<[1], [0], [0], [1], [0, 0, 1, 1], [], []>} : vector<24x32xf32>, vector<32x128xf32>, vector<24x128xf32> -> vector<24x128xf32>
    %c0_35 = arith.constant 0 : index
    %c0_36 = arith.constant 0 : index
    %39 = vector.load %arg5[%c0_35, %c0_36] : memref<24x32xf32, #tpu.memory_space<vmem>>, vector<24x32xf32>
    %cst_37 = arith.constant dense<0.000000e+00> : vector<24x128xf32>
    %40 = tpu.matmul %39, %36, %cst_37 {dimension_numbers = #tpu.dot_dimension_numbers<[1], [0], [0], [1], [0, 0, 1, 1], [], []>} : vector<24x32xf32>, vector<32x128xf32>, vector<24x128xf32> -> vector<24x128xf32>
    %41 = arith.maximumf %38, %40 : vector<24x128xf32>
    %c0_38 = arith.constant 0 : index
    %c0_39 = arith.constant 0 : index
    %42 = vector.load %arg17[%c0_38, %c0_39] : memref<24x128xf32, #tpu.memory_space<vmem>>, vector<24x128xf32>
    tpu.vector_store %arg17[%c0_38, %c0_39], %41 {strides = array<i32>} : memref<24x128xf32, #tpu.memory_space<vmem>>, vector<24x128xf32>,
    %c0_40 = arith.constant 0 : index
    %c0_41 = arith.constant 0 : index
    %43 = vector.load %arg17[%c0_40, %c0_41] : memref<24x128xf32, #tpu.memory_space<vmem>>, vector<16x128xf32>
    %c0_42 = arith.constant 0 : index
    %c0_43 = arith.constant 0 : index
    %c0_44 = arith.constant 0 : index
    %44 = vector.load %arg6[%c0_42, %c0_43, %c0_44] : memref<5x128x256xf32, #tpu.memory_space<vmem>>, vector<1x128x256xf32>
    %45 = vector.shape_cast %44 : vector<1x128x256xf32> to vector<128x256xf32>
    %cst_45 = arith.constant dense<0.000000e+00> : vector<16x256xf32>
    %46 = tpu.matmul %43, %45, %cst_45 {dimension_numbers = #tpu.dot_dimension_numbers<[1], [0], [0], [1], [0, 0, 1, 1], [], []>} : vector<16x128xf32>, vector<128x256xf32>, vector<16x256xf32> -> vector<16x256xf32>
    %c1_46 = arith.constant 1 : index
    %c0_47 = arith.constant 0 : index
    %47 = vector.load %arg17[%c1_46, %c0_47] : memref<24x128xf32, #tpu.memory_space<vmem>>, vector<16x128xf32>
    %c1_48 = arith.constant 1 : index
    %c0_49 = arith.constant 0 : index
    %c0_50 = arith.constant 0 : index
    %48 = vector.load %arg6[%c1_48, %c0_49, %c0_50] : memref<5x128x256xf32, #tpu.memory_space<vmem>>, vector<1x128x256xf32>
    %49 = vector.shape_cast %48 : vector<1x128x256xf32> to vector<128x256xf32>
    %cst_51 = arith.constant dense<0.000000e+00> : vector<16x256xf32>
    %50 = tpu.matmul %47, %49, %cst_51 {dimension_numbers = #tpu.dot_dimension_numbers<[1], [0], [0], [1], [0, 0, 1, 1], [], []>} : vector<16x128xf32>, vector<128x256xf32>, vector<16x256xf32> -> vector<16x256xf32>
    %51 = arith.addf %46, %50 : vector<16x256xf32>
    %c2_52 = arith.constant 2 : index
    %c0_53 = arith.constant 0 : index
    %52 = vector.load %arg17[%c2_52, %c0_53] : memref<24x128xf32, #tpu.memory_space<vmem>>, vector<16x128xf32>
    %c2_54 = arith.constant 2 : index
    %c0_55 = arith.constant 0 : index
    %c0_56 = arith.constant 0 : index
    %53 = vector.load %arg6[%c2_54, %c0_55, %c0_56] : memref<5x128x256xf32, #tpu.memory_space<vmem>>, vector<1x128x256xf32>
    %54 = vector.shape_cast %53 : vector<1x128x256xf32> to vector<128x256xf32>
    %cst_57 = arith.constant dense<0.000000e+00> : vector<16x256xf32>
    %55 = tpu.matmul %52, %54, %cst_57 {dimension_numbers = #tpu.dot_dimension_numbers<[1], [0], [0], [1], [0, 0, 1, 1], [], []>} : vector<16x128xf32>, vector<128x256xf32>, vector<16x256xf32> -> vector<16x256xf32>
    %56 = arith.addf %51, %55 : vector<16x256xf32>
    %c3_58 = arith.constant 3 : index
    %c0_59 = arith.constant 0 : index
    %57 = vector.load %arg17[%c3_58, %c0_59] : memref<24x128xf32, #tpu.memory_space<vmem>>, vector<16x128xf32>
    %c3_60 = arith.constant 3 : index
    %c0_61 = arith.constant 0 : index
    %c0_62 = arith.constant 0 : index
    %58 = vector.load %arg6[%c3_60, %c0_61, %c0_62] : memref<5x128x256xf32, #tpu.memory_space<vmem>>, vector<1x128x256xf32>
    %59 = vector.shape_cast %58 : vector<1x128x256xf32> to vector<128x256xf32>
    %cst_63 = arith.constant dense<0.000000e+00> : vector<16x256xf32>
    %60 = tpu.matmul %57, %59, %cst_63 {dimension_numbers = #tpu.dot_dimension_numbers<[1], [0], [0], [1], [0, 0, 1, 1], [], []>} : vector<16x128xf32>, vector<128x256xf32>, vector<16x256xf32> -> vector<16x256xf32>
    %61 = arith.addf %56, %60 : vector<16x256xf32>
    %c4_64 = arith.constant 4 : index
    %c0_65 = arith.constant 0 : index
    %62 = vector.load %arg17[%c4_64, %c0_65] : memref<24x128xf32, #tpu.memory_space<vmem>>, vector<16x128xf32>
    %c4_66 = arith.constant 4 : index
    %c0_67 = arith.constant 0 : index
    %c0_68 = arith.constant 0 : index
    %63 = vector.load %arg6[%c4_66, %c0_67, %c0_68] : memref<5x128x256xf32, #tpu.memory_space<vmem>>, vector<1x128x256xf32>
    %64 = vector.shape_cast %63 : vector<1x128x256xf32> to vector<128x256xf32>
    %cst_69 = arith.constant dense<0.000000e+00> : vector<16x256xf32>
    %65 = tpu.matmul %62, %64, %cst_69 {dimension_numbers = #tpu.dot_dimension_numbers<[1], [0], [0], [1], [0, 0, 1, 1], [], []>} : vector<16x128xf32>, vector<128x256xf32>, vector<16x256xf32> -> vector<16x256xf32>
    %66 = arith.addf %61, %65 : vector<16x256xf32>
    %c0_70 = arith.constant 0 : index
    %c0_71 = arith.constant 0 : index
    %67 = vector.load %arg7[%c0_70, %c0_71] : memref<1x256xf32, #tpu.memory_space<vmem>>, vector<1x256xf32>
    %68 = vector.broadcast %67 : vector<1x256xf32> to vector<16x256xf32>
    %69 = arith.addf %66, %68 : vector<16x256xf32>
    %cst_72 = arith.constant 0.000000e+00 : f32
    %70 = vector.broadcast %cst_72 : f32 to vector<16x256xf32>
    %71 = arith.maximumf %69, %70 : vector<16x256xf32>
    %72 = vector.extract_strided_slice %71 {offsets = [0, 0], sizes = [16, 128], strides = [1, 1]} : vector<16x256xf32> to vector<16x128xf32>
    %73 = vector.extract_strided_slice %71 {offsets = [0, 128], sizes = [16, 128], strides = [1, 1]} : vector<16x256xf32> to vector<16x128xf32>
    %74 = arith.maximumf %72, %73 : vector<16x128xf32>
    %c0_73 = arith.constant 0 : index
    %c0_74 = arith.constant 0 : index
    %75 = vector.load %arg8[%c0_73, %c0_74] : memref<8x16xf32, #tpu.memory_space<vmem>>, vector<8x16xf32>
    %cst_75 = arith.constant dense<0.000000e+00> : vector<8x128xf32>
    %76 = tpu.matmul %75, %74, %cst_75 {dimension_numbers = #tpu.dot_dimension_numbers<[1], [0], [0], [1], [0, 0, 1, 1], [], []>} : vector<8x16xf32>, vector<16x128xf32>, vector<8x128xf32> -> vector<8x128xf32>
    %c0_76 = arith.constant 0 : index
    %c0_77 = arith.constant 0 : index
    %77 = vector.load %arg9[%c0_76, %c0_77] : memref<8x16xf32, #tpu.memory_space<vmem>>, vector<8x16xf32>
    %cst_78 = arith.constant dense<0.000000e+00> : vector<8x128xf32>
    %78 = tpu.matmul %77, %74, %cst_78 {dimension_numbers = #tpu.dot_dimension_numbers<[1], [0], [0], [1], [0, 0, 1, 1], [], []>} : vector<8x16xf32>, vector<16x128xf32>, vector<8x128xf32> -> vector<8x128xf32>
    %79 = arith.maximumf %76, %78 : vector<8x128xf32>
    %c0_79 = arith.constant 0 : index
    %c0_80 = arith.constant 0 : index
    %80 = vector.load %arg18[%c0_79, %c0_80] : memref<8x128xf32, #tpu.memory_space<vmem>>, vector<8x128xf32>
    tpu.vector_store %arg18[%c0_79, %c0_80], %79 {strides = array<i32>} : memref<8x128xf32, #tpu.memory_space<vmem>>, vector<8x128xf32>,
    %c0_81 = arith.constant 0 : index
    %c0_82 = arith.constant 0 : index
    %81 = vector.load %arg18[%c0_81, %c0_82] : memref<8x128xf32, #tpu.memory_space<vmem>>, vector<1x128xf32>
    %c0_83 = arith.constant 0 : index
    %c0_84 = arith.constant 0 : index
    %c0_85 = arith.constant 0 : index
    %82 = vector.load %arg10[%c0_83, %c0_84, %c0_85] : memref<5x128x128xf32, #tpu.memory_space<vmem>>, vector<1x128x128xf32>
    %83 = vector.shape_cast %82 : vector<1x128x128xf32> to vector<128x128xf32>
    %cst_86 = arith.constant dense<0.000000e+00> : vector<1x128xf32>
    %84 = tpu.matmul %81, %83, %cst_86 {dimension_numbers = #tpu.dot_dimension_numbers<[1], [0], [0], [1], [0, 0, 1, 1], [], []>} : vector<1x128xf32>, vector<128x128xf32>, vector<1x128xf32> -> vector<1x128xf32>
    %c1_87 = arith.constant 1 : index
    %c0_88 = arith.constant 0 : index
    %85 = vector.load %arg18[%c1_87, %c0_88] : memref<8x128xf32, #tpu.memory_space<vmem>>, vector<1x128xf32>
    %c1_89 = arith.constant 1 : index
    %c0_90 = arith.constant 0 : index
    %c0_91 = arith.constant 0 : index
    %86 = vector.load %arg10[%c1_89, %c0_90, %c0_91] : memref<5x128x128xf32, #tpu.memory_space<vmem>>, vector<1x128x128xf32>
    %87 = vector.shape_cast %86 : vector<1x128x128xf32> to vector<128x128xf32>
    %cst_92 = arith.constant dense<0.000000e+00> : vector<1x128xf32>
    %88 = tpu.matmul %85, %87, %cst_92 {dimension_numbers = #tpu.dot_dimension_numbers<[1], [0], [0], [1], [0, 0, 1, 1], [], []>} : vector<1x128xf32>, vector<128x128xf32>, vector<1x128xf32> -> vector<1x128xf32>
    %89 = arith.addf %84, %88 : vector<1x128xf32>
    %c2_93 = arith.constant 2 : index
    %c0_94 = arith.constant 0 : index
    %90 = vector.load %arg18[%c2_93, %c0_94] : memref<8x128xf32, #tpu.memory_space<vmem>>, vector<1x128xf32>
    %c2_95 = arith.constant 2 : index
    %c0_96 = arith.constant 0 : index
    %c0_97 = arith.constant 0 : index
    %91 = vector.load %arg10[%c2_95, %c0_96, %c0_97] : memref<5x128x128xf32, #tpu.memory_space<vmem>>, vector<1x128x128xf32>
    %92 = vector.shape_cast %91 : vector<1x128x128xf32> to vector<128x128xf32>
    %cst_98 = arith.constant dense<0.000000e+00> : vector<1x128xf32>
    %93 = tpu.matmul %90, %92, %cst_98 {dimension_numbers = #tpu.dot_dimension_numbers<[1], [0], [0], [1], [0, 0, 1, 1], [], []>} : vector<1x128xf32>, vector<128x128xf32>, vector<1x128xf32> -> vector<1x128xf32>
    %94 = arith.addf %89, %93 : vector<1x128xf32>
    %c3_99 = arith.constant 3 : index
    %c0_100 = arith.constant 0 : index
    %95 = vector.load %arg18[%c3_99, %c0_100] : memref<8x128xf32, #tpu.memory_space<vmem>>, vector<1x128xf32>
    %c3_101 = arith.constant 3 : index
    %c0_102 = arith.constant 0 : index
    %c0_103 = arith.constant 0 : index
    %96 = vector.load %arg10[%c3_101, %c0_102, %c0_103] : memref<5x128x128xf32, #tpu.memory_space<vmem>>, vector<1x128x128xf32>
    %97 = vector.shape_cast %96 : vector<1x128x128xf32> to vector<128x128xf32>
    %cst_104 = arith.constant dense<0.000000e+00> : vector<1x128xf32>
    %98 = tpu.matmul %95, %97, %cst_104 {dimension_numbers = #tpu.dot_dimension_numbers<[1], [0], [0], [1], [0, 0, 1, 1], [], []>} : vector<1x128xf32>, vector<128x128xf32>, vector<1x128xf32> -> vector<1x128xf32>
    %99 = arith.addf %94, %98 : vector<1x128xf32>
    %c4_105 = arith.constant 4 : index
    %c0_106 = arith.constant 0 : index
    %100 = vector.load %arg18[%c4_105, %c0_106] : memref<8x128xf32, #tpu.memory_space<vmem>>, vector<1x128xf32>
    %c4_107 = arith.constant 4 : index
    %c0_108 = arith.constant 0 : index
    %c0_109 = arith.constant 0 : index
    %101 = vector.load %arg10[%c4_107, %c0_108, %c0_109] : memref<5x128x128xf32, #tpu.memory_space<vmem>>, vector<1x128x128xf32>
    %102 = vector.shape_cast %101 : vector<1x128x128xf32> to vector<128x128xf32>
    %cst_110 = arith.constant dense<0.000000e+00> : vector<1x128xf32>
    %103 = tpu.matmul %100, %102, %cst_110 {dimension_numbers = #tpu.dot_dimension_numbers<[1], [0], [0], [1], [0, 0, 1, 1], [], []>} : vector<1x128xf32>, vector<128x128xf32>, vector<1x128xf32> -> vector<1x128xf32>
    %104 = arith.addf %99, %103 : vector<1x128xf32>
    %c0_111 = arith.constant 0 : index
    %c0_112 = arith.constant 0 : index
    %105 = vector.load %arg11[%c0_111, %c0_112] : memref<1x128xf32, #tpu.memory_space<vmem>>, vector<1x128xf32>
    %106 = arith.addf %104, %105 : vector<1x128xf32>
    %cst_113 = arith.constant 0.000000e+00 : f32
    %107 = vector.broadcast %cst_113 : f32 to vector<1x128xf32>
    %108 = arith.maximumf %106, %107 : vector<1x128xf32>
    %109 = vector.shape_cast %108 : vector<1x128xf32> to vector<1x128xf32>
    %110 = vector.broadcast %109 : vector<1x128xf32> to vector<8x128xf32>
    %c0_114 = arith.constant 0 : index
    %c0_115 = arith.constant 0 : index
    %111 = vector.load %arg12[%c0_114, %c0_115] : memref<128x128xf32, #tpu.memory_space<vmem>>, vector<128x128xf32>
    %cst_116 = arith.constant dense<0.000000e+00> : vector<8x128xf32>
    %112 = tpu.matmul %110, %111, %cst_116 {dimension_numbers = #tpu.dot_dimension_numbers<[1], [0], [0], [1], [0, 0, 1, 1], [], []>} : vector<8x128xf32>, vector<128x128xf32>, vector<8x128xf32> -> vector<8x128xf32>
    %c0_117 = arith.constant 0 : index
    %c0_118 = arith.constant 0 : index
    %113 = vector.load %arg13[%c0_117, %c0_118] : memref<1x128xf32, #tpu.memory_space<vmem>>, vector<1x128xf32>
    %114 = vector.broadcast %113 : vector<1x128xf32> to vector<8x128xf32>
    %115 = arith.addf %112, %114 : vector<8x128xf32>
    %cst_119 = arith.constant 0.000000e+00 : f32
    %116 = vector.broadcast %cst_119 : f32 to vector<8x128xf32>
    %117 = arith.maximumf %115, %116 : vector<8x128xf32>
    %c0_120 = arith.constant 0 : index
    %c0_121 = arith.constant 0 : index
    %118 = vector.load %arg14[%c0_120, %c0_121] : memref<128x128xf32, #tpu.memory_space<vmem>>, vector<128x128xf32>
    %cst_122 = arith.constant dense<0.000000e+00> : vector<8x128xf32>
    %119 = tpu.matmul %117, %118, %cst_122 {dimension_numbers = #tpu.dot_dimension_numbers<[1], [0], [0], [1], [0, 0, 1, 1], [], []>} : vector<8x128xf32>, vector<128x128xf32>, vector<8x128xf32> -> vector<8x128xf32>
    %c0_123 = arith.constant 0 : index
    %c0_124 = arith.constant 0 : index
    %120 = vector.load %arg15[%c0_123, %c0_124] : memref<1x128xf32, #tpu.memory_space<vmem>>, vector<1x128xf32>
    %121 = vector.broadcast %120 : vector<1x128xf32> to vector<8x128xf32>
    %122 = arith.addf %119, %121 : vector<8x128xf32>
    %c0_125 = arith.constant 0 : index
    %c0_126 = arith.constant 0 : index
    %c0_127 = arith.constant 0 : index
    %123 = vector.load %arg16[%c0_125, %c0_126, %c0_127] : memref<1x8x128xf32, #tpu.memory_space<vmem>>, vector<1x8x128xf32>
    %124 = vector.shape_cast %123 : vector<1x8x128xf32> to vector<8x128xf32>
    %125 = vector.shape_cast %122 : vector<8x128xf32> to vector<1x8x128xf32>
    tpu.vector_store %arg16[%c0_125, %c0_126, %c0_127], %125 {strides = array<i32>} : memref<1x8x128xf32, #tpu.memory_space<vmem>>, vector<1x8x128xf32>,
    return
  }
  func.func @transform_0(%arg0: i32) -> (i32, i32, i32) {
    %c0_i32 = arith.constant 0 : i32
    %c0_i32_0 = arith.constant 0 : i32
    %c0_i32_1 = arith.constant 0 : i32
    return %arg0, %c0_i32, %c0_i32_0 : i32, i32, i32
  }
  func.func @transform_1(%arg0: i32) -> (i32, i32, i32) {
    %c0_i32 = arith.constant 0 : i32
    %c0_i32_0 = arith.constant 0 : i32
    %c0_i32_1 = arith.constant 0 : i32
    %c0_i32_2 = arith.constant 0 : i32
    return %c0_i32, %c0_i32_0, %c0_i32_1 : i32, i32, i32
  }
  func.func @transform_2(%arg0: i32) -> (i32, i32) {
    %c0_i32 = arith.constant 0 : i32
    %c0_i32_0 = arith.constant 0 : i32
    %c0_i32_1 = arith.constant 0 : i32
    return %c0_i32, %c0_i32_0 : i32, i32
  }
  func.func @transform_3(%arg0: i32) -> (i32, i32) {
    %c0_i32 = arith.constant 0 : i32
    %c0_i32_0 = arith.constant 0 : i32
    %c0_i32_1 = arith.constant 0 : i32
    return %c0_i32, %c0_i32_0 : i32, i32
  }
  func.func @transform_4(%arg0: i32) -> (i32, i32) {
    %c0_i32 = arith.constant 0 : i32
    %c0_i32_0 = arith.constant 0 : i32
    %c0_i32_1 = arith.constant 0 : i32
    return %c0_i32, %c0_i32_0 : i32, i32
  }
  func.func @transform_5(%arg0: i32) -> (i32, i32, i32) {
    %c0_i32 = arith.constant 0 : i32
    %c0_i32_0 = arith.constant 0 : i32
    %c0_i32_1 = arith.constant 0 : i32
    %c0_i32_2 = arith.constant 0 : i32
    return %c0_i32, %c0_i32_0, %c0_i32_1 : i32, i32, i32
  }
  func.func @transform_6(%arg0: i32) -> (i32, i32) {
    %c0_i32 = arith.constant 0 : i32
    %c0_i32_0 = arith.constant 0 : i32
    %c0_i32_1 = arith.constant 0 : i32
    return %c0_i32, %c0_i32_0 : i32, i32
  }
  func.func @transform_7(%arg0: i32) -> (i32, i32) {
    %c0_i32 = arith.constant 0 : i32
    %c0_i32_0 = arith.constant 0 : i32
    %c0_i32_1 = arith.constant 0 : i32
    return %c0_i32, %c0_i32_0 : i32, i32
  }
  func.func @transform_8(%arg0: i32) -> (i32, i32) {
    %c0_i32 = arith.constant 0 : i32
    %c0_i32_0 = arith.constant 0 : i32
    %c0_i32_1 = arith.constant 0 : i32
    return %c0_i32, %c0_i32_0 : i32, i32
  }
  func.func @transform_9(%arg0: i32) -> (i32, i32, i32) {
    %c0_i32 = arith.constant 0 : i32
    %c0_i32_0 = arith.constant 0 : i32
    %c0_i32_1 = arith.constant 0 : i32
    %c0_i32_2 = arith.constant 0 : i32
    return %c0_i32, %c0_i32_0, %c0_i32_1 : i32, i32, i32
  }
  func.func @transform_10(%arg0: i32) -> (i32, i32) {
    %c0_i32 = arith.constant 0 : i32
    %c0_i32_0 = arith.constant 0 : i32
    %c0_i32_1 = arith.constant 0 : i32
    return %c0_i32, %c0_i32_0 : i32, i32
  }
  func.func @transform_11(%arg0: i32) -> (i32, i32) {
    %c0_i32 = arith.constant 0 : i32
    %c0_i32_0 = arith.constant 0 : i32
    %c0_i32_1 = arith.constant 0 : i32
    return %c0_i32, %c0_i32_0 : i32, i32
  }
  func.func @transform_12(%arg0: i32) -> (i32, i32) {
    %c0_i32 = arith.constant 0 : i32
    %c0_i32_0 = arith.constant 0 : i32
    %c0_i32_1 = arith.constant 0 : i32
    return %c0_i32, %c0_i32_0 : i32, i32
  }
  func.func @transform_13(%arg0: i32) -> (i32, i32) {
    %c0_i32 = arith.constant 0 : i32
    %c0_i32_0 = arith.constant 0 : i32
    %c0_i32_1 = arith.constant 0 : i32
    return %c0_i32, %c0_i32_0 : i32, i32
  }
  func.func @transform_14(%arg0: i32) -> (i32, i32) {
    %c0_i32 = arith.constant 0 : i32
    %c0_i32_0 = arith.constant 0 : i32
    %c0_i32_1 = arith.constant 0 : i32
    return %c0_i32, %c0_i32_0 : i32, i32
  }
  func.func @transform_15(%arg0: i32) -> (i32, i32, i32) {
    %c0_i32 = arith.constant 0 : i32
    %c0_i32_0 = arith.constant 0 : i32
    %c0_i32_1 = arith.constant 0 : i32
    return %arg0, %c0_i32, %c0_i32_0 : i32, i32, i32
  }
}

</mosaic_0001>

<llo_original>
// kernel: net_forward.1
$region0: #{net_forward.1}
  #allocation0 [shape = 'u32[]', space=smem, size = 0x4, offset = 0x4, fixed_abs, tag = 'smem constant byte address 0x4 - core index']
  #allocation1 [shape = 'u32[72,128]{1,0:T(1,128)}', space=vmem, size = 0x9000, scoped, tag = 'internal scratch']
  #allocation2 [shape = 'f32[24,128]{1,0:T(8,128)}', space=vmem, size = 0x3000, scoped, tag = 'scratch operand']
  #allocation3 [shape = 'f32[8,128]{1,0:T(8,128)}', space=vmem, size = 0x1000, scoped, tag = 'scratch operand']
  %s0 = inlined_call_operand.vmem [shape: f32[2,40,256], index: 0, kind: input, shape index: {}]
  %s1 = inlined_call_operand.vmem [shape: f32[5,256,256], index: 1, kind: input, shape index: {}]
  %s2 = inlined_call_operand.vmem [shape: f32[1,256], index: 2, kind: input, shape index: {}]
  %s3 = inlined_call_operand.vmem [shape: f32[24,32], index: 3, kind: input, shape index: {}]
  %s4 = inlined_call_operand.vmem [shape: f32[24,32], index: 4, kind: input, shape index: {}]
  %s5 = inlined_call_operand.hbm [shape: f32[5,128,256], index: 5, kind: input, shape index: {}]
  %s6 = inlined_call_operand.vmem [shape: f32[1,256], index: 6, kind: input, shape index: {}]
  %s7 = inlined_call_operand.vmem [shape: f32[8,16], index: 7, kind: input, shape index: {}]
  %s8 = inlined_call_operand.vmem [shape: f32[8,16], index: 8, kind: input, shape index: {}]
  %s9 = inlined_call_operand.hbm [shape: f32[5,128,128], index: 9, kind: input, shape index: {}]
  %s10 = inlined_call_operand.vmem [shape: f32[1,128], index: 10, kind: input, shape index: {}]
  %s11 = inlined_call_operand.hbm [shape: f32[128,128], index: 11, kind: input, shape index: {}]
  %s12 = inlined_call_operand.vmem [shape: f32[1,128], index: 12, kind: input, shape index: {}]
  %s13 = inlined_call_operand.hbm [shape: f32[128,128], index: 13, kind: input, shape index: {}]
  %s14 = inlined_call_operand.vmem [shape: f32[1,128], index: 14, kind: input, shape index: {}]
  %s15 = inlined_call_operand.vmem [shape: f32[2,8,128], index: 15, kind: output, shape index: {}]
  %s16 = sld [smem:[#allocation0]]
  $region109: #{net_forward.1} parent=0
    _
  %s18 = ssub.s32 1, %s16
  %s19 = scalar_select 0, %s18, %s16
  $region1: #{net_forward.1} parent=0
    #allocation4 [shape = 'u8[655360]{0}', space=vmem, size = 0xa0000, scoped, tag = 'input window, operand 5, single buffered']
    #allocation5 [shape = 's32[2]{0}', space=sflag, size = 0x8, scoped, tag = 'scoped memory for net_forward.1']
    #allocation6 [shape = 'u8[327680]{0}', space=vmem, size = 0x50000, scoped, tag = 'input window, operand 9, single buffered']
    #allocation7 [shape = 's32[1]{0}', space=sflag, size = 0x4, scoped, tag = 'scoped memory for net_forward.1']
    #allocation8 [shape = 'u8[65536]{0}', space=vmem, size = 0x10000, scoped, tag = 'input window, operand 11, single buffered']
    #allocation9 [shape = 'u8[65536]{0}', space=vmem, size = 0x10000, scoped, tag = 'input window, operand 13, single buffered']
    #allocation10 [shape = 's32[1]{0}', space=sflag, size = 0x4, scoped, tag = 'scoped memory for net_forward.1']
    %20 = vsyncpa [#allocation5], 0
    %21 = vsyncpa [#allocation7], 0
    %22 = vsyncpa [#allocation10], 0
    loop: start=0, step=1, limit=4
    $region2: #{net_forward.1} parent=1 // loop_pre_header
      _
    $region3: #{net_forward.1} parent=1 // loop_header
      %s24 = sphi 0, %s28
      %p25 = scmp.ge.s32.totalorder %s24, 4
      %s34 = sphi 0, %s36
      %s37 = sphi 0, %s34
      %s38 = sphi 0, %s37
      %s54 = sphi 0, %s38
      %s58 = sphi 0, %s58
      %s60 = sphi 0, %s58
      %s61 = sphi 0, %s60
      %s75 = sphi 0, %s61
      %s79 = sphi 0, %s79
      %s81 = sphi 0, %s79
      %s82 = sphi 0, %s81
      %s96 = sphi 0, %s82
      %s100 = sphi 0, %s100
      %s102 = sphi 0, %s100
      %s103 = sphi 0, %s102
      %s117 = sphi 0, %s103
      %s121 = sphi 0, %s121
      %s123 = sphi 0, %s121
      %s124 = sphi 0, %s123
      %s138 = sphi 0, %s124
      %s142 = sphi 0, %s142
      %s144 = sphi 0, %s142
      %s145 = sphi 0, %s144
      %s159 = sphi 0, %s145
      %s163 = sphi 0, %s163
      %s165 = sphi 0, %s163
      %s166 = sphi 0, %s165
      %s180 = sphi 0, %s166
      %s184 = sphi 0, %s184
      %s186 = sphi 0, %s184
      %s187 = sphi 0, %s186
      %s201 = sphi 0, %s187
      %s205 = sphi 0, %s205
      %s207 = sphi 0, %s205
      %s208 = sphi 0, %s207
      %s222 = sphi 0, %s208
      %s226 = sphi 0, %s226
      %s228 = sphi 0, %s226
      %s229 = sphi 0, %s228
      %s243 = sphi 0, %s229
      %s247 = sphi 0, %s247
      %s249 = sphi 0, %s247
      %s250 = sphi 0, %s249
      %s264 = sphi 0, %s250
      %s268 = sphi 0, %s268
      %s270 = sphi 0, %s268
      %s271 = sphi 0, %s270
      %s285 = sphi 0, %s271
      %s289 = sphi 0, %s289
      %s291 = sphi 0, %s289
      %s292 = sphi 0, %s291
      %s306 = sphi 0, %s292
      %s310 = sphi 0, %s310
      %s312 = sphi 0, %s310
      %s313 = sphi 0, %s312
      %s327 = sphi 0, %s313
      %s331 = sphi 0, %s331
      %s333 = sphi 0, %s331
      %s334 = sphi 0, %s333
      %s348 = sphi 0, %s334
      %s354 = sphi 0, %s356
      %s357 = sphi 0, %s354
      %s358 = sphi 0, %s357
      %s374 = sphi 0, %s358
    $region4: #{net_forward.1} parent=1 // loop_header_branch
      %27 = sbr.rel (%p25) target = $region8
    $region5: #{net_forward.1} parent=1 // loop_body
      %s29 = ssub.s32 %s24, 1
      %s30 = ssub.s32 %s24, 2
      %s31 = sadd.s32 %s24, 1
      %s32 = ssub.s32 %s24, %s31
      %p33 = scmp.eq.s32.totalorder %s32, 0
      %s35 = sadd.s32 %s34, 1
      %s36 = scalar_select %p33, %s34, %s35
      %p39 = pneg %p33
      %p40 = scmp.eq.s32.totalorder %s24, 1
      %p41 = por %p39, %p40
      %p42 = scmp.ne.s32.totalorder %s34, %s37
      %p43 = scmp.eq.s32.totalorder %s24, 0
      %p44 = por %p42, %p43
      %p45 = scmp.ne.s32.totalorder %s34, %s37
      %p46 = scmp.eq.s32.totalorder %s29, 1
      %p47 = por %p45, %p46
      %p48 = scmp.ne.s32.totalorder %s37, %s38
      %p49 = scmp.eq.s32.totalorder %s29, 0
      %p50 = por %p48, %p49
      %p51 = scmp.ne.s32.totalorder %s37, %s38
      %p52 = scmp.eq.s32.totalorder %s30, 1
      %p53 = por %p51, %p52
      %p55 = scmp.ne.s32.totalorder %s38, %s54
      %p56 = scmp.eq.s32.totalorder %s30, 0
      %p57 = por %p55, %p56
      %s59 = sadd.s32 %s58, 1
      %p62 = scmp.eq.s32.totalorder %s24, 1
      %p63 = scmp.ne.s32.totalorder %s58, %s60
      %p64 = scmp.eq.s32.totalorder %s24, 0
      %p65 = por %p63, %p64
      %p66 = scmp.ne.s32.totalorder %s58, %s60
      %p67 = scmp.eq.s32.totalorder %s29, 1
      %p68 = por %p66, %p67
      %p69 = scmp.ne.s32.totalorder %s60, %s61
      %p70 = scmp.eq.s32.totalorder %s29, 0
      %p71 = por %p69, %p70
      %p72 = scmp.ne.s32.totalorder %s60, %s61
      %p73 = scmp.eq.s32.totalorder %s30, 1
      %p74 = por %p72, %p73
      %p76 = scmp.ne.s32.totalorder %s61, %s75
      %p77 = scmp.eq.s32.totalorder %s30, 0
      %p78 = por %p76, %p77
      %s80 = sadd.s32 %s79, 1
      %p83 = scmp.eq.s32.totalorder %s24, 1
      %p84 = scmp.ne.s32.totalorder %s79, %s81
      %p85 = scmp.eq.s32.totalorder %s24, 0
      %p86 = por %p84, %p85
      %p87 = scmp.ne.s32.totalorder %s79, %s81
      %p88 = scmp.eq.s32.totalorder %s29, 1
      %p89 = por %p87, %p88
      %p90 = scmp.ne.s32.totalorder %s81, %s82
      %p91 = scmp.eq.s32.totalorder %s29, 0
      %p92 = por %p90, %p91
      %p93 = scmp.ne.s32.totalorder %s81, %s82
      %p94 = scmp.eq.s32.totalorder %s30, 1
      %p95 = por %p93, %p94
      %p97 = scmp.ne.s32.totalorder %s82, %s96
      %p98 = scmp.eq.s32.totalorder %s30, 0
      %p99 = por %p97, %p98
      %s101 = sadd.s32 %s100, 1
      %p104 = scmp.eq.s32.totalorder %s24, 1
      %p105 = scmp.ne.s32.totalorder %s100, %s102
      %p106 = scmp.eq.s32.totalorder %s24, 0
      %p107 = por %p105, %p106
      %p108 = scmp.ne.s32.totalorder %s100, %s102
      %p109 = scmp.eq.s32.totalorder %s29, 1
      %p110 = por %p108, %p109
      %p111 = scmp.ne.s32.totalorder %s102, %s103
      %p112 = scmp.eq.s32.totalorder %s29, 0
      %p113 = por %p111, %p112
      %p114 = scmp.ne.s32.totalorder %s102, %s103
      %p115 = scmp.eq.s32.totalorder %s30, 1
      %p116 = por %p114, %p115
      %p118 = scmp.ne.s32.totalorder %s103, %s117
      %p119 = scmp.eq.s32.totalorder %s30, 0
      %p120 = por %p118, %p119
      %s122 = sadd.s32 %s121, 1
      %p125 = scmp.eq.s32.totalorder %s24, 1
      %p126 = scmp.ne.s32.totalorder %s121, %s123
      %p127 = scmp.eq.s32.totalorder %s24, 0
      %p128 = por %p126, %p127
      %p129 = scmp.ne.s32.totalorder %s121, %s123
      %p130 = scmp.eq.s32.totalorder %s29, 1
      %p131 = por %p129, %p130
      %p132 = scmp.ne.s32.totalorder %s123, %s124
      %p133 = scmp.eq.s32.totalorder %s29, 0
      %p134 = por %p132, %p133
      %p135 = scmp.ne.s32.totalorder %s123, %s124
      %p136 = scmp.eq.s32.totalorder %s30, 1
      %p137 = por %p135, %p136
      %p139 = scmp.ne.s32.totalorder %s124, %s138
      %p140 = scmp.eq.s32.totalorder %s30, 0
      %p141 = por %p139, %p140
      %s143 = sadd.s32 %s142, 1
      %p146 = scmp.eq.s32.totalorder %s24, 1
      %p147 = scmp.ne.s32.totalorder %s142, %s144
      %p148 = scmp.eq.s32.totalorder %s24, 0
      %p149 = por %p147, %p148
      %p150 = scmp.ne.s32.totalorder %s142, %s144
      %p151 = scmp.eq.s32.totalorder %s29, 1
      %p152 = por %p150, %p151
      %p153 = scmp.ne.s32.totalorder %s144, %s145
      %p154 = scmp.eq.s32.totalorder %s29, 0
      %p155 = por %p153, %p154
      %p156 = scmp.ne.s32.totalorder %s144, %s145
      %p157 = scmp.eq.s32.totalorder %s30, 1
      %p158 = por %p156, %p157
      %p160 = scmp.ne.s32.totalorder %s145, %s159
      %p161 = scmp.eq.s32.totalorder %s30, 0
      %p162 = por %p160, %p161
      %s164 = sadd.s32 %s163, 1
      %p167 = scmp.eq.s32.totalorder %s24, 1
      %p168 = scmp.ne.s32.totalorder %s163, %s165
      %p169 = scmp.eq.s32.totalorder %s24, 0
      %p170 = por %p168, %p169
      %p171 = scmp.ne.s32.totalorder %s163, %s165
      %p172 = scmp.eq.s32.totalorder %s29, 1
      %p173 = por %p171, %p172
      %p174 = scmp.ne.s32.totalorder %s165, %s166
      %p175 = scmp.eq.s32.totalorder %s29, 0
      %p176 = por %p174, %p175
      %p177 = scmp.ne.s32.totalorder %s165, %s166
      %p178 = scmp.eq.s32.totalorder %s30, 1
      %p179 = por %p177, %p178
      %p181 = scmp.ne.s32.totalorder %s166, %s180
      %p182 = scmp.eq.s32.totalorder %s30, 0
      %p183 = por %p181, %p182
      %s185 = sadd.s32 %s184, 1
      %p188 = scmp.eq.s32.totalorder %s24, 1
      %p189 = scmp.ne.s32.totalorder %s184, %s186
      %p190 = scmp.eq.s32.totalorder %s24, 0
      %p191 = por %p189, %p190
      %p192 = scmp.ne.s32.totalorder %s184, %s186
      %p193 = scmp.eq.s32.totalorder %s29, 1
      %p194 = por %p192, %p193
      %p195 = scmp.ne.s32.totalorder %s186, %s187
      %p196 = scmp.eq.s32.totalorder %s29, 0
      %p197 = por %p195, %p196
      %p198 = scmp.ne.s32.totalorder %s186, %s187
      %p199 = scmp.eq.s32.totalorder %s30, 1
      %p200 = por %p198, %p199
      %p202 = scmp.ne.s32.totalorder %s187, %s201
      %p203 = scmp.eq.s32.totalorder %s30, 0
      %p204 = por %p202, %p203
      %s206 = sadd.s32 %s205, 1
      %p209 = scmp.eq.s32.totalorder %s24, 1
      %p210 = scmp.ne.s32.totalorder %s205, %s207
      %p211 = scmp.eq.s32.totalorder %s24, 0
      %p212 = por %p210, %p211
      %p213 = scmp.ne.s32.totalorder %s205, %s207
      %p214 = scmp.eq.s32.totalorder %s29, 1
      %p215 = por %p213, %p214
      %p216 = scmp.ne.s32.totalorder %s207, %s208
      %p217 = scmp.eq.s32.totalorder %s29, 0
      %p218 = por %p216, %p217
      %p219 = scmp.ne.s32.totalorder %s207, %s208
      %p220 = scmp.eq.s32.totalorder %s30, 1
      %p221 = por %p219, %p220
      %p223 = scmp.ne.s32.totalorder %s208, %s222
      %p224 = scmp.eq.s32.totalorder %s30, 0
      %p225 = por %p223, %p224
      %s227 = sadd.s32 %s226, 1
      %p230 = scmp.eq.s32.totalorder %s24, 1
      %p231 = scmp.ne.s32.totalorder %s226, %s228
      %p232 = scmp.eq.s32.totalorder %s24, 0
      %p233 = por %p231, %p232
      %p234 = scmp.ne.s32.totalorder %s226, %s228
      %p235 = scmp.eq.s32.totalorder %s29, 1
      %p236 = por %p234, %p235
      %p237 = scmp.ne.s32.totalorder %s228, %s229
      %p238 = scmp.eq.s32.totalorder %s29, 0
      %p239 = por %p237, %p238
      %p240 = scmp.ne.s32.totalorder %s228, %s229
      %p241 = scmp.eq.s32.totalorder %s30, 1
      %p242 = por %p240, %p241
      %p244 = scmp.ne.s32.totalorder %s229, %s243
      %p245 = scmp.eq.s32.totalorder %s30, 0
      %p246 = por %p244, %p245
      %s248 = sadd.s32 %s247, 1
      %p251 = scmp.eq.s32.totalorder %s24, 1
      %p252 = scmp.ne.s32.totalorder %s247, %s249
      %p253 = scmp.eq.s32.totalorder %s24, 0
      %p254 = por %p252, %p253
      %p255 = scmp.ne.s32.totalorder %s247, %s249
      %p256 = scmp.eq.s32.totalorder %s29, 1
      %p257 = por %p255, %p256
      %p258 = scmp.ne.s32.totalorder %s249, %s250
      %p259 = scmp.eq.s32.totalorder %s29, 0
      %p260 = por %p258, %p259
      %p261 = scmp.ne.s32.totalorder %s249, %s250
      %p262 = scmp.eq.s32.totalorder %s30, 1
      %p263 = por %p261, %p262
      %p265 = scmp.ne.s32.totalorder %s250, %s264
      %p266 = scmp.eq.s32.totalorder %s30, 0
      %p267 = por %p265, %p266
      %s269 = sadd.s32 %s268, 1
      %p272 = scmp.eq.s32.totalorder %s24, 1
      %p273 = scmp.ne.s32.totalorder %s268, %s270
      %p274 = scmp.eq.s32.totalorder %s24, 0
      %p275 = por %p273, %p274
      %p276 = scmp.ne.s32.totalorder %s268, %s270
      %p277 = scmp.eq.s32.totalorder %s29, 1
      %p278 = por %p276, %p277
      %p279 = scmp.ne.s32.totalorder %s270, %s271
      %p280 = scmp.eq.s32.totalorder %s29, 0
      %p281 = por %p279, %p280
      %p282 = scmp.ne.s32.totalorder %s270, %s271
      %p283 = scmp.eq.s32.totalorder %s30, 1
      %p284 = por %p282, %p283
      %p286 = scmp.ne.s32.totalorder %s271, %s285
      %p287 = scmp.eq.s32.totalorder %s30, 0
      %p288 = por %p286, %p287
      %s290 = sadd.s32 %s289, 1
      %p293 = scmp.eq.s32.totalorder %s24, 1
      %p294 = scmp.ne.s32.totalorder %s289, %s291
      %p295 = scmp.eq.s32.totalorder %s24, 0
      %p296 = por %p294, %p295
      %p297 = scmp.ne.s32.totalorder %s289, %s291
      %p298 = scmp.eq.s32.totalorder %s29, 1
      %p299 = por %p297, %p298
      %p300 = scmp.ne.s32.totalorder %s291, %s292
      %p301 = scmp.eq.s32.totalorder %s29, 0
      %p302 = por %p300, %p301
      %p303 = scmp.ne.s32.totalorder %s291, %s292
      %p304 = scmp.eq.s32.totalorder %s30, 1
      %p305 = por %p303, %p304
      %p307 = scmp.ne.s32.totalorder %s292, %s306
      %p308 = scmp.eq.s32.totalorder %s30, 0
      %p309 = por %p307, %p308
      %s311 = sadd.s32 %s310, 1
      %p314 = scmp.eq.s32.totalorder %s24, 1
      %p315 = scmp.ne.s32.totalorder %s310, %s312
      %p316 = scmp.eq.s32.totalorder %s24, 0
      %p317 = por %p315, %p316
      %p318 = scmp.ne.s32.totalorder %s310, %s312
      %p319 = scmp.eq.s32.totalorder %s29, 1
      %p320 = por %p318, %p319
      %p321 = scmp.ne.s32.totalorder %s312, %s313
      %p322 = scmp.eq.s32.totalorder %s29, 0
      %p323 = por %p321, %p322
      %p324 = scmp.ne.s32.totalorder %s312, %s313
      %p325 = scmp.eq.s32.totalorder %s30, 1
      %p326 = por %p324, %p325
      %p328 = scmp.ne.s32.totalorder %s313, %s327
      %p329 = scmp.eq.s32.totalorder %s30, 0
      %p330 = por %p328, %p329
      %s332 = sadd.s32 %s331, 1
      %p335 = scmp.eq.s32.totalorder %s24, 1
      %p336 = scmp.ne.s32.totalorder %s331, %s333
      %p337 = scmp.eq.s32.totalorder %s24, 0
      %p338 = por %p336, %p337
      %p339 = scmp.ne.s32.totalorder %s331, %s333
      %p340 = scmp.eq.s32.totalorder %s29, 1
      %p341 = por %p339, %p340
      %p342 = scmp.ne.s32.totalorder %s333, %s334
      %p343 = scmp.eq.s32.totalorder %s29, 0
      %p344 = por %p342, %p343
      %p345 = scmp.ne.s32.totalorder %s333, %s334
      %p346 = scmp.eq.s32.totalorder %s30, 1
      %p347 = por %p345, %p346
      %p349 = scmp.ne.s32.totalorder %s334, %s348
      %p350 = scmp.eq.s32.totalorder %s30, 0
      %p351 = por %p349, %p350
      %s352 = ssub.s32 %s24, %s31
      %p353 = scmp.eq.s32.totalorder %s352, 0
      %s355 = sadd.s32 %s354, 1
      %s356 = scalar_select %p353, %s354, %s355
      %p359 = pneg %p353
      %p360 = scmp.eq.s32.totalorder %s24, 1
      %p361 = por %p359, %p360
      %p362 = scmp.ne.s32.totalorder %s354, %s357
      %p363 = scmp.eq.s32.totalorder %s24, 0
      %p364 = por %p362, %p363
      %p365 = scmp.ne.s32.totalorder %s354, %s357
      %p366 = scmp.eq.s32.totalorder %s29, 1
      %p367 = por %p365, %p366
      %p368 = scmp.ne.s32.totalorder %s357, %s358
      %p369 = scmp.eq.s32.totalorder %s29, 0
      %p370 = por %p368, %p369
      %p371 = scmp.ne.s32.totalorder %s357, %s358
      %p372 = scmp.eq.s32.totalorder %s30, 1
      %p373 = por %p371, %p372
      %p375 = scmp.ne.s32.totalorder %s358, %s374
      %p376 = scmp.eq.s32.totalorder %s30, 0
      %p377 = por %p375, %p376
      %p378 = scmp.le.s32.totalorder 1, %s24
      %p379 = scmp.lt.s32.totalorder %s24, 3
      %p380 = pnand %p378, %p379
      %p381 = pneg %p380
      // Predicated region
      $region9: #{net_forward.1} parent=5 // pred_check
        _
      $region10: #{net_forward.1} parent=5 // pred_check_branch
        %383 = sbr.rel (%p380) target = $region12
      $region11: #{net_forward.1} parent=5 // pred_region
        %s384 = ssub.s32 %s24, 1
        // Predicated region
        $region13: #{net_forward.1} parent=11 // pred_check
          %p385 = pneg %p71
        $region14: #{net_forward.1} parent=11 // pred_check_branch
          %387 = sbr.rel (%p385) target = $region16
        $region15: #{net_forward.1} parent=11 // pred_region
          _
        $region16: #{net_forward.1} parent=11 // pred_fallthru
          _
        // Predicated region
        $region17: #{net_forward.1} parent=11 // pred_check
          %p388 = pneg %p92
        $region18: #{net_forward.1} parent=11 // pred_check_branch
          %390 = sbr.rel (%p388) target = $region20
        $region19: #{net_forward.1} parent=11 // pred_region
          _
        $region20: #{net_forward.1} parent=11 // pred_fallthru
          _
        // Predicated region
        $region21: #{net_forward.1} parent=11 // pred_check
          %p391 = pneg %p113
        $region22: #{net_forward.1} parent=11 // pred_check_branch
          %393 = sbr.rel (%p391) target = $region24
        $region23: #{net_forward.1} parent=11 // pred_region
          _
        $region24: #{net_forward.1} parent=11 // pred_fallthru
          _
        // Predicated region
        $region25: #{net_forward.1} parent=11 // pred_check
          %p394 = pneg %p134
        $region26: #{net_forward.1} parent=11 // pred_check_branch
          %396 = sbr.rel (%p394) target = $region28
        $region27: #{net_forward.1} parent=11 // pred_region
          _
        $region28: #{net_forward.1} parent=11 // pred_fallthru
          _
        // Predicated region
        $region29: #{net_forward.1} parent=11 // pred_check
          %p397 = pneg %p155
        $region30: #{net_forward.1} parent=11 // pred_check_branch
          %399 = sbr.rel (%p397) target = $region32
        $region31: #{net_forward.1} parent=11 // pred_region
          %401 = vsyncadd [#allocation5], 0
          %s402 = sshll.u32 %s5, 4
          %s403 = int_to_ptr.hbm [resolvable:$true] %s402
          %s404 = sshll.u32 [#allocation4], 4
          %s405 = int_to_ptr.vmem [resolvable:$true] %s404
          %410 = dma.hbm_to_vmem [thread:$0]  %s403, 20480, %s405, [#allocation5], 256, 256, 16
        $region32: #{net_forward.1} parent=11 // pred_fallthru
          _
        // Predicated region
        $region33: #{net_forward.1} parent=11 // pred_check
          %p411 = pneg %p176
        $region34: #{net_forward.1} parent=11 // pred_check_branch
          %413 = sbr.rel (%p411) target = $region36
        $region35: #{net_forward.1} parent=11 // pred_region
          _
        $region36: #{net_forward.1} parent=11 // pred_fallthru
          _
        // Predicated region
        $region37: #{net_forward.1} parent=11 // pred_check
          %p414 = pneg %p197
        $region38: #{net_forward.1} parent=11 // pred_check_branch
          %416 = sbr.rel (%p414) target = $region40
        $region39: #{net_forward.1} parent=11 // pred_region
          _
        $region40: #{net_forward.1} parent=11 // pred_fallthru
          _
        // Predicated region
        $region41: #{net_forward.1} parent=11 // pred_check
          %p417 = pneg %p218
        $region42: #{net_forward.1} parent=11 // pred_check_branch
          %419 = sbr.rel (%p417) target = $region44
        $region43: #{net_forward.1} parent=11 // pred_region
          _
        $region44: #{net_forward.1} parent=11 // pred_fallthru
          _
        // Predicated region
        $region45: #{net_forward.1} parent=11 // pred_check
          %p420 = pneg %p239
        $region46: #{net_forward.1} parent=11 // pred_check_branch
          %422 = sbr.rel (%p420) target = $region48
        $region47: #{net_forward.1} parent=11 // pred_region
          %424 = vsyncadd [#allocation7], 0
          %s425 = sshll.u32 %s9, 4
          %s426 = int_to_ptr.hbm [resolvable:$true] %s425
          %s427 = sshll.u32 [#allocation6], 4
          %s428 = int_to_ptr.vmem [resolvable:$true] %s427
          %433 = dma.hbm_to_vmem [thread:$0]  %s426, 10240, %s428, [#allocation7], 128, 128, 8
        $region48: #{net_forward.1} parent=11 // pred_fallthru
          _
        // Predicated region
        $region49: #{net_forward.1} parent=11 // pred_check
          %p434 = pneg %p260
        $region50: #{net_forward.1} parent=11 // pred_check_branch
          %436 = sbr.rel (%p434) target = $region52
        $region51: #{net_forward.1} parent=11 // pred_region
          _
        $region52: #{net_forward.1} parent=11 // pred_fallthru
          _
        // Predicated region
        $region53: #{net_forward.1} parent=11 // pred_check
          %p437 = pneg %p281
        $region54: #{net_forward.1} parent=11 // pred_check_branch
          %439 = sbr.rel (%p437) target = $region56
        $region55: #{net_forward.1} parent=11 // pred_region
          %441 = vsyncadd [#allocation7], 0
          %s442 = sshll.u32 %s11, 4
          %s443 = int_to_ptr.hbm [resolvable:$true] %s442
          %s444 = sshll.u32 [#allocation8], 4
          %s445 = int_to_ptr.vmem [resolvable:$true] %s444
          %450 = dma.hbm_to_vmem [thread:$0]  %s443, 2048, %s445, [#allocation7], 128, 128, 8
        $region56: #{net_forward.1} parent=11 // pred_fallthru
          _
        // Predicated region
        $region57: #{net_forward.1} parent=11 // pred_check
          %p451 = pneg %p302
        $region58: #{net_forward.1} parent=11 // pred_check_branch
          %453 = sbr.rel (%p451) target = $region60
        $region59: #{net_forward.1} parent=11 // pred_region
          _
        $region60: #{net_forward.1} parent=11 // pred_fallthru
          _
        // Predicated region
        $region61: #{net_forward.1} parent=11 // pred_check
          %p454 = pneg %p323
        $region62: #{net_forward.1} parent=11 // pred_check_branch
          %456 = sbr.rel (%p454) target = $region64
        $region63: #{net_forward.1} parent=11 // pred_region
          %458 = vsyncadd [#allocation10], 0
          %s459 = sshll.u32 %s13, 4
          %s460 = int_to_ptr.hbm [resolvable:$true] %s459
          %s461 = sshll.u32 [#allocation9], 4
          %s462 = int_to_ptr.vmem [resolvable:$true] %s461
          %467 = dma.hbm_to_vmem [thread:$0]  %s460, 2048, %s462, [#allocation10], 128, 128, 8
        $region64: #{net_forward.1} parent=11 // pred_fallthru
          _
        // Predicated region
        $region65: #{net_forward.1} parent=11 // pred_check
          %p468 = pneg %p344
        $region66: #{net_forward.1} parent=11 // pred_check_branch
          %470 = sbr.rel (%p468) target = $region68
        $region67: #{net_forward.1} parent=11 // pred_region
          _
        $region68: #{net_forward.1} parent=11 // pred_fallthru
          _
      $region12: #{net_forward.1} parent=5 // pred_fallthru
        _
      %p471 = scmp.lt.s32.totalorder %s24, 2
      // Predicated region
      $region69: #{net_forward.1} parent=5 // pred_check
        %p472 = pneg %p471
      $region70: #{net_forward.1} parent=5 // pred_check_branch
        %474 = sbr.rel (%p472) target = $region72
      $region71: #{net_forward.1} parent=5 // pred_region
        // Predicated region
        $region73: #{net_forward.1} parent=71 // pred_check
          %p475 = pneg %p44
        $region74: #{net_forward.1} parent=71 // pred_check_branch
          %477 = sbr.rel (%p475) target = $region76
        $region75: #{net_forward.1} parent=71 // pred_region
          %p478 = scmp.lt.s32.totalorder %s24, 1
          %s479 = scalar_select %p478, %s24, 1
          %s480 = smul.addr %s479, 10
          %s481 = smul.addr %s480, 8
          %s482 = scalar_lea.vmem %s0, %s481
        $region76: #{net_forward.1} parent=71 // pred_fallthru
          _
      $region72: #{net_forward.1} parent=5 // pred_fallthru
        _
      %p483 = scmp.le.s32.totalorder 1, %s24
      %p484 = scmp.lt.s32.totalorder %s24, 3
      %p485 = pnand %p483, %p484
      %p486 = pneg %p485
      // Predicated region
      $region77: #{net_forward.1} parent=5 // pred_check
        _
      $region78: #{net_forward.1} parent=5 // pred_check_branch
        %488 = sbr.rel (%p485) target = $region80
      $region79: #{net_forward.1} parent=5 // pred_region
        %s489 = ssub.s32 %s24, 1
        // Predicated region
        $region81: #{net_forward.1} parent=79 // pred_check
          %p490 = pneg %p155
        $region82: #{net_forward.1} parent=79 // pred_check_branch
          %492 = sbr.rel (%p490) target = $region84
        $region83: #{net_forward.1} parent=79 // pred_region
          %494 = dma.done [#allocation5], 20480
        $region84: #{net_forward.1} parent=79 // pred_fallthru
          _
        // Predicated region
        $region85: #{net_forward.1} parent=79 // pred_check
          %p495 = pneg %p239
        $region86: #{net_forward.1} parent=79 // pred_check_branch
          %497 = sbr.rel (%p495) target = $region88
        $region87: #{net_forward.1} parent=79 // pred_region
          %499 = dma.done [#allocation7], 10240
        $region88: #{net_forward.1} parent=79 // pred_fallthru
          _
        // Predicated region
        $region89: #{net_forward.1} parent=79 // pred_check
          %p500 = pneg %p281
        $region90: #{net_forward.1} parent=79 // pred_check_branch
          %502 = sbr.rel (%p500) target = $region92
        $region91: #{net_forward.1} parent=79 // pred_region
          %504 = dma.done [#allocation7], 2048
        $region92: #{net_forward.1} parent=79 // pred_fallthru
          _
        // Predicated region
        $region93: #{net_forward.1} parent=79 // pred_check
          %p505 = pneg %p323
        $region94: #{net_forward.1} parent=79 // pred_check_branch
          %507 = sbr.rel (%p505) target = $region96
        $region95: #{net_forward.1} parent=79 // pred_region
          %509 = dma.done [#allocation10], 2048
        $region96: #{net_forward.1} parent=79 // pred_fallthru
          _
        %p510 = scmp.lt.s32.totalorder %s29, 1
        %s511 = scalar_select %p510, %s29, 1
        %s512 = smul.addr %s511, 10
        %s513 = smul.addr %s512, 8
        %s514 = scalar_lea.vmem %s0, %s513
        %p515 = pneg %p50
        %p516 = pneg %p47
        %p517 = pneg %p71
        %p518 = pneg %p68
        %p519 = pneg %p92
        %p520 = pneg %p89
        %p521 = pneg %p113
        %p522 = pneg %p110
        %p523 = pneg %p134
        %p524 = pneg %p131
        %p525 = pneg %p155
        %p526 = pneg %p152
        %p527 = pneg %p176
        %p528 = pneg %p173
        %p529 = pneg %p197
        %p530 = pneg %p194
        %p531 = pneg %p218
        %p532 = pneg %p215
        %p533 = pneg %p239
        %p534 = pneg %p236
        %p535 = pneg %p260
        %p536 = pneg %p257
        %p537 = pneg %p281
        %p538 = pneg %p278
        %p539 = pneg %p302
        %p540 = pneg %p299
        %p541 = pneg %p323
        %p542 = pneg %p320
        %p543 = pneg %p344
        %p544 = pneg %p341
        %p545 = pneg %p370
        %p546 = pneg %p367
        %p547 = scmp.lt.s32.totalorder %s29, 1
        %s548 = scalar_select %p547, %s29, 1
        %s549 = smul.addr %s548, 8
        %s550 = scalar_lea.vmem %s15, %s549
        %p551 = scmp.lt.s32.totalorder %s29, 1
        %s552 = scalar_select %p551, %s29, 1
        %s553 = smul.addr %s552, 10
        %s554 = smul.addr %s553, 8
        %s555 = scalar_lea.vmem %s0, %s554
        %p556 = scmp.lt.s32.totalorder %s29, 1
        %s557 = scalar_select %p556, %s29, 1
        %s558 = smul.addr %s557, 8
        %s559 = scalar_lea.vmem %s15, %s558
        %v560 = vld [vmem:[%s555] sm:$0xff]
        %v561 = vld [vmem:[%s555 + $0x8] sm:$0xff]
        %v562 = vld [vmem:[%s555 + $0x10] sm:$0xff]
        %v563 = vld [vmem:[%s555 + $0x18] sm:$0xff]
        %v564 = vld [vmem:[%s555 + $0x20] sm:$0xff]
        %v565 = vld [vmem:[%s555 + $0x28] sm:$0xff]
        %v566 = vld [vmem:[%s555 + $0x30] sm:$0xff]
        %v567 = vld [vmem:[%s555 + $0x38] sm:$0xff]
        %v568 = vld [vmem:[%s1] sm:$0xff]
        %v569 = vld [vmem:[%s1 + $0x8] sm:$0xff]
        %v570 = vld [vmem:[%s1 + $0x10] sm:$0xff]
        %v571 = vld [vmem:[%s1 + $0x18] sm:$0xff]
        %v572 = vld [vmem:[%s1 + $0x20] sm:$0xff]
        %v573 = vld [vmem:[%s1 + $0x28] sm:$0xff]
        %v574 = vld [vmem:[%s1 + $0x30] sm:$0xff]
        %v575 = vld [vmem:[%s1 + $0x38] sm:$0xff]
        %v576 = vld [vmem:[%s1 + $0x40] sm:$0xff]
        %v577 = vld [vmem:[%s1 + $0x48] sm:$0xff]
        %v578 = vld [vmem:[%s1 + $0x50] sm:$0xff]
        %v579 = vld [vmem:[%s1 + $0x58] sm:$0xff]
        %v580 = vld [vmem:[%s1 + $0x60] sm:$0xff]
        %v581 = vld [vmem:[%s1 + $0x68] sm:$0xff]
        %v582 = vld [vmem:[%s1 + $0x70] sm:$0xff]
        %v583 = vld [vmem:[%s1 + $0x78] sm:$0xff]
        %v584 = vld [vmem:[%s1 + $0x80] sm:$0xff]
        %v585 = vld [vmem:[%s1 + $0x88] sm:$0xff]
        %v586 = vld [vmem:[%s1 + $0x90] sm:$0xff]
        %v587 = vld [vmem:[%s1 + $0x98] sm:$0xff]
        %v588 = vld [vmem:[%s1 + $0xa0] sm:$0xff]
        %v589 = vld [vmem:[%s1 + $0xa8] sm:$0xff]
        %v590 = vld [vmem:[%s1 + $0xb0] sm:$0xff]
        %v591 = vld [vmem:[%s1 + $0xb8] sm:$0xff]
        %v592 = vld [vmem:[%s1 + $0xc0] sm:$0xff]
        %v593 = vld [vmem:[%s1 + $0xc8] sm:$0xff]
        %v594 = vld [vmem:[%s1 + $0xd0] sm:$0xff]
        %v595 = vld [vmem:[%s1 + $0xd8] sm:$0xff]
        %v596 = vld [vmem:[%s1 + $0xe0] sm:$0xff]
        %v597 = vld [vmem:[%s1 + $0xe8] sm:$0xff]
        %v598 = vld [vmem:[%s1 + $0xf0] sm:$0xff]
        %v599 = vld [vmem:[%s1 + $0xf8] sm:$0xff]
        %v600 = vld [vmem:[%s1 + $0x100] sm:$0xff]
        %v601 = vld [vmem:[%s1 + $0x108] sm:$0xff]
        %v602 = vld [vmem:[%s1 + $0x110] sm:$0xff]
        %v603 = vld [vmem:[%s1 + $0x118] sm:$0xff]
        %v604 = vld [vmem:[%s1 + $0x120] sm:$0xff]
        %v605 = vld [vmem:[%s1 + $0x128] sm:$0xff]
        %v606 = vld [vmem:[%s1 + $0x130] sm:$0xff]
        %v607 = vld [vmem:[%s1 + $0x138] sm:$0xff]
        %v608 = vld [vmem:[%s1 + $0x140] sm:$0xff]
        %v609 = vld [vmem:[%s1 + $0x148] sm:$0xff]
        %v610 = vld [vmem:[%s1 + $0x150] sm:$0xff]
        %v611 = vld [vmem:[%s1 + $0x158] sm:$0xff]
        %v612 = vld [vmem:[%s1 + $0x160] sm:$0xff]
        %v613 = vld [vmem:[%s1 + $0x168] sm:$0xff]
        %v614 = vld [vmem:[%s1 + $0x170] sm:$0xff]
        %v615 = vld [vmem:[%s1 + $0x178] sm:$0xff]
        %v616 = vld [vmem:[%s1 + $0x180] sm:$0xff]
        %v617 = vld [vmem:[%s1 + $0x188] sm:$0xff]
        %v618 = vld [vmem:[%s1 + $0x190] sm:$0xff]
        %v619 = vld [vmem:[%s1 + $0x198] sm:$0xff]
        %v620 = vld [vmem:[%s1 + $0x1a0] sm:$0xff]
        %v621 = vld [vmem:[%s1 + $0x1a8] sm:$0xff]
        %v622 = vld [vmem:[%s1 + $0x1b0] sm:$0xff]
        %v623 = vld [vmem:[%s1 + $0x1b8] sm:$0xff]
        %v624 = vld [vmem:[%s1 + $0x1c0] sm:$0xff]
        %v625 = vld [vmem:[%s1 + $0x1c8] sm:$0xff]
        %v626 = vld [vmem:[%s1 + $0x1d0] sm:$0xff]
        %v627 = vld [vmem:[%s1 + $0x1d8] sm:$0xff]
        %v628 = vld [vmem:[%s1 + $0x1e0] sm:$0xff]
        %v629 = vld [vmem:[%s1 + $0x1e8] sm:$0xff]
        %v630 = vld [vmem:[%s1 + $0x1f0] sm:$0xff]
        %v631 = vld [vmem:[%s1 + $0x1f8] sm:$0xff]
        %v632 = vld [vmem:[%s555] sm:$0xfe]
        %v633 = vld [vmem:[%s555 + $0x8] sm:$0xfe]
        %v634 = vld [vmem:[%s555 + $0x10] sm:$0xff]
        %v635 = vld [vmem:[%s555 + $0x18] sm:$0xff]
        %v636 = vld [vmem:[%s555 + $0x20] sm:$0xff]
        %v637 = vld [vmem:[%s555 + $0x28] sm:$0xff]
        %v638 = vld [vmem:[%s555 + $0x30] sm:$0xff]
        %v639 = vld [vmem:[%s555 + $0x38] sm:$0xff]
        %v640 = vld [vmem:[%s555 + $0x40] sm:$0x1]
        %v641 = vld [vmem:[%s555 + $0x48] sm:$0x1]
        %s642 = scalar_lea.vmem %s1, 512
        %v643 = vld [vmem:[%s642] sm:$0xff]
        %v644 = vld [vmem:[%s642 + $0x8] sm:$0xff]
        %v645 = vld [vmem:[%s642 + $0x10] sm:$0xff]
        %v646 = vld [vmem:[%s642 + $0x18] sm:$0xff]
        %v647 = vld [vmem:[%s642 + $0x20] sm:$0xff]
        %v648 = vld [vmem:[%s642 + $0x28] sm:$0xff]
        %v649 = vld [vmem:[%s642 + $0x30] sm:$0xff]
        %v650 = vld [vmem:[%s642 + $0x38] sm:$0xff]
        %v651 = vld [vmem:[%s642 + $0x40] sm:$0xff]
        %v652 = vld [vmem:[%s642 + $0x48] sm:$0xff]
        %v653 = vld [vmem:[%s642 + $0x50] sm:$0xff]
        %v654 = vld [vmem:[%s642 + $0x58] sm:$0xff]
        %v655 = vld [vmem:[%s642 + $0x60] sm:$0xff]
        %v656 = vld [vmem:[%s642 + $0x68] sm:$0xff]
        %v657 = vld [vmem:[%s642 + $0x70] sm:$0xff]
        %v658 = vld [vmem:[%s642 + $0x78] sm:$0xff]
        %v659 = vld [vmem:[%s642 + $0x80] sm:$0xff]
        %v660 = vld [vmem:[%s642 + $0x88] sm:$0xff]
        %v661 = vld [vmem:[%s642 + $0x90] sm:$0xff]
        %v662 = vld [vmem:[%s642 + $0x98] sm:$0xff]
        %v663 = vld [vmem:[%s642 + $0xa0] sm:$0xff]
        %v664 = vld [vmem:[%s642 + $0xa8] sm:$0xff]
        %v665 = vld [vmem:[%s642 + $0xb0] sm:$0xff]
        %v666 = vld [vmem:[%s642 + $0xb8] sm:$0xff]
        %v667 = vld [vmem:[%s642 + $0xc0] sm:$0xff]
        %v668 = vld [vmem:[%s642 + $0xc8] sm:$0xff]
        %v669 = vld [vmem:[%s642 + $0xd0] sm:$0xff]
        %v670 = vld [vmem:[%s642 + $0xd8] sm:$0xff]
        %v671 = vld [vmem:[%s642 + $0xe0] sm:$0xff]
        %v672 = vld [vmem:[%s642 + $0xe8] sm:$0xff]
        %v673 = vld [vmem:[%s642 + $0xf0] sm:$0xff]
        %v674 = vld [vmem:[%s642 + $0xf8] sm:$0xff]
        %v675 = vld [vmem:[%s642 + $0x100] sm:$0xff]
        %v676 = vld [vmem:[%s642 + $0x108] sm:$0xff]
        %v677 = vld [vmem:[%s642 + $0x110] sm:$0xff]
        %v678 = vld [vmem:[%s642 + $0x118] sm:$0xff]
        %v679 = vld [vmem:[%s642 + $0x120] sm:$0xff]
        %v680 = vld [vmem:[%s642 + $0x128] sm:$0xff]
        %v681 = vld [vmem:[%s642 + $0x130] sm:$0xff]
        %v682 = vld [vmem:[%s642 + $0x138] sm:$0xff]
        %v683 = vld [vmem:[%s642 + $0x140] sm:$0xff]
        %v684 = vld [vmem:[%s642 + $0x148] sm:$0xff]
        %v685 = vld [vmem:[%s642 + $0x150] sm:$0xff]
        %v686 = vld [vmem:[%s642 + $0x158] sm:$0xff]
        %v687 = vld [vmem:[%s642 + $0x160] sm:$0xff]
        %v688 = vld [vmem:[%s642 + $0x168] sm:$0xff]
        %v689 = vld [vmem:[%s642 + $0x170] sm:$0xff]
        %v690 = vld [vmem:[%s642 + $0x178] sm:$0xff]
        %v691 = vld [vmem:[%s642 + $0x180] sm:$0xff]
        %v692 = vld [vmem:[%s642 + $0x188] sm:$0xff]
        %v693 = vld [vmem:[%s642 + $0x190] sm:$0xff]
        %v694 = vld [vmem:[%s642 + $0x198] sm:$0xff]
        %v695 = vld [vmem:[%s642 + $0x1a0] sm:$0xff]
        %v696 = vld [vmem:[%s642 + $0x1a8] sm:$0xff]
        %v697 = vld [vmem:[%s642 + $0x1b0] sm:$0xff]
        %v698 = vld [vmem:[%s642 + $0x1b8] sm:$0xff]
        %v699 = vld [vmem:[%s642 + $0x1c0] sm:$0xff]
        %v700 = vld [vmem:[%s642 + $0x1c8] sm:$0xff]
        %v701 = vld [vmem:[%s642 + $0x1d0] sm:$0xff]
        %v702 = vld [vmem:[%s642 + $0x1d8] sm:$0xff]
        %v703 = vld [vmem:[%s642 + $0x1e0] sm:$0xff]
        %v704 = vld [vmem:[%s642 + $0x1e8] sm:$0xff]
        %v705 = vld [vmem:[%s642 + $0x1f0] sm:$0xff]
        %v706 = vld [vmem:[%s642 + $0x1f8] sm:$0xff]
        %vm717 = vcmask 1046528
        %v718 = vrot.slane %v632, 1
        %v719 = vrot.slane %v634, 1
        %v720 = vsel %vm717, %v718, %v719
        %v721 = vrot.slane %v633, 1
        %v722 = vrot.slane %v635, 1
        %v723 = vsel %vm717, %v721, %v722
        %v724 = vrot.slane %v636, 1
        %v725 = vsel %vm717, %v719, %v724
        %v726 = vrot.slane %v637, 1
        %v727 = vsel %vm717, %v722, %v726
        %v728 = vrot.slane %v638, 1
        %v729 = vsel %vm717, %v724, %v728
        %v730 = vrot.slane %v639, 1
        %v731 = vsel %vm717, %v726, %v730
        %v732 = vrot.slane %v640, 1
        %v733 = vsel %vm717, %v728, %v732
        %v734 = vrot.slane %v641, 1
        %v735 = vsel %vm717, %v730, %v734
        %744 = vmatpush.msra.mxu0 %v673
        %745 = vmatpush.msra.mxu0 %v671
        %746 = vmatpush.msra.mxu0 %v669
        %747 = vmatpush.msra.mxu0 %v667
        %748 = vmatpush.msra.mxu0 %v665
        %749 = vmatpush.msra.mxu0 %v663
        %750 = vmatpush.msra.mxu0 %v661
        %751 = vmatpush.msra.mxu0 %v659
        %752 = vmatpush.msra.mxu0 %v657
        %753 = vmatpush.msra.mxu0 %v655
        %754 = vmatpush.msra.mxu0 %v653
        %755 = vmatpush.msra.mxu0 %v651
        %756 = vmatpush.msra.mxu0 %v649
        %757 = vmatpush.msra.mxu0 %v647
        %758 = vmatpush.msra.mxu0 %v645
        %759 = vmatpush.msra.mxu0 %v643
        %760 = vmatmul.f32.gmra.mxu0 %v720
        %v761 = vpop.f32.mrf.mxu0
        %v762 = vadd.f32 0.0, %v761
        %763 = vmatmul.f32.gmra.mxu0 %v725
        %v764 = vpop.f32.mrf.mxu0
        %v765 = vadd.f32 0.0, %v764
        %766 = vmatmul.f32.gmra.mxu0 %v729
        %v767 = vpop.f32.mrf.mxu0
        %v768 = vadd.f32 0.0, %v767
        %769 = vmatmul.f32.gmra.mxu0 %v733
        %v770 = vpop.f32.mrf.mxu0
        %v771 = vadd.f32 0.0, %v770
        %772 = vdwg.mxu0
        %773 = vmatpush.msra.mxu0 %v705
        %774 = vmatpush.msra.mxu0 %v703
        %775 = vmatpush.msra.mxu0 %v701
        %776 = vmatpush.msra.mxu0 %v699
        %777 = vmatpush.msra.mxu0 %v697
        %778 = vmatpush.msra.mxu0 %v695
        %779 = vmatpush.msra.mxu0 %v693
        %780 = vmatpush.msra.mxu0 %v691
        %781 = vmatpush.msra.mxu0 %v689
        %782 = vmatpush.msra.mxu0 %v687
        %783 = vmatpush.msra.mxu0 %v685
        %784 = vmatpush.msra.mxu0 %v683
        %785 = vmatpush.msra.mxu0 %v681
        %786 = vmatpush.msra.mxu0 %v679
        %787 = vmatpush.msra.mxu0 %v677
        %788 = vmatpush.msra.mxu0 %v675
        %789 = vmatmul.f32.gmra.mxu0 %v723
        %v790 = vpop.f32.mrf.mxu0
        %v791 = vadd.f32 %v762, %v790
        %792 = vmatmul.f32.gmra.mxu0 %v727
        %v793 = vpop.f32.mrf.mxu0
        %v794 = vadd.f32 %v765, %v793
        %795 = vmatmul.f32.gmra.mxu0 %v731
        %v796 = vpop.f32.mrf.mxu0
        %v797 = vadd.f32 %v768, %v796
        %798 = vmatmul.f32.gmra.mxu0 %v735
        %v799 = vpop.f32.mrf.mxu0
        %v800 = vadd.f32 %v771, %v799
        %801 = vdwg.mxu0
        %802 = vmatpush.msra.mxu0 %v674
        %803 = vmatpush.msra.mxu0 %v672
        %804 = vmatpush.msra.mxu0 %v670
        %805 = vmatpush.msra.mxu0 %v668
        %806 = vmatpush.msra.mxu0 %v666
        %807 = vmatpush.msra.mxu0 %v664
        %808 = vmatpush.msra.mxu0 %v662
        %809 = vmatpush.msra.mxu0 %v660
        %810 = vmatpush.msra.mxu0 %v658
        %811 = vmatpush.msra.mxu0 %v656
        %812 = vmatpush.msra.mxu0 %v654
        %813 = vmatpush.msra.mxu0 %v652
        %814 = vmatpush.msra.mxu0 %v650
        %815 = vmatpush.msra.mxu0 %v648
        %816 = vmatpush.msra.mxu0 %v646
        %817 = vmatpush.msra.mxu0 %v644
        %818 = vmatmul.f32.gmra.mxu0 %v720
        %v819 = vpop.f32.mrf.mxu0
        %v820 = vadd.f32 0.0, %v819
        %821 = vmatmul.f32.gmra.mxu0 %v725
        %v822 = vpop.f32.mrf.mxu0
        %v823 = vadd.f32 0.0, %v822
        %824 = vmatmul.f32.gmra.mxu0 %v729
        %v825 = vpop.f32.mrf.mxu0
        %v826 = vadd.f32 0.0, %v825
        %827 = vmatmul.f32.gmra.mxu0 %v733
        %v828 = vpop.f32.mrf.mxu0
        %v829 = vadd.f32 0.0, %v828
        %830 = vdwg.mxu0
        %831 = vmatpush.msra.mxu0 %v706
        %832 = vmatpush.msra.mxu0 %v704
        %833 = vmatpush.msra.mxu0 %v702
        %834 = vmatpush.msra.mxu0 %v700
        %835 = vmatpush.msra.mxu0 %v698
        %836 = vmatpush.msra.mxu0 %v696
        %837 = vmatpush.msra.mxu0 %v694
        %838 = vmatpush.msra.mxu0 %v692
        %839 = vmatpush.msra.mxu0 %v690
        %840 = vmatpush.msra.mxu0 %v688
        %841 = vmatpush.msra.mxu0 %v686
        %842 = vmatpush.msra.mxu0 %v684
        %843 = vmatpush.msra.mxu0 %v682
        %844 = vmatpush.msra.mxu0 %v680
        %845 = vmatpush.msra.mxu0 %v678
        %846 = vmatpush.msra.mxu0 %v676
        %847 = vmatmul.f32.gmra.mxu0 %v723
        %v848 = vpop.f32.mrf.mxu0
        %v849 = vadd.f32 %v820, %v848
        %850 = vmatmul.f32.gmra.mxu0 %v727
        %v851 = vpop.f32.mrf.mxu0
        %v852 = vadd.f32 %v823, %v851
        %853 = vmatmul.f32.gmra.mxu0 %v731
        %v854 = vpop.f32.mrf.mxu0
        %v855 = vadd.f32 %v826, %v854
        %856 = vmatmul.f32.gmra.mxu0 %v735
        %v857 = vpop.f32.mrf.mxu0
        %v858 = vadd.f32 %v829, %v857
        %859 = vdwg.mxu0
        %860 = vmatpush.msra.mxu0 %v598
        %861 = vmatpush.msra.mxu0 %v596
        %862 = vmatpush.msra.mxu0 %v594
        %863 = vmatpush.msra.mxu0 %v592
        %864 = vmatpush.msra.mxu0 %v590
        %865 = vmatpush.msra.mxu0 %v588
        %866 = vmatpush.msra.mxu0 %v586
        %867 = vmatpush.msra.mxu0 %v584
        %868 = vmatpush.msra.mxu0 %v582
        %869 = vmatpush.msra.mxu0 %v580
        %870 = vmatpush.msra.mxu0 %v578
        %871 = vmatpush.msra.mxu0 %v576
        %872 = vmatpush.msra.mxu0 %v574
        %873 = vmatpush.msra.mxu0 %v572
        %874 = vmatpush.msra.mxu0 %v570
        %875 = vmatpush.msra.mxu0 %v568
        %876 = vmatmul.f32.gmra.mxu0 %v560
        %v877 = vpop.f32.mrf.mxu0
        %v878 = vadd.f32 %v791, %v877
        %879 = vmatmul.f32.gmra.mxu0 %v562
        %v880 = vpop.f32.mrf.mxu0
        %v881 = vadd.f32 %v794, %v880
        %882 = vmatmul.f32.gmra.mxu0 %v564
        %v883 = vpop.f32.mrf.mxu0
        %v884 = vadd.f32 %v797, %v883
        %885 = vmatmul.f32.gmra.mxu0 %v566
        %v886 = vpop.f32.mrf.mxu0
        %v887 = vadd.f32 %v800, %v886
        %888 = vdwg.mxu0
        %889 = vmatpush.msra.mxu0 %v630
        %890 = vmatpush.msra.mxu0 %v628
        %891 = vmatpush.msra.mxu0 %v626
        %892 = vmatpush.msra.mxu0 %v624
        %893 = vmatpush.msra.mxu0 %v622
        %894 = vmatpush.msra.mxu0 %v620
        %895 = vmatpush.msra.mxu0 %v618
        %896 = vmatpush.msra.mxu0 %v616
        %897 = vmatpush.msra.mxu0 %v614
        %898 = vmatpush.msra.mxu0 %v612
        %899 = vmatpush.msra.mxu0 %v610
        %900 = vmatpush.msra.mxu0 %v608
        %901 = vmatpush.msra.mxu0 %v606
        %902 = vmatpush.msra.mxu0 %v604
        %903 = vmatpush.msra.mxu0 %v602
        %904 = vmatpush.msra.mxu0 %v600
        %905 = vmatmul.f32.gmra.mxu0 %v561
        %v906 = vpop.f32.mrf.mxu0
        %v907 = vadd.f32 %v878, %v906
        %908 = vmatmul.f32.gmra.mxu0 %v563
        %v909 = vpop.f32.mrf.mxu0
        %v910 = vadd.f32 %v881, %v909
        %911 = vmatmul.f32.gmra.mxu0 %v565
        %v912 = vpop.f32.mrf.mxu0
        %v913 = vadd.f32 %v884, %v912
        %914 = vmatmul.f32.gmra.mxu0 %v567
        %v915 = vpop.f32.mrf.mxu0
        %v916 = vadd.f32 %v887, %v915
        %917 = vdwg.mxu0
        %918 = vmatpush.msra.mxu0 %v599
        %919 = vmatpush.msra.mxu0 %v597
        %920 = vmatpush.msra.mxu0 %v595
        %921 = vmatpush.msra.mxu0 %v593
        %922 = vmatpush.msra.mxu0 %v591
        %923 = vmatpush.msra.mxu0 %v589
        %924 = vmatpush.msra.mxu0 %v587
        %925 = vmatpush.msra.mxu0 %v585
        %926 = vmatpush.msra.mxu0 %v583
        %927 = vmatpush.msra.mxu0 %v581
        %928 = vmatpush.msra.mxu0 %v579
        %929 = vmatpush.msra.mxu0 %v577
        %930 = vmatpush.msra.mxu0 %v575
        %931 = vmatpush.msra.mxu0 %v573
        %932 = vmatpush.msra.mxu0 %v571
        %933 = vmatpush.msra.mxu0 %v569
        %934 = vmatmul.f32.gmra.mxu0 %v560
        %v935 = vpop.f32.mrf.mxu0
        %v936 = vadd.f32 %v849, %v935
        %937 = vmatmul.f32.gmra.mxu0 %v562
        %v938 = vpop.f32.mrf.mxu0
        %v939 = vadd.f32 %v852, %v938
        %940 = vmatmul.f32.gmra.mxu0 %v564
        %v941 = vpop.f32.mrf.mxu0
        %v942 = vadd.f32 %v855, %v941
        %943 = vmatmul.f32.gmra.mxu0 %v566
        %v944 = vpop.f32.mrf.mxu0
        %v945 = vadd.f32 %v858, %v944
        %946 = vdwg.mxu0
        %947 = vmatpush.msra.mxu0 %v631
        %948 = vmatpush.msra.mxu0 %v629
        %949 = vmatpush.msra.mxu0 %v627
        %950 = vmatpush.msra.mxu0 %v625
        %951 = vmatpush.msra.mxu0 %v623
        %952 = vmatpush.msra.mxu0 %v621
        %953 = vmatpush.msra.mxu0 %v619
        %954 = vmatpush.msra.mxu0 %v617
        %955 = vmatpush.msra.mxu0 %v615
        %956 = vmatpush.msra.mxu0 %v613
        %957 = vmatpush.msra.mxu0 %v611
        %958 = vmatpush.msra.mxu0 %v609
        %959 = vmatpush.msra.mxu0 %v607
        %960 = vmatpush.msra.mxu0 %v605
        %961 = vmatpush.msra.mxu0 %v603
        %962 = vmatpush.msra.mxu0 %v601
        %963 = vmatmul.f32.gmra.mxu0 %v561
        %v964 = vpop.f32.mrf.mxu0
        %v965 = vadd.f32 %v936, %v964
        %966 = vmatmul.f32.gmra.mxu0 %v563
        %v967 = vpop.f32.mrf.mxu0
        %v968 = vadd.f32 %v939, %v967
        %969 = vmatmul.f32.gmra.mxu0 %v565
        %v970 = vpop.f32.mrf.mxu0
        %v971 = vadd.f32 %v942, %v970
        %972 = vmatmul.f32.gmra.mxu0 %v567
        %v973 = vpop.f32.mrf.mxu0
        %v974 = vadd.f32 %v945, %v973
        %975 = vdwg.mxu0
        %v976 = vld [vmem:[%s555] sm:$0xfc]
        %v977 = vld [vmem:[%s555 + $0x8] sm:$0xfc]
        %v978 = vld [vmem:[%s555 + $0x40] sm:$0x3]
        %v979 = vld [vmem:[%s555 + $0x48] sm:$0x3]
        %s980 = scalar_lea.vmem %s1, 1024
        %v981 = vld [vmem:[%s980] sm:$0xff]
        %v982 = vld [vmem:[%s980 + $0x8] sm:$0xff]
        %v983 = vld [vmem:[%s980 + $0x10] sm:$0xff]
        %v984 = vld [vmem:[%s980 + $0x18] sm:$0xff]
        %v985 = vld [vmem:[%s980 + $0x20] sm:$0xff]
        %v986 = vld [vmem:[%s980 + $0x28] sm:$0xff]
        %v987 = vld [vmem:[%s980 + $0x30] sm:$0xff]
        %v988 = vld [vmem:[%s980 + $0x38] sm:$0xff]
        %v989 = vld [vmem:[%s980 + $0x40] sm:$0xff]
        %v990 = vld [vmem:[%s980 + $0x48] sm:$0xff]
        %v991 = vld [vmem:[%s980 + $0x50] sm:$0xff]
        %v992 = vld [vmem:[%s980 + $0x58] sm:$0xff]
        %v993 = vld [vmem:[%s980 + $0x60] sm:$0xff]
        %v994 = vld [vmem:[%s980 + $0x68] sm:$0xff]
        %v995 = vld [vmem:[%s980 + $0x70] sm:$0xff]
        %v996 = vld [vmem:[%s980 + $0x78] sm:$0xff]
        %v997 = vld [vmem:[%s980 + $0x80] sm:$0xff]
        %v998 = vld [vmem:[%s980 + $0x88] sm:$0xff]
        %v999 = vld [vmem:[%s980 + $0x90] sm:$0xff]
        %v1000 = vld [vmem:[%s980 + $0x98] sm:$0xff]
        %v1001 = vld [vmem:[%s980 + $0xa0] sm:$0xff]
        %v1002 = vld [vmem:[%s980 + $0xa8] sm:$0xff]
        %v1003 = vld [vmem:[%s980 + $0xb0] sm:$0xff]
        %v1004 = vld [vmem:[%s980 + $0xb8] sm:$0xff]
        %v1005 = vld [vmem:[%s980 + $0xc0] sm:$0xff]
        %v1006 = vld [vmem:[%s980 + $0xc8] sm:$0xff]
        %v1007 = vld [vmem:[%s980 + $0xd0] sm:$0xff]
        %v1008 = vld [vmem:[%s980 + $0xd8] sm:$0xff]
        %v1009 = vld [vmem:[%s980 + $0xe0] sm:$0xff]
        %v1010 = vld [vmem:[%s980 + $0xe8] sm:$0xff]
        %v1011 = vld [vmem:[%s980 + $0xf0] sm:$0xff]
        %v1012 = vld [vmem:[%s980 + $0xf8] sm:$0xff]
        %v1013 = vld [vmem:[%s980 + $0x100] sm:$0xff]
        %v1014 = vld [vmem:[%s980 + $0x108] sm:$0xff]
        %v1015 = vld [vmem:[%s980 + $0x110] sm:$0xff]
        %v1016 = vld [vmem:[%s980 + $0x118] sm:$0xff]
        %v1017 = vld [vmem:[%s980 + $0x120] sm:$0xff]
        %v1018 = vld [vmem:[%s980 + $0x128] sm:$0xff]
        %v1019 = vld [vmem:[%s980 + $0x130] sm:$0xff]
        %v1020 = vld [vmem:[%s980 + $0x138] sm:$0xff]
        %v1021 = vld [vmem:[%s980 + $0x140] sm:$0xff]
        %v1022 = vld [vmem:[%s980 + $0x148] sm:$0xff]
        %v1023 = vld [vmem:[%s980 + $0x150] sm:$0xff]
        %v1024 = vld [vmem:[%s980 + $0x158] sm:$0xff]
        %v1025 = vld [vmem:[%s980 + $0x160] sm:$0xff]
        %v1026 = vld [vmem:[%s980 + $0x168] sm:$0xff]
        %v1027 = vld [vmem:[%s980 + $0x170] sm:$0xff]
        %v1028 = vld [vmem:[%s980 + $0x178] sm:$0xff]
        %v1029 = vld [vmem:[%s980 + $0x180] sm:$0xff]
        %v1030 = vld [vmem:[%s980 + $0x188] sm:$0xff]
        %v1031 = vld [vmem:[%s980 + $0x190] sm:$0xff]
        %v1032 = vld [vmem:[%s980 + $0x198] sm:$0xff]
        %v1033 = vld [vmem:[%s980 + $0x1a0] sm:$0xff]
        %v1034 = vld [vmem:[%s980 + $0x1a8] sm:$0xff]
        %v1035 = vld [vmem:[%s980 + $0x1b0] sm:$0xff]
        %v1036 = vld [vmem:[%s980 + $0x1b8] sm:$0xff]
        %v1037 = vld [vmem:[%s980 + $0x1c0] sm:$0xff]
        %v1038 = vld [vmem:[%s980 + $0x1c8] sm:$0xff]
        %v1039 = vld [vmem:[%s980 + $0x1d0] sm:$0xff]
        %v1040 = vld [vmem:[%s980 + $0x1d8] sm:$0xff]
        %v1041 = vld [vmem:[%s980 + $0x1e0] sm:$0xff]
        %v1042 = vld [vmem:[%s980 + $0x1e8] sm:$0xff]
        %v1043 = vld [vmem:[%s980 + $0x1f0] sm:$0xff]
        %v1044 = vld [vmem:[%s980 + $0x1f8] sm:$0xff]
        %vm1049 = vcmask 1045504
        %v1050 = vrot.slane %v976, 2
        %v1051 = vrot.slane %v634, 2
        %v1052 = vsel %vm1049, %v1050, %v1051
        %v1053 = vrot.slane %v977, 2
        %v1054 = vrot.slane %v635, 2
        %v1055 = vsel %vm1049, %v1053, %v1054
        %v1056 = vrot.slane %v636, 2
        %v1057 = vsel %vm1049, %v1051, %v1056
        %v1058 = vrot.slane %v637, 2
        %v1059 = vsel %vm1049, %v1054, %v1058
        %v1060 = vrot.slane %v638, 2
        %v1061 = vsel %vm1049, %v1056, %v1060
        %v1062 = vrot.slane %v639, 2
        %v1063 = vsel %vm1049, %v1058, %v1062
        %v1064 = vrot.slane %v978, 2
        %v1065 = vsel %vm1049, %v1060, %v1064
        %v1066 = vrot.slane %v979, 2
        %v1067 = vsel %vm1049, %v1062, %v1066
        %1076 = vmatpush.msra.mxu0 %v1011
        %1077 = vmatpush.msra.mxu0 %v1009
        %1078 = vmatpush.msra.mxu0 %v1007
        %1079 = vmatpush.msra.mxu0 %v1005
        %1080 = vmatpush.msra.mxu0 %v1003
        %1081 = vmatpush.msra.mxu0 %v1001
        %1082 = vmatpush.msra.mxu0 %v999
        %1083 = vmatpush.msra.mxu0 %v997
        %1084 = vmatpush.msra.mxu0 %v995
        %1085 = vmatpush.msra.mxu0 %v993
        %1086 = vmatpush.msra.mxu0 %v991
        %1087 = vmatpush.msra.mxu0 %v989
        %1088 = vmatpush.msra.mxu0 %v987
        %1089 = vmatpush.msra.mxu0 %v985
        %1090 = vmatpush.msra.mxu0 %v983
        %1091 = vmatpush.msra.mxu0 %v981
        %1092 = vmatmul.f32.gmra.mxu0 %v1052
        %v1093 = vpop.f32.mrf.mxu0
        %v1094 = vadd.f32 0.0, %v1093
        %1095 = vmatmul.f32.gmra.mxu0 %v1057
        %v1096 = vpop.f32.mrf.mxu0
        %v1097 = vadd.f32 0.0, %v1096
        %1098 = vmatmul.f32.gmra.mxu0 %v1061
        %v1099 = vpop.f32.mrf.mxu0
        %v1100 = vadd.f32 0.0, %v1099
        %1101 = vmatmul.f32.gmra.mxu0 %v1065
        %v1102 = vpop.f32.mrf.mxu0
        %v1103 = vadd.f32 0.0, %v1102
        %1104 = vdwg.mxu0
        %1105 = vmatpush.msra.mxu0 %v1043
        %1106 = vmatpush.msra.mxu0 %v1041
        %1107 = vmatpush.msra.mxu0 %v1039
        %1108 = vmatpush.msra.mxu0 %v1037
        %1109 = vmatpush.msra.mxu0 %v1035
        %1110 = vmatpush.msra.mxu0 %v1033
        %1111 = vmatpush.msra.mxu0 %v1031
        %1112 = vmatpush.msra.mxu0 %v1029
        %1113 = vmatpush.msra.mxu0 %v1027
        %1114 = vmatpush.msra.mxu0 %v1025
        %1115 = vmatpush.msra.mxu0 %v1023
        %1116 = vmatpush.msra.mxu0 %v1021
        %1117 = vmatpush.msra.mxu0 %v1019
        %1118 = vmatpush.msra.mxu0 %v1017
        %1119 = vmatpush.msra.mxu0 %v1015
        %1120 = vmatpush.msra.mxu0 %v1013
        %1121 = vmatmul.f32.gmra.mxu0 %v1055
        %v1122 = vpop.f32.mrf.mxu0
        %v1123 = vadd.f32 %v1094, %v1122
        %1124 = vmatmul.f32.gmra.mxu0 %v1059
        %v1125 = vpop.f32.mrf.mxu0
        %v1126 = vadd.f32 %v1097, %v1125
        %1127 = vmatmul.f32.gmra.mxu0 %v1063
        %v1128 = vpop.f32.mrf.mxu0
        %v1129 = vadd.f32 %v1100, %v1128
        %1130 = vmatmul.f32.gmra.mxu0 %v1067
        %v1131 = vpop.f32.mrf.mxu0
        %v1132 = vadd.f32 %v1103, %v1131
        %1133 = vdwg.mxu0
        %1134 = vmatpush.msra.mxu0 %v1012
        %1135 = vmatpush.msra.mxu0 %v1010
        %1136 = vmatpush.msra.mxu0 %v1008
        %1137 = vmatpush.msra.mxu0 %v1006
        %1138 = vmatpush.msra.mxu0 %v1004
        %1139 = vmatpush.msra.mxu0 %v1002
        %1140 = vmatpush.msra.mxu0 %v1000
        %1141 = vmatpush.msra.mxu0 %v998
        %1142 = vmatpush.msra.mxu0 %v996
        %1143 = vmatpush.msra.mxu0 %v994
        %1144 = vmatpush.msra.mxu0 %v992
        %1145 = vmatpush.msra.mxu0 %v990
        %1146 = vmatpush.msra.mxu0 %v988
        %1147 = vmatpush.msra.mxu0 %v986
        %1148 = vmatpush.msra.mxu0 %v984
        %1149 = vmatpush.msra.mxu0 %v982
        %1150 = vmatmul.f32.gmra.mxu0 %v1052
        %v1151 = vpop.f32.mrf.mxu0
        %v1152 = vadd.f32 0.0, %v1151
        %1153 = vmatmul.f32.gmra.mxu0 %v1057
        %v1154 = vpop.f32.mrf.mxu0
        %v1155 = vadd.f32 0.0, %v1154
        %1156 = vmatmul.f32.gmra.mxu0 %v1061
        %v1157 = vpop.f32.mrf.mxu0
        %v1158 = vadd.f32 0.0, %v1157
        %1159 = vmatmul.f32.gmra.mxu0 %v1065
        %v1160 = vpop.f32.mrf.mxu0
        %v1161 = vadd.f32 0.0, %v1160
        %1162 = vdwg.mxu0
        %1163 = vmatpush.msra.mxu0 %v1044
        %1164 = vmatpush.msra.mxu0 %v1042
        %1165 = vmatpush.msra.mxu0 %v1040
        %1166 = vmatpush.msra.mxu0 %v1038
        %1167 = vmatpush.msra.mxu0 %v1036
        %1168 = vmatpush.msra.mxu0 %v1034
        %1169 = vmatpush.msra.mxu0 %v1032
        %1170 = vmatpush.msra.mxu0 %v1030
        %1171 = vmatpush.msra.mxu0 %v1028
        %1172 = vmatpush.msra.mxu0 %v1026
        %1173 = vmatpush.msra.mxu0 %v1024
        %1174 = vmatpush.msra.mxu0 %v1022
        %1175 = vmatpush.msra.mxu0 %v1020
        %1176 = vmatpush.msra.mxu0 %v1018
        %1177 = vmatpush.msra.mxu0 %v1016
        %1178 = vmatpush.msra.mxu0 %v1014
        %1179 = vmatmul.f32.gmra.mxu0 %v1055
        %v1180 = vpop.f32.mrf.mxu0
        %v1181 = vadd.f32 %v1152, %v1180
        %1182 = vmatmul.f32.gmra.mxu0 %v1059
        %v1183 = vpop.f32.mrf.mxu0
        %v1184 = vadd.f32 %v1155, %v1183
        %1185 = vmatmul.f32.gmra.mxu0 %v1063
        %v1186 = vpop.f32.mrf.mxu0
        %v1187 = vadd.f32 %v1158, %v1186
        %1188 = vmatmul.f32.gmra.mxu0 %v1067
        %v1189 = vpop.f32.mrf.mxu0
        %v1190 = vadd.f32 %v1161, %v1189
        %1191 = vdwg.mxu0
        %v1192 = vadd.f32 %v907, %v1123
        %v1193 = vadd.f32 %v965, %v1181
        %v1194 = vadd.f32 %v910, %v1126
        %v1195 = vadd.f32 %v968, %v1184
        %v1196 = vadd.f32 %v913, %v1129
        %v1197 = vadd.f32 %v971, %v1187
        %v1198 = vadd.f32 %v916, %v1132
        %v1199 = vadd.f32 %v974, %v1190
        %v1200 = vld [vmem:[%s555] sm:$0xf8]
        %v1201 = vld [vmem:[%s555 + $0x8] sm:$0xf8]
        %v1202 = vld [vmem:[%s555 + $0x40] sm:$0x7]
        %v1203 = vld [vmem:[%s555 + $0x48] sm:$0x7]
        %s1204 = scalar_lea.vmem %s1, 1536
        %v1205 = vld [vmem:[%s1204] sm:$0xff]
        %v1206 = vld [vmem:[%s1204 + $0x8] sm:$0xff]
        %v1207 = vld [vmem:[%s1204 + $0x10] sm:$0xff]
        %v1208 = vld [vmem:[%s1204 + $0x18] sm:$0xff]
        %v1209 = vld [vmem:[%s1204 + $0x20] sm:$0xff]
        %v1210 = vld [vmem:[%s1204 + $0x28] sm:$0xff]
        %v1211 = vld [vmem:[%s1204 + $0x30] sm:$0xff]
        %v1212 = vld [vmem:[%s1204 + $0x38] sm:$0xff]
        %v1213 = vld [vmem:[%s1204 + $0x40] sm:$0xff]
        %v1214 = vld [vmem:[%s1204 + $0x48] sm:$0xff]
        %v1215 = vld [vmem:[%s1204 + $0x50] sm:$0xff]
        %v1216 = vld [vmem:[%s1204 + $0x58] sm:$0xff]
        %v1217 = vld [vmem:[%s1204 + $0x60] sm:$0xff]
        %v1218 = vld [vmem:[%s1204 + $0x68] sm:$0xff]
        %v1219 = vld [vmem:[%s1204 + $0x70] sm:$0xff]
        %v1220 = vld [vmem:[%s1204 + $0x78] sm:$0xff]
        %v1221 = vld [vmem:[%s1204 + $0x80] sm:$0xff]
        %v1222 = vld [vmem:[%s1204 + $0x88] sm:$0xff]
        %v1223 = vld [vmem:[%s1204 + $0x90] sm:$0xff]
        %v1224 = vld [vmem:[%s1204 + $0x98] sm:$0xff]
        %v1225 = vld [vmem:[%s1204 + $0xa0] sm:$0xff]
        %v1226 = vld [vmem:[%s1204 + $0xa8] sm:$0xff]
        %v1227 = vld [vmem:[%s1204 + $0xb0] sm:$0xff]
        %v1228 = vld [vmem:[%s1204 + $0xb8] sm:$0xff]
        %v1229 = vld [vmem:[%s1204 + $0xc0] sm:$0xff]
        %v1230 = vld [vmem:[%s1204 + $0xc8] sm:$0xff]
        %v1231 = vld [vmem:[%s1204 + $0xd0] sm:$0xff]
        %v1232 = vld [vmem:[%s1204 + $0xd8] sm:$0xff]
        %v1233 = vld [vmem:[%s1204 + $0xe0] sm:$0xff]
        %v1234 = vld [vmem:[%s1204 + $0xe8] sm:$0xff]
        %v1235 = vld [vmem:[%s1204 + $0xf0] sm:$0xff]
        %v1236 = vld [vmem:[%s1204 + $0xf8] sm:$0xff]
        %v1237 = vld [vmem:[%s1204 + $0x100] sm:$0xff]
        %v1238 = vld [vmem:[%s1204 + $0x108] sm:$0xff]
        %v1239 = vld [vmem:[%s1204 + $0x110] sm:$0xff]
        %v1240 = vld [vmem:[%s1204 + $0x118] sm:$0xff]
        %v1241 = vld [vmem:[%s1204 + $0x120] sm:$0xff]
        %v1242 = vld [vmem:[%s1204 + $0x128] sm:$0xff]
        %v1243 = vld [vmem:[%s1204 + $0x130] sm:$0xff]
        %v1244 = vld [vmem:[%s1204 + $0x138] sm:$0xff]
        %v1245 = vld [vmem:[%s1204 + $0x140] sm:$0xff]
        %v1246 = vld [vmem:[%s1204 + $0x148] sm:$0xff]
        %v1247 = vld [vmem:[%s1204 + $0x150] sm:$0xff]
        %v1248 = vld [vmem:[%s1204 + $0x158] sm:$0xff]
        %v1249 = vld [vmem:[%s1204 + $0x160] sm:$0xff]
        %v1250 = vld [vmem:[%s1204 + $0x168] sm:$0xff]
        %v1251 = vld [vmem:[%s1204 + $0x170] sm:$0xff]
        %v1252 = vld [vmem:[%s1204 + $0x178] sm:$0xff]
        %v1253 = vld [vmem:[%s1204 + $0x180] sm:$0xff]
        %v1254 = vld [vmem:[%s1204 + $0x188] sm:$0xff]
        %v1255 = vld [vmem:[%s1204 + $0x190] sm:$0xff]
        %v1256 = vld [vmem:[%s1204 + $0x198] sm:$0xff]
        %v1257 = vld [vmem:[%s1204 + $0x1a0] sm:$0xff]
        %v1258 = vld [vmem:[%s1204 + $0x1a8] sm:$0xff]
        %v1259 = vld [vmem:[%s1204 + $0x1b0] sm:$0xff]
        %v1260 = vld [vmem:[%s1204 + $0x1b8] sm:$0xff]
        %v1261 = vld [vmem:[%s1204 + $0x1c0] sm:$0xff]
        %v1262 = vld [vmem:[%s1204 + $0x1c8] sm:$0xff]
        %v1263 = vld [vmem:[%s1204 + $0x1d0] sm:$0xff]
        %v1264 = vld [vmem:[%s1204 + $0x1d8] sm:$0xff]
        %v1265 = vld [vmem:[%s1204 + $0x1e0] sm:$0xff]
        %v1266 = vld [vmem:[%s1204 + $0x1e8] sm:$0xff]
        %v1267 = vld [vmem:[%s1204 + $0x1f0] sm:$0xff]
        %v1268 = vld [vmem:[%s1204 + $0x1f8] sm:$0xff]
        %vm1273 = vcmask 1044480
        %v1274 = vrot.slane %v1200, 3
        %v1275 = vrot.slane %v634, 3
        %v1276 = vsel %vm1273, %v1274, %v1275
        %v1277 = vrot.slane %v1201, 3
        %v1278 = vrot.slane %v635, 3
        %v1279 = vsel %vm1273, %v1277, %v1278
        %v1280 = vrot.slane %v636, 3
        %v1281 = vsel %vm1273, %v1275, %v1280
        %v1282 = vrot.slane %v637, 3
        %v1283 = vsel %vm1273, %v1278, %v1282
        %v1284 = vrot.slane %v638, 3
        %v1285 = vsel %vm1273, %v1280, %v1284
        %v1286 = vrot.slane %v639, 3
        %v1287 = vsel %vm1273, %v1282, %v1286
        %v1288 = vrot.slane %v1202, 3
        %v1289 = vsel %vm1273, %v1284, %v1288
        %v1290 = vrot.slane %v1203, 3
        %v1291 = vsel %vm1273, %v1286, %v1290
        %1300 = vmatpush.msra.mxu0 %v1235
        %1301 = vmatpush.msra.mxu0 %v1233
        %1302 = vmatpush.msra.mxu0 %v1231
        %1303 = vmatpush.msra.mxu0 %v1229
        %1304 = vmatpush.msra.mxu0 %v1227
        %1305 = vmatpush.msra.mxu0 %v1225
        %1306 = vmatpush.msra.mxu0 %v1223
        %1307 = vmatpush.msra.mxu0 %v1221
        %1308 = vmatpush.msra.mxu0 %v1219
        %1309 = vmatpush.msra.mxu0 %v1217
        %1310 = vmatpush.msra.mxu0 %v1215
        %1311 = vmatpush.msra.mxu0 %v1213
        %1312 = vmatpush.msra.mxu0 %v1211
        %1313 = vmatpush.msra.mxu0 %v1209
        %1314 = vmatpush.msra.mxu0 %v1207
        %1315 = vmatpush.msra.mxu0 %v1205
        %1316 = vmatmul.f32.gmra.mxu0 %v1276
        %v1317 = vpop.f32.mrf.mxu0
        %v1318 = vadd.f32 0.0, %v1317
        %1319 = vmatmul.f32.gmra.mxu0 %v1281
        %v1320 = vpop.f32.mrf.mxu0
        %v1321 = vadd.f32 0.0, %v1320
        %1322 = vmatmul.f32.gmra.mxu0 %v1285
        %v1323 = vpop.f32.mrf.mxu0
        %v1324 = vadd.f32 0.0, %v1323
        %1325 = vmatmul.f32.gmra.mxu0 %v1289
        %v1326 = vpop.f32.mrf.mxu0
        %v1327 = vadd.f32 0.0, %v1326
        %1328 = vdwg.mxu0
        %1329 = vmatpush.msra.mxu0 %v1267
        %1330 = vmatpush.msra.mxu0 %v1265
        %1331 = vmatpush.msra.mxu0 %v1263
        %1332 = vmatpush.msra.mxu0 %v1261
        %1333 = vmatpush.msra.mxu0 %v1259
        %1334 = vmatpush.msra.mxu0 %v1257
        %1335 = vmatpush.msra.mxu0 %v1255
        %1336 = vmatpush.msra.mxu0 %v1253
        %1337 = vmatpush.msra.mxu0 %v1251
        %1338 = vmatpush.msra.mxu0 %v1249
        %1339 = vmatpush.msra.mxu0 %v1247
        %1340 = vmatpush.msra.mxu0 %v1245
        %1341 = vmatpush.msra.mxu0 %v1243
        %1342 = vmatpush.msra.mxu0 %v1241
        %1343 = vmatpush.msra.mxu0 %v1239
        %1344 = vmatpush.msra.mxu0 %v1237
        %1345 = vmatmul.f32.gmra.mxu0 %v1279
        %v1346 = vpop.f32.mrf.mxu0
        %v1347 = vadd.f32 %v1318, %v1346
        %1348 = vmatmul.f32.gmra.mxu0 %v1283
        %v1349 = vpop.f32.mrf.mxu0
        %v1350 = vadd.f32 %v1321, %v1349
        %1351 = vmatmul.f32.gmra.mxu0 %v1287
        %v1352 = vpop.f32.mrf.mxu0
        %v1353 = vadd.f32 %v1324, %v1352
        %1354 = vmatmul.f32.gmra.mxu0 %v1291
        %v1355 = vpop.f32.mrf.mxu0
        %v1356 = vadd.f32 %v1327, %v1355
        %1357 = vdwg.mxu0
        %1358 = vmatpush.msra.mxu0 %v1236
        %1359 = vmatpush.msra.mxu0 %v1234
        %1360 = vmatpush.msra.mxu0 %v1232
        %1361 = vmatpush.msra.mxu0 %v1230
        %1362 = vmatpush.msra.mxu0 %v1228
        %1363 = vmatpush.msra.mxu0 %v1226
        %1364 = vmatpush.msra.mxu0 %v1224
        %1365 = vmatpush.msra.mxu0 %v1222
        %1366 = vmatpush.msra.mxu0 %v1220
        %1367 = vmatpush.msra.mxu0 %v1218
        %1368 = vmatpush.msra.mxu0 %v1216
        %1369 = vmatpush.msra.mxu0 %v1214
        %1370 = vmatpush.msra.mxu0 %v1212
        %1371 = vmatpush.msra.mxu0 %v1210
        %1372 = vmatpush.msra.mxu0 %v1208
        %1373 = vmatpush.msra.mxu0 %v1206
        %1374 = vmatmul.f32.gmra.mxu0 %v1276
        %v1375 = vpop.f32.mrf.mxu0
        %v1376 = vadd.f32 0.0, %v1375
        %1377 = vmatmul.f32.gmra.mxu0 %v1281
        %v1378 = vpop.f32.mrf.mxu0
        %v1379 = vadd.f32 0.0, %v1378
        %1380 = vmatmul.f32.gmra.mxu0 %v1285
        %v1381 = vpop.f32.mrf.mxu0
        %v1382 = vadd.f32 0.0, %v1381
        %1383 = vmatmul.f32.gmra.mxu0 %v1289
        %v1384 = vpop.f32.mrf.mxu0
        %v1385 = vadd.f32 0.0, %v1384
        %1386 = vdwg.mxu0
        %1387 = vmatpush.msra.mxu0 %v1268
        %1388 = vmatpush.msra.mxu0 %v1266
        %1389 = vmatpush.msra.mxu0 %v1264
        %1390 = vmatpush.msra.mxu0 %v1262
        %1391 = vmatpush.msra.mxu0 %v1260
        %1392 = vmatpush.msra.mxu0 %v1258
        %1393 = vmatpush.msra.mxu0 %v1256
        %1394 = vmatpush.msra.mxu0 %v1254
        %1395 = vmatpush.msra.mxu0 %v1252
        %1396 = vmatpush.msra.mxu0 %v1250
        %1397 = vmatpush.msra.mxu0 %v1248
        %1398 = vmatpush.msra.mxu0 %v1246
        %1399 = vmatpush.msra.mxu0 %v1244
        %1400 = vmatpush.msra.mxu0 %v1242
        %1401 = vmatpush.msra.mxu0 %v1240
        %1402 = vmatpush.msra.mxu0 %v1238
        %1403 = vmatmul.f32.gmra.mxu0 %v1279
        %v1404 = vpop.f32.mrf.mxu0
        %v1405 = vadd.f32 %v1376, %v1404
        %1406 = vmatmul.f32.gmra.mxu0 %v1283
        %v1407 = vpop.f32.mrf.mxu0
        %v1408 = vadd.f32 %v1379, %v1407
        %1409 = vmatmul.f32.gmra.mxu0 %v1287
        %v1410 = vpop.f32.mrf.mxu0
        %v1411 = vadd.f32 %v1382, %v1410
        %1412 = vmatmul.f32.gmra.mxu0 %v1291
        %v1413 = vpop.f32.mrf.mxu0
        %v1414 = vadd.f32 %v1385, %v1413
        %1415 = vdwg.mxu0
        %v1416 = vadd.f32 %v1192, %v1347
        %v1417 = vadd.f32 %v1193, %v1405
        %v1418 = vadd.f32 %v1194, %v1350
        %v1419 = vadd.f32 %v1195, %v1408
        %v1420 = vadd.f32 %v1196, %v1353
        %v1421 = vadd.f32 %v1197, %v1411
        %v1422 = vadd.f32 %v1198, %v1356
        %v1423 = vadd.f32 %v1199, %v1414
        %v1424 = vld [vmem:[%s555] sm:$0xf0]
        %v1425 = vld [vmem:[%s555 + $0x8] sm:$0xf0]
        %v1426 = vld [vmem:[%s555 + $0x40] sm:$0xf]
        %v1427 = vld [vmem:[%s555 + $0x48] sm:$0xf]
        %s1428 = scalar_lea.vmem %s1, 2048
        %v1429 = vld [vmem:[%s1428] sm:$0xff]
        %v1430 = vld [vmem:[%s1428 + $0x8] sm:$0xff]
        %v1431 = vld [vmem:[%s1428 + $0x10] sm:$0xff]
        %v1432 = vld [vmem:[%s1428 + $0x18] sm:$0xff]
        %v1433 = vld [vmem:[%s1428 + $0x20] sm:$0xff]
        %v1434 = vld [vmem:[%s1428 + $0x28] sm:$0xff]
        %v1435 = vld [vmem:[%s1428 + $0x30] sm:$0xff]
        %v1436 = vld [vmem:[%s1428 + $0x38] sm:$0xff]
        %v1437 = vld [vmem:[%s1428 + $0x40] sm:$0xff]
        %v1438 = vld [vmem:[%s1428 + $0x48] sm:$0xff]
        %v1439 = vld [vmem:[%s1428 + $0x50] sm:$0xff]
        %v1440 = vld [vmem:[%s1428 + $0x58] sm:$0xff]
        %v1441 = vld [vmem:[%s1428 + $0x60] sm:$0xff]
        %v1442 = vld [vmem:[%s1428 + $0x68] sm:$0xff]
        %v1443 = vld [vmem:[%s1428 + $0x70] sm:$0xff]
        %v1444 = vld [vmem:[%s1428 + $0x78] sm:$0xff]
        %v1445 = vld [vmem:[%s1428 + $0x80] sm:$0xff]
        %v1446 = vld [vmem:[%s1428 + $0x88] sm:$0xff]
        %v1447 = vld [vmem:[%s1428 + $0x90] sm:$0xff]
        %v1448 = vld [vmem:[%s1428 + $0x98] sm:$0xff]
        %v1449 = vld [vmem:[%s1428 + $0xa0] sm:$0xff]
        %v1450 = vld [vmem:[%s1428 + $0xa8] sm:$0xff]
        %v1451 = vld [vmem:[%s1428 + $0xb0] sm:$0xff]
        %v1452 = vld [vmem:[%s1428 + $0xb8] sm:$0xff]
        %v1453 = vld [vmem:[%s1428 + $0xc0] sm:$0xff]
        %v1454 = vld [vmem:[%s1428 + $0xc8] sm:$0xff]
        %v1455 = vld [vmem:[%s1428 + $0xd0] sm:$0xff]
        %v1456 = vld [vmem:[%s1428 + $0xd8] sm:$0xff]
        %v1457 = vld [vmem:[%s1428 + $0xe0] sm:$0xff]
        %v1458 = vld [vmem:[%s1428 + $0xe8] sm:$0xff]
        %v1459 = vld [vmem:[%s1428 + $0xf0] sm:$0xff]
        %v1460 = vld [vmem:[%s1428 + $0xf8] sm:$0xff]
        %v1461 = vld [vmem:[%s1428 + $0x100] sm:$0xff]
        %v1462 = vld [vmem:[%s1428 + $0x108] sm:$0xff]
        %v1463 = vld [vmem:[%s1428 + $0x110] sm:$0xff]
        %v1464 = vld [vmem:[%s1428 + $0x118] sm:$0xff]
        %v1465 = vld [vmem:[%s1428 + $0x120] sm:$0xff]
        %v1466 = vld [vmem:[%s1428 + $0x128] sm:$0xff]
        %v1467 = vld [vmem:[%s1428 + $0x130] sm:$0xff]
        %v1468 = vld [vmem:[%s1428 + $0x138] sm:$0xff]
        %v1469 = vld [vmem:[%s1428 + $0x140] sm:$0xff]
        %v1470 = vld [vmem:[%s1428 + $0x148] sm:$0xff]
        %v1471 = vld [vmem:[%s1428 + $0x150] sm:$0xff]
        %v1472 = vld [vmem:[%s1428 + $0x158] sm:$0xff]
        %v1473 = vld [vmem:[%s1428 + $0x160] sm:$0xff]
        %v1474 = vld [vmem:[%s1428 + $0x168] sm:$0xff]
        %v1475 = vld [vmem:[%s1428 + $0x170] sm:$0xff]
        %v1476 = vld [vmem:[%s1428 + $0x178] sm:$0xff]
        %v1477 = vld [vmem:[%s1428 + $0x180] sm:$0xff]
        %v1478 = vld [vmem:[%s1428 + $0x188] sm:$0xff]
        %v1479 = vld [vmem:[%s1428 + $0x190] sm:$0xff]
        %v1480 = vld [vmem:[%s1428 + $0x198] sm:$0xff]
        %v1481 = vld [vmem:[%s1428 + $0x1a0] sm:$0xff]
        %v1482 = vld [vmem:[%s1428 + $0x1a8] sm:$0xff]
        %v1483 = vld [vmem:[%s1428 + $0x1b0] sm:$0xff]
        %v1484 = vld [vmem:[%s1428 + $0x1b8] sm:$0xff]
        %v1485 = vld [vmem:[%s1428 + $0x1c0] sm:$0xff]
        %v1486 = vld [vmem:[%s1428 + $0x1c8] sm:$0xff]
        %v1487 = vld [vmem:[%s1428 + $0x1d0] sm:$0xff]
        %v1488 = vld [vmem:[%s1428 + $0x1d8] sm:$0xff]
        %v1489 = vld [vmem:[%s1428 + $0x1e0] sm:$0xff]
        %v1490 = vld [vmem:[%s1428 + $0x1e8] sm:$0xff]
        %v1491 = vld [vmem:[%s1428 + $0x1f0] sm:$0xff]
        %v1492 = vld [vmem:[%s1428 + $0x1f8] sm:$0xff]
        %vm1497 = vcmask 1043456
        %v1498 = vrot.slane %v1424, 4
        %v1499 = vrot.slane %v634, 4
        %v1500 = vsel %vm1497, %v1498, %v1499
        %v1501 = vrot.slane %v1425, 4
        %v1502 = vrot.slane %v635, 4
        %v1503 = vsel %vm1497, %v1501, %v1502
        %v1504 = vrot.slane %v636, 4
        %v1505 = vsel %vm1497, %v1499, %v1504
        %v1506 = vrot.slane %v637, 4
        %v1507 = vsel %vm1497, %v1502, %v1506
        %v1508 = vrot.slane %v638, 4
        %v1509 = vsel %vm1497, %v1504, %v1508
        %v1510 = vrot.slane %v639, 4
        %v1511 = vsel %vm1497, %v1506, %v1510
        %v1512 = vrot.slane %v1426, 4
        %v1513 = vsel %vm1497, %v1508, %v1512
        %v1514 = vrot.slane %v1427, 4
        %v1515 = vsel %vm1497, %v1510, %v1514
        %1524 = vmatpush.msra.mxu0 %v1459
        %1525 = vmatpush.msra.mxu0 %v1457
        %1526 = vmatpush.msra.mxu0 %v1455
        %1527 = vmatpush.msra.mxu0 %v1453
        %1528 = vmatpush.msra.mxu0 %v1451
        %1529 = vmatpush.msra.mxu0 %v1449
        %1530 = vmatpush.msra.mxu0 %v1447
        %1531 = vmatpush.msra.mxu0 %v1445
        %1532 = vmatpush.msra.mxu0 %v1443
        %1533 = vmatpush.msra.mxu0 %v1441
        %1534 = vmatpush.msra.mxu0 %v1439
        %1535 = vmatpush.msra.mxu0 %v1437
        %1536 = vmatpush.msra.mxu0 %v1435
        %1537 = vmatpush.msra.mxu0 %v1433
        %1538 = vmatpush.msra.mxu0 %v1431
        %1539 = vmatpush.msra.mxu0 %v1429
        %1540 = vmatmul.f32.gmra.mxu0 %v1500
        %v1541 = vpop.f32.mrf.mxu0
        %v1542 = vadd.f32 0.0, %v1541
        %1543 = vmatmul.f32.gmra.mxu0 %v1505
        %v1544 = vpop.f32.mrf.mxu0
        %v1545 = vadd.f32 0.0, %v1544
        %1546 = vmatmul.f32.gmra.mxu0 %v1509
        %v1547 = vpop.f32.mrf.mxu0
        %v1548 = vadd.f32 0.0, %v1547
        %1549 = vmatmul.f32.gmra.mxu0 %v1513
        %v1550 = vpop.f32.mrf.mxu0
        %v1551 = vadd.f32 0.0, %v1550
        %1552 = vdwg.mxu0
        %1553 = vmatpush.msra.mxu0 %v1491
        %1554 = vmatpush.msra.mxu0 %v1489
        %1555 = vmatpush.msra.mxu0 %v1487
        %1556 = vmatpush.msra.mxu0 %v1485
        %1557 = vmatpush.msra.mxu0 %v1483
        %1558 = vmatpush.msra.mxu0 %v1481
        %1559 = vmatpush.msra.mxu0 %v1479
        %1560 = vmatpush.msra.mxu0 %v1477
        %1561 = vmatpush.msra.mxu0 %v1475
        %1562 = vmatpush.msra.mxu0 %v1473
        %1563 = vmatpush.msra.mxu0 %v1471
        %1564 = vmatpush.msra.mxu0 %v1469
        %1565 = vmatpush.msra.mxu0 %v1467
        %1566 = vmatpush.msra.mxu0 %v1465
        %1567 = vmatpush.msra.mxu0 %v1463
        %1568 = vmatpush.msra.mxu0 %v1461
        %1569 = vmatmul.f32.gmra.mxu0 %v1503
        %v1570 = vpop.f32.mrf.mxu0
        %v1571 = vadd.f32 %v1542, %v1570
        %1572 = vmatmul.f32.gmra.mxu0 %v1507
        %v1573 = vpop.f32.mrf.mxu0
        %v1574 = vadd.f32 %v1545, %v1573
        %1575 = vmatmul.f32.gmra.mxu0 %v1511
        %v1576 = vpop.f32.mrf.mxu0
        %v1577 = vadd.f32 %v1548, %v1576
        %1578 = vmatmul.f32.gmra.mxu0 %v1515
        %v1579 = vpop.f32.mrf.mxu0
        %v1580 = vadd.f32 %v1551, %v1579
        %1581 = vdwg.mxu0
        %1582 = vmatpush.msra.mxu0 %v1460
        %1583 = vmatpush.msra.mxu0 %v1458
        %1584 = vmatpush.msra.mxu0 %v1456
        %1585 = vmatpush.msra.mxu0 %v1454
        %1586 = vmatpush.msra.mxu0 %v1452
        %1587 = vmatpush.msra.mxu0 %v1450
        %1588 = vmatpush.msra.mxu0 %v1448
        %1589 = vmatpush.msra.mxu0 %v1446
        %1590 = vmatpush.msra.mxu0 %v1444
        %1591 = vmatpush.msra.mxu0 %v1442
        %1592 = vmatpush.msra.mxu0 %v1440
        %1593 = vmatpush.msra.mxu0 %v1438
        %1594 = vmatpush.msra.mxu0 %v1436
        %1595 = vmatpush.msra.mxu0 %v1434
        %1596 = vmatpush.msra.mxu0 %v1432
        %1597 = vmatpush.msra.mxu0 %v1430
        %1598 = vmatmul.f32.gmra.mxu0 %v1500
        %v1599 = vpop.f32.mrf.mxu0
        %v1600 = vadd.f32 0.0, %v1599
        %1601 = vmatmul.f32.gmra.mxu0 %v1505
        %v1602 = vpop.f32.mrf.mxu0
        %v1603 = vadd.f32 0.0, %v1602
        %1604 = vmatmul.f32.gmra.mxu0 %v1509
        %v1605 = vpop.f32.mrf.mxu0
        %v1606 = vadd.f32 0.0, %v1605
        %1607 = vmatmul.f32.gmra.mxu0 %v1513
        %v1608 = vpop.f32.mrf.mxu0
        %v1609 = vadd.f32 0.0, %v1608
        %1610 = vdwg.mxu0
        %1611 = vmatpush.msra.mxu0 %v1492
        %1612 = vmatpush.msra.mxu0 %v1490
        %1613 = vmatpush.msra.mxu0 %v1488
        %1614 = vmatpush.msra.mxu0 %v1486
        %1615 = vmatpush.msra.mxu0 %v1484
        %1616 = vmatpush.msra.mxu0 %v1482
        %1617 = vmatpush.msra.mxu0 %v1480
        %1618 = vmatpush.msra.mxu0 %v1478
        %1619 = vmatpush.msra.mxu0 %v1476
        %1620 = vmatpush.msra.mxu0 %v1474
        %1621 = vmatpush.msra.mxu0 %v1472
        %1622 = vmatpush.msra.mxu0 %v1470
        %1623 = vmatpush.msra.mxu0 %v1468
        %1624 = vmatpush.msra.mxu0 %v1466
        %1625 = vmatpush.msra.mxu0 %v1464
        %1626 = vmatpush.msra.mxu0 %v1462
        %1627 = vmatmul.f32.gmra.mxu0 %v1503
        %v1628 = vpop.f32.mrf.mxu0
        %v1629 = vadd.f32 %v1600, %v1628
        %1630 = vmatmul.f32.gmra.mxu0 %v1507
        %v1631 = vpop.f32.mrf.mxu0
        %v1632 = vadd.f32 %v1603, %v1631
        %1633 = vmatmul.f32.gmra.mxu0 %v1511
        %v1634 = vpop.f32.mrf.mxu0
        %v1635 = vadd.f32 %v1606, %v1634
        %1636 = vmatmul.f32.gmra.mxu0 %v1515
        %v1637 = vpop.f32.mrf.mxu0
        %v1638 = vadd.f32 %v1609, %v1637
        %1639 = vdwg.mxu0
        %v1640 = vadd.f32 %v1416, %v1571
        %v1641 = vadd.f32 %v1417, %v1629
        %v1642 = vadd.f32 %v1418, %v1574
        %v1643 = vadd.f32 %v1419, %v1632
        %v1644 = vadd.f32 %v1420, %v1577
        %v1645 = vadd.f32 %v1421, %v1635
        %v1646 = vadd.f32 %v1422, %v1580
        %v1647 = vadd.f32 %v1423, %v1638
        %v1648 = vld [vmem:[%s2] sm:$0x3]
        %v1650 = vperm.slane %v1648, 0
        %v1651 = vperm.slane %v1648, 1
        %v1654 = vadd.f32 %v1640, %v1650
        %v1655 = vadd.f32 %v1641, %v1651
        %v1656 = vadd.f32 %v1642, %v1650
        %v1657 = vadd.f32 %v1643, %v1651
        %v1658 = vadd.f32 %v1644, %v1650
        %v1659 = vadd.f32 %v1645, %v1651
        %v1660 = vadd.f32 %v1646, %v1650
        %v1661 = vadd.f32 %v1647, %v1651
        %v1662 = vmax.f32 %v1654, 0.0
        %v1663 = vmax.f32 %v1655, 0.0
        %v1664 = vmax.f32 %v1656, 0.0
        %v1665 = vmax.f32 %v1657, 0.0
        %v1666 = vmax.f32 %v1658, 0.0
        %v1667 = vmax.f32 %v1659, 0.0
        %v1668 = vmax.f32 %v1660, 0.0
        %v1669 = vmax.f32 %v1661, 0.0
        %v1670 = vmax.f32 %v1662, %v1663
        %v1671 = vmax.f32 %v1664, %v1665
        %v1672 = vmax.f32 %v1666, %v1667
        %v1673 = vmax.f32 %v1668, %v1669
        %v1674 = vld [vmem:[%s3] sm:$0xff]
        %v1675 = vld [vmem:[%s3 + $0x8] sm:$0xff]
        %v1676 = vld [vmem:[%s3 + $0x10] sm:$0xff]
        %vm1677 = vcmask 261120
        %v1679 = vsel %vm1677, %v1674, 0
        %v1682 = vsel %vm1677, %v1675, 0
        %v1685 = vsel %vm1677, %v1676, 0
        %1687 = vmatpush.msra.mxu0 0.0
        %1688 = vmatpush.msra.mxu0 0.0
        %1689 = vmatpush.msra.mxu0 0.0
        %1690 = vmatpush.msra.mxu0 0.0
        %1691 = vmatpush.msra.mxu0 0.0
        %1692 = vmatpush.msra.mxu0 0.0
        %1693 = vmatpush.msra.mxu0 0.0
        %1694 = vmatpush.msra.mxu0 0.0
        %1695 = vmatpush.msra.mxu0 0.0
        %1696 = vmatpush.msra.mxu0 0.0
        %1697 = vmatpush.msra.mxu0 0.0
        %1698 = vmatpush.msra.mxu0 0.0
        %1699 = vmatpush.msra.mxu0 %v1673
        %1700 = vmatpush.msra.mxu0 %v1672
        %1701 = vmatpush.msra.mxu0 %v1671
        %1702 = vmatpush.msra.mxu0 %v1670
        %1703 = vmatmul.f32.gmra.mxu0 %v1679
        %v1704 = vpop.f32.mrf.mxu0
        %v1705 = vadd.f32 0.0, %v1704
        %1706 = vmatmul.f32.gmra.mxu0 %v1682
        %v1707 = vpop.f32.mrf.mxu0
        %v1708 = vadd.f32 0.0, %v1707
        %1709 = vmatmul.f32.gmra.mxu0 %v1685
        %v1710 = vpop.f32.mrf.mxu0
        %v1711 = vadd.f32 0.0, %v1710
        %1712 = vdwg.mxu0
        %v1713 = vld [vmem:[%s4] sm:$0xff]
        %v1714 = vld [vmem:[%s4 + $0x8] sm:$0xff]
        %v1715 = vld [vmem:[%s4 + $0x10] sm:$0xff]
        %v1717 = vsel %vm1677, %v1713, 0
        %v1720 = vsel %vm1677, %v1714, 0
        %v1723 = vsel %vm1677, %v1715, 0
        %1725 = vmatpush.msra.mxu0 0.0
        %1726 = vmatpush.msra.mxu0 0.0
        %1727 = vmatpush.msra.mxu0 0.0
        %1728 = vmatpush.msra.mxu0 0.0
        %1729 = vmatpush.msra.mxu0 0.0
        %1730 = vmatpush.msra.mxu0 0.0
        %1731 = vmatpush.msra.mxu0 0.0
        %1732 = vmatpush.msra.mxu0 0.0
        %1733 = vmatpush.msra.mxu0 0.0
        %1734 = vmatpush.msra.mxu0 0.0
        %1735 = vmatpush.msra.mxu0 0.0
        %1736 = vmatpush.msra.mxu0 0.0
        %1737 = vmatpush.msra.mxu0 %v1673
        %1738 = vmatpush.msra.mxu0 %v1672
        %1739 = vmatpush.msra.mxu0 %v1671
        %1740 = vmatpush.msra.mxu0 %v1670
        %1741 = vmatmul.f32.gmra.mxu0 %v1717
        %v1742 = vpop.f32.mrf.mxu0
        %v1743 = vadd.f32 0.0, %v1742
        %1744 = vmatmul.f32.gmra.mxu0 %v1720
        %v1745 = vpop.f32.mrf.mxu0
        %v1746 = vadd.f32 0.0, %v1745
        %1747 = vmatmul.f32.gmra.mxu0 %v1723
        %v1748 = vpop.f32.mrf.mxu0
        %v1749 = vadd.f32 0.0, %v1748
        %1750 = vdwg.mxu0
        %v1751 = vmax.f32 %v1705, %v1743
        %v1752 = vmax.f32 %v1708, %v1746
        %v1753 = vmax.f32 %v1711, %v1749
        %1754 = vst [vmem:[#allocation2] sm:$0xff] %v1751
        %1755 = vst [vmem:[#allocation2 + $0x8] sm:$0xff] %v1752
        %1756 = vst [vmem:[#allocation2 + $0x10] sm:$0xff] %v1753
        %v1757 = vld [vmem:[#allocation2] sm:$0xff]
        %v1758 = vld [vmem:[#allocation2 + $0x8] sm:$0xff]
        %v1759 = vld [vmem:[#allocation4] sm:$0xff]
        %v1760 = vld [vmem:[#allocation4 + $0x8] sm:$0xff]
        %v1761 = vld [vmem:[#allocation4 + $0x10] sm:$0xff]
        %v1762 = vld [vmem:[#allocation4 + $0x18] sm:$0xff]
        %v1763 = vld [vmem:[#allocation4 + $0x20] sm:$0xff]
        %v1764 = vld [vmem:[#allocation4 + $0x28] sm:$0xff]
        %v1765 = vld [vmem:[#allocation4 + $0x30] sm:$0xff]
        %v1766 = vld [vmem:[#allocation4 + $0x38] sm:$0xff]
        %v1767 = vld [vmem:[#allocation4 + $0x40] sm:$0xff]
        %v1768 = vld [vmem:[#allocation4 + $0x48] sm:$0xff]
        %v1769 = vld [vmem:[#allocation4 + $0x50] sm:$0xff]
        %v1770 = vld [vmem:[#allocation4 + $0x58] sm:$0xff]
        %v1771 = vld [vmem:[#allocation4 + $0x60] sm:$0xff]
        %v1772 = vld [vmem:[#allocation4 + $0x68] sm:$0xff]
        %v1773 = vld [vmem:[#allocation4 + $0x70] sm:$0xff]
        %v1774 = vld [vmem:[#allocation4 + $0x78] sm:$0xff]
        %v1775 = vld [vmem:[#allocation4 + $0x80] sm:$0xff]
        %v1776 = vld [vmem:[#allocation4 + $0x88] sm:$0xff]
        %v1777 = vld [vmem:[#allocation4 + $0x90] sm:$0xff]
        %v1778 = vld [vmem:[#allocation4 + $0x98] sm:$0xff]
        %v1779 = vld [vmem:[#allocation4 + $0xa0] sm:$0xff]
        %v1780 = vld [vmem:[#allocation4 + $0xa8] sm:$0xff]
        %v1781 = vld [vmem:[#allocation4 + $0xb0] sm:$0xff]
        %v1782 = vld [vmem:[#allocation4 + $0xb8] sm:$0xff]
        %v1783 = vld [vmem:[#allocation4 + $0xc0] sm:$0xff]
        %v1784 = vld [vmem:[#allocation4 + $0xc8] sm:$0xff]
        %v1785 = vld [vmem:[#allocation4 + $0xd0] sm:$0xff]
        %v1786 = vld [vmem:[#allocation4 + $0xd8] sm:$0xff]
        %v1787 = vld [vmem:[#allocation4 + $0xe0] sm:$0xff]
        %v1788 = vld [vmem:[#allocation4 + $0xe8] sm:$0xff]
        %v1789 = vld [vmem:[#allocation4 + $0xf0] sm:$0xff]
        %v1790 = vld [vmem:[#allocation4 + $0xf8] sm:$0xff]
        %v1791 = vld [vmem:[#allocation2 + $0x1] sm:$0xff]
        %v1792 = vld [vmem:[#allocation2 + $0x9] sm:$0xff]
        %s1793 = scalar_lea.vmem [#allocation4], 256
        %v1794 = vld [vmem:[%s1793] sm:$0xff]
        %v1795 = vld [vmem:[%s1793 + $0x8] sm:$0xff]
        %v1796 = vld [vmem:[%s1793 + $0x10] sm:$0xff]
        %v1797 = vld [vmem:[%s1793 + $0x18] sm:$0xff]
        %v1798 = vld [vmem:[%s1793 + $0x20] sm:$0xff]
        %v1799 = vld [vmem:[%s1793 + $0x28] sm:$0xff]
        %v1800 = vld [vmem:[%s1793 + $0x30] sm:$0xff]
        %v1801 = vld [vmem:[%s1793 + $0x38] sm:$0xff]
        %v1802 = vld [vmem:[%s1793 + $0x40] sm:$0xff]
        %v1803 = vld [vmem:[%s1793 + $0x48] sm:$0xff]
        %v1804 = vld [vmem:[%s1793 + $0x50] sm:$0xff]
        %v1805 = vld [vmem:[%s1793 + $0x58] sm:$0xff]
        %v1806 = vld [vmem:[%s1793 + $0x60] sm:$0xff]
        %v1807 = vld [vmem:[%s1793 + $0x68] sm:$0xff]
        %v1808 = vld [vmem:[%s1793 + $0x70] sm:$0xff]
        %v1809 = vld [vmem:[%s1793 + $0x78] sm:$0xff]
        %v1810 = vld [vmem:[%s1793 + $0x80] sm:$0xff]
        %v1811 = vld [vmem:[%s1793 + $0x88] sm:$0xff]
        %v1812 = vld [vmem:[%s1793 + $0x90] sm:$0xff]
        %v1813 = vld [vmem:[%s1793 + $0x98] sm:$0xff]
        %v1814 = vld [vmem:[%s1793 + $0xa0] sm:$0xff]
        %v1815 = vld [vmem:[%s1793 + $0xa8] sm:$0xff]
        %v1816 = vld [vmem:[%s1793 + $0xb0] sm:$0xff]
        %v1817 = vld [vmem:[%s1793 + $0xb8] sm:$0xff]
        %v1818 = vld [vmem:[%s1793 + $0xc0] sm:$0xff]
        %v1819 = vld [vmem:[%s1793 + $0xc8] sm:$0xff]
        %v1820 = vld [vmem:[%s1793 + $0xd0] sm:$0xff]
        %v1821 = vld [vmem:[%s1793 + $0xd8] sm:$0xff]
        %v1822 = vld [vmem:[%s1793 + $0xe0] sm:$0xff]
        %v1823 = vld [vmem:[%s1793 + $0xe8] sm:$0xff]
        %v1824 = vld [vmem:[%s1793 + $0xf0] sm:$0xff]
        %v1825 = vld [vmem:[%s1793 + $0xf8] sm:$0xff]
        %1826 = vmatpush.msra.mxu0 %v1824
        %1827 = vmatpush.msra.mxu0 %v1822
        %1828 = vmatpush.msra.mxu0 %v1820
        %1829 = vmatpush.msra.mxu0 %v1818
        %1830 = vmatpush.msra.mxu0 %v1816
        %1831 = vmatpush.msra.mxu0 %v1814
        %1832 = vmatpush.msra.mxu0 %v1812
        %1833 = vmatpush.msra.mxu0 %v1810
        %1834 = vmatpush.msra.mxu0 %v1808
        %1835 = vmatpush.msra.mxu0 %v1806
        %1836 = vmatpush.msra.mxu0 %v1804
        %1837 = vmatpush.msra.mxu0 %v1802
        %1838 = vmatpush.msra.mxu0 %v1800
        %1839 = vmatpush.msra.mxu0 %v1798
        %1840 = vmatpush.msra.mxu0 %v1796
        %1841 = vmatpush.msra.mxu0 %v1794
        %1842 = vmatmul.f32.gmra.mxu0 %v1791
        %v1843 = vpop.f32.mrf.mxu0
        %v1844 = vadd.f32 0.0, %v1843
        %1845 = vmatmul.f32.gmra.mxu0 %v1792
        %v1846 = vpop.f32.mrf.mxu0
        %v1847 = vadd.f32 0.0, %v1846
        %1848 = vdwg.mxu0
        %1849 = vmatpush.msra.mxu0 %v1825
        %1850 = vmatpush.msra.mxu0 %v1823
        %1851 = vmatpush.msra.mxu0 %v1821
        %1852 = vmatpush.msra.mxu0 %v1819
        %1853 = vmatpush.msra.mxu0 %v1817
        %1854 = vmatpush.msra.mxu0 %v1815
        %1855 = vmatpush.msra.mxu0 %v1813
        %1856 = vmatpush.msra.mxu0 %v1811
        %1857 = vmatpush.msra.mxu0 %v1809
        %1858 = vmatpush.msra.mxu0 %v1807
        %1859 = vmatpush.msra.mxu0 %v1805
        %1860 = vmatpush.msra.mxu0 %v1803
        %1861 = vmatpush.msra.mxu0 %v1801
        %1862 = vmatpush.msra.mxu0 %v1799
        %1863 = vmatpush.msra.mxu0 %v1797
        %1864 = vmatpush.msra.mxu0 %v1795
        %1865 = vmatmul.f32.gmra.mxu0 %v1791
        %v1866 = vpop.f32.mrf.mxu0
        %v1867 = vadd.f32 0.0, %v1866
        %1868 = vmatmul.f32.gmra.mxu0 %v1792
        %v1869 = vpop.f32.mrf.mxu0
        %v1870 = vadd.f32 0.0, %v1869
        %1871 = vdwg.mxu0
        %1872 = vmatpush.msra.mxu0 %v1789
        %1873 = vmatpush.msra.mxu0 %v1787
        %1874 = vmatpush.msra.mxu0 %v1785
        %1875 = vmatpush.msra.mxu0 %v1783
        %1876 = vmatpush.msra.mxu0 %v1781
        %1877 = vmatpush.msra.mxu0 %v1779
        %1878 = vmatpush.msra.mxu0 %v1777
        %1879 = vmatpush.msra.mxu0 %v1775
        %1880 = vmatpush.msra.mxu0 %v1773
        %1881 = vmatpush.msra.mxu0 %v1771
        %1882 = vmatpush.msra.mxu0 %v1769
        %1883 = vmatpush.msra.mxu0 %v1767
        %1884 = vmatpush.msra.mxu0 %v1765
        %1885 = vmatpush.msra.mxu0 %v1763
        %1886 = vmatpush.msra.mxu0 %v1761
        %1887 = vmatpush.msra.mxu0 %v1759
        %1888 = vmatmul.f32.gmra.mxu0 %v1757
        %v1889 = vpop.f32.mrf.mxu0
        %v1890 = vadd.f32 %v1844, %v1889
        %1891 = vmatmul.f32.gmra.mxu0 %v1758
        %v1892 = vpop.f32.mrf.mxu0
        %v1893 = vadd.f32 %v1847, %v1892
        %1894 = vdwg.mxu0
        %1895 = vmatpush.msra.mxu0 %v1790
        %1896 = vmatpush.msra.mxu0 %v1788
        %1897 = vmatpush.msra.mxu0 %v1786
        %1898 = vmatpush.msra.mxu0 %v1784
        %1899 = vmatpush.msra.mxu0 %v1782
        %1900 = vmatpush.msra.mxu0 %v1780
        %1901 = vmatpush.msra.mxu0 %v1778
        %1902 = vmatpush.msra.mxu0 %v1776
        %1903 = vmatpush.msra.mxu0 %v1774
        %1904 = vmatpush.msra.mxu0 %v1772
        %1905 = vmatpush.msra.mxu0 %v1770
        %1906 = vmatpush.msra.mxu0 %v1768
        %1907 = vmatpush.msra.mxu0 %v1766
        %1908 = vmatpush.msra.mxu0 %v1764
        %1909 = vmatpush.msra.mxu0 %v1762
        %1910 = vmatpush.msra.mxu0 %v1760
        %1911 = vmatmul.f32.gmra.mxu0 %v1757
        %v1912 = vpop.f32.mrf.mxu0
        %v1913 = vadd.f32 %v1867, %v1912
        %1914 = vmatmul.f32.gmra.mxu0 %v1758
        %v1915 = vpop.f32.mrf.mxu0
        %v1916 = vadd.f32 %v1870, %v1915
        %1917 = vdwg.mxu0
        %v1918 = vld [vmem:[#allocation2 + $0x2] sm:$0xff]
        %v1919 = vld [vmem:[#allocation2 + $0xa] sm:$0xff]
        %s1920 = scalar_lea.vmem [#allocation4], 512
        %v1921 = vld [vmem:[%s1920] sm:$0xff]
        %v1922 = vld [vmem:[%s1920 + $0x8] sm:$0xff]
        %v1923 = vld [vmem:[%s1920 + $0x10] sm:$0xff]
        %v1924 = vld [vmem:[%s1920 + $0x18] sm:$0xff]
        %v1925 = vld [vmem:[%s1920 + $0x20] sm:$0xff]
        %v1926 = vld [vmem:[%s1920 + $0x28] sm:$0xff]
        %v1927 = vld [vmem:[%s1920 + $0x30] sm:$0xff]
        %v1928 = vld [vmem:[%s1920 + $0x38] sm:$0xff]
        %v1929 = vld [vmem:[%s1920 + $0x40] sm:$0xff]
        %v1930 = vld [vmem:[%s1920 + $0x48] sm:$0xff]
        %v1931 = vld [vmem:[%s1920 + $0x50] sm:$0xff]
        %v1932 = vld [vmem:[%s1920 + $0x58] sm:$0xff]
        %v1933 = vld [vmem:[%s1920 + $0x60] sm:$0xff]
        %v1934 = vld [vmem:[%s1920 + $0x68] sm:$0xff]
        %v1935 = vld [vmem:[%s1920 + $0x70] sm:$0xff]
        %v1936 = vld [vmem:[%s1920 + $0x78] sm:$0xff]
        %v1937 = vld [vmem:[%s1920 + $0x80] sm:$0xff]
        %v1938 = vld [vmem:[%s1920 + $0x88] sm:$0xff]
        %v1939 = vld [vmem:[%s1920 + $0x90] sm:$0xff]
        %v1940 = vld [vmem:[%s1920 + $0x98] sm:$0xff]
        %v1941 = vld [vmem:[%s1920 + $0xa0] sm:$0xff]
        %v1942 = vld [vmem:[%s1920 + $0xa8] sm:$0xff]
        %v1943 = vld [vmem:[%s1920 + $0xb0] sm:$0xff]
        %v1944 = vld [vmem:[%s1920 + $0xb8] sm:$0xff]
        %v1945 = vld [vmem:[%s1920 + $0xc0] sm:$0xff]
        %v1946 = vld [vmem:[%s1920 + $0xc8] sm:$0xff]
        %v1947 = vld [vmem:[%s1920 + $0xd0] sm:$0xff]
        %v1948 = vld [vmem:[%s1920 + $0xd8] sm:$0xff]
        %v1949 = vld [vmem:[%s1920 + $0xe0] sm:$0xff]
        %v1950 = vld [vmem:[%s1920 + $0xe8] sm:$0xff]
        %v1951 = vld [vmem:[%s1920 + $0xf0] sm:$0xff]
        %v1952 = vld [vmem:[%s1920 + $0xf8] sm:$0xff]
        %1953 = vmatpush.msra.mxu0 %v1951
        %1954 = vmatpush.msra.mxu0 %v1949
        %1955 = vmatpush.msra.mxu0 %v1947
        %1956 = vmatpush.msra.mxu0 %v1945
        %1957 = vmatpush.msra.mxu0 %v1943
        %1958 = vmatpush.msra.mxu0 %v1941
        %1959 = vmatpush.msra.mxu0 %v1939
        %1960 = vmatpush.msra.mxu0 %v1937
        %1961 = vmatpush.msra.mxu0 %v1935
        %1962 = vmatpush.msra.mxu0 %v1933
        %1963 = vmatpush.msra.mxu0 %v1931
        %1964 = vmatpush.msra.mxu0 %v1929
        %1965 = vmatpush.msra.mxu0 %v1927
        %1966 = vmatpush.msra.mxu0 %v1925
        %1967 = vmatpush.msra.mxu0 %v1923
        %1968 = vmatpush.msra.mxu0 %v1921
        %1969 = vmatmul.f32.gmra.mxu0 %v1918
        %v1970 = vpop.f32.mrf.mxu0
        %v1971 = vadd.f32 0.0, %v1970
        %1972 = vmatmul.f32.gmra.mxu0 %v1919
        %v1973 = vpop.f32.mrf.mxu0
        %v1974 = vadd.f32 0.0, %v1973
        %1975 = vdwg.mxu0
        %1976 = vmatpush.msra.mxu0 %v1952
        %1977 = vmatpush.msra.mxu0 %v1950
        %1978 = vmatpush.msra.mxu0 %v1948
        %1979 = vmatpush.msra.mxu0 %v1946
        %1980 = vmatpush.msra.mxu0 %v1944
        %1981 = vmatpush.msra.mxu0 %v1942
        %1982 = vmatpush.msra.mxu0 %v1940
        %1983 = vmatpush.msra.mxu0 %v1938
        %1984 = vmatpush.msra.mxu0 %v1936
        %1985 = vmatpush.msra.mxu0 %v1934
        %1986 = vmatpush.msra.mxu0 %v1932
        %1987 = vmatpush.msra.mxu0 %v1930
        %1988 = vmatpush.msra.mxu0 %v1928
        %1989 = vmatpush.msra.mxu0 %v1926
        %1990 = vmatpush.msra.mxu0 %v1924
        %1991 = vmatpush.msra.mxu0 %v1922
        %1992 = vmatmul.f32.gmra.mxu0 %v1918
        %v1993 = vpop.f32.mrf.mxu0
        %v1994 = vadd.f32 0.0, %v1993
        %1995 = vmatmul.f32.gmra.mxu0 %v1919
        %v1996 = vpop.f32.mrf.mxu0
        %v1997 = vadd.f32 0.0, %v1996
        %1998 = vdwg.mxu0
        %v1999 = vadd.f32 %v1890, %v1971
        %v2000 = vadd.f32 %v1913, %v1994
        %v2001 = vadd.f32 %v1893, %v1974
        %v2002 = vadd.f32 %v1916, %v1997
        %v2003 = vld [vmem:[#allocation2 + $0x3] sm:$0xff]
        %v2004 = vld [vmem:[#allocation2 + $0xb] sm:$0xff]
        %s2005 = scalar_lea.vmem [#allocation4], 768
        %v2006 = vld [vmem:[%s2005] sm:$0xff]
        %v2007 = vld [vmem:[%s2005 + $0x8] sm:$0xff]
        %v2008 = vld [vmem:[%s2005 + $0x10] sm:$0xff]
        %v2009 = vld [vmem:[%s2005 + $0x18] sm:$0xff]
        %v2010 = vld [vmem:[%s2005 + $0x20] sm:$0xff]
        %v2011 = vld [vmem:[%s2005 + $0x28] sm:$0xff]
        %v2012 = vld [vmem:[%s2005 + $0x30] sm:$0xff]
        %v2013 = vld [vmem:[%s2005 + $0x38] sm:$0xff]
        %v2014 = vld [vmem:[%s2005 + $0x40] sm:$0xff]
        %v2015 = vld [vmem:[%s2005 + $0x48] sm:$0xff]
        %v2016 = vld [vmem:[%s2005 + $0x50] sm:$0xff]
        %v2017 = vld [vmem:[%s2005 + $0x58] sm:$0xff]
        %v2018 = vld [vmem:[%s2005 + $0x60] sm:$0xff]
        %v2019 = vld [vmem:[%s2005 + $0x68] sm:$0xff]
        %v2020 = vld [vmem:[%s2005 + $0x70] sm:$0xff]
        %v2021 = vld [vmem:[%s2005 + $0x78] sm:$0xff]
        %v2022 = vld [vmem:[%s2005 + $0x80] sm:$0xff]
        %v2023 = vld [vmem:[%s2005 + $0x88] sm:$0xff]
        %v2024 = vld [vmem:[%s2005 + $0x90] sm:$0xff]
        %v2025 = vld [vmem:[%s2005 + $0x98] sm:$0xff]
        %v2026 = vld [vmem:[%s2005 + $0xa0] sm:$0xff]
        %v2027 = vld [vmem:[%s2005 + $0xa8] sm:$0xff]
        %v2028 = vld [vmem:[%s2005 + $0xb0] sm:$0xff]
        %v2029 = vld [vmem:[%s2005 + $0xb8] sm:$0xff]
        %v2030 = vld [vmem:[%s2005 + $0xc0] sm:$0xff]
        %v2031 = vld [vmem:[%s2005 + $0xc8] sm:$0xff]
        %v2032 = vld [vmem:[%s2005 + $0xd0] sm:$0xff]
        %v2033 = vld [vmem:[%s2005 + $0xd8] sm:$0xff]
        %v2034 = vld [vmem:[%s2005 + $0xe0] sm:$0xff]
        %v2035 = vld [vmem:[%s2005 + $0xe8] sm:$0xff]
        %v2036 = vld [vmem:[%s2005 + $0xf0] sm:$0xff]
        %v2037 = vld [vmem:[%s2005 + $0xf8] sm:$0xff]
        %2038 = vmatpush.msra.mxu0 %v2036
        %2039 = vmatpush.msra.mxu0 %v2034
        %2040 = vmatpush.msra.mxu0 %v2032
        %2041 = vmatpush.msra.mxu0 %v2030
        %2042 = vmatpush.msra.mxu0 %v2028
        %2043 = vmatpush.msra.mxu0 %v2026
        %2044 = vmatpush.msra.mxu0 %v2024
        %2045 = vmatpush.msra.mxu0 %v2022
        %2046 = vmatpush.msra.mxu0 %v2020
        %2047 = vmatpush.msra.mxu0 %v2018
        %2048 = vmatpush.msra.mxu0 %v2016
        %2049 = vmatpush.msra.mxu0 %v2014
        %2050 = vmatpush.msra.mxu0 %v2012
        %2051 = vmatpush.msra.mxu0 %v2010
        %2052 = vmatpush.msra.mxu0 %v2008
        %2053 = vmatpush.msra.mxu0 %v2006
        %2054 = vmatmul.f32.gmra.mxu0 %v2003
        %v2055 = vpop.f32.mrf.mxu0
        %v2056 = vadd.f32 0.0, %v2055
        %2057 = vmatmul.f32.gmra.mxu0 %v2004
        %v2058 = vpop.f32.mrf.mxu0
        %v2059 = vadd.f32 0.0, %v2058
        %2060 = vdwg.mxu0
        %2061 = vmatpush.msra.mxu0 %v2037
        %2062 = vmatpush.msra.mxu0 %v2035
        %2063 = vmatpush.msra.mxu0 %v2033
        %2064 = vmatpush.msra.mxu0 %v2031
        %2065 = vmatpush.msra.mxu0 %v2029
        %2066 = vmatpush.msra.mxu0 %v2027
        %2067 = vmatpush.msra.mxu0 %v2025
        %2068 = vmatpush.msra.mxu0 %v2023
        %2069 = vmatpush.msra.mxu0 %v2021
        %2070 = vmatpush.msra.mxu0 %v2019
        %2071 = vmatpush.msra.mxu0 %v2017
        %2072 = vmatpush.msra.mxu0 %v2015
        %2073 = vmatpush.msra.mxu0 %v2013
        %2074 = vmatpush.msra.mxu0 %v2011
        %2075 = vmatpush.msra.mxu0 %v2009
        %2076 = vmatpush.msra.mxu0 %v2007
        %2077 = vmatmul.f32.gmra.mxu0 %v2003
        %v2078 = vpop.f32.mrf.mxu0
        %v2079 = vadd.f32 0.0, %v2078
        %2080 = vmatmul.f32.gmra.mxu0 %v2004
        %v2081 = vpop.f32.mrf.mxu0
        %v2082 = vadd.f32 0.0, %v2081
        %2083 = vdwg.mxu0
        %v2084 = vadd.f32 %v1999, %v2056
        %v2085 = vadd.f32 %v2000, %v2079
        %v2086 = vadd.f32 %v2001, %v2059
        %v2087 = vadd.f32 %v2002, %v2082
        %v2088 = vld [vmem:[#allocation2 + $0x4] sm:$0xff]
        %v2089 = vld [vmem:[#allocation2 + $0xc] sm:$0xff]
        %s2090 = scalar_lea.vmem [#allocation4], 1024
        %v2091 = vld [vmem:[%s2090] sm:$0xff]
        %v2092 = vld [vmem:[%s2090 + $0x8] sm:$0xff]
        %v2093 = vld [vmem:[%s2090 + $0x10] sm:$0xff]
        %v2094 = vld [vmem:[%s2090 + $0x18] sm:$0xff]
        %v2095 = vld [vmem:[%s2090 + $0x20] sm:$0xff]
        %v2096 = vld [vmem:[%s2090 + $0x28] sm:$0xff]
        %v2097 = vld [vmem:[%s2090 + $0x30] sm:$0xff]
        %v2098 = vld [vmem:[%s2090 + $0x38] sm:$0xff]
        %v2099 = vld [vmem:[%s2090 + $0x40] sm:$0xff]
        %v2100 = vld [vmem:[%s2090 + $0x48] sm:$0xff]
        %v2101 = vld [vmem:[%s2090 + $0x50] sm:$0xff]
        %v2102 = vld [vmem:[%s2090 + $0x58] sm:$0xff]
        %v2103 = vld [vmem:[%s2090 + $0x60] sm:$0xff]
        %v2104 = vld [vmem:[%s2090 + $0x68] sm:$0xff]
        %v2105 = vld [vmem:[%s2090 + $0x70] sm:$0xff]
        %v2106 = vld [vmem:[%s2090 + $0x78] sm:$0xff]
        %v2107 = vld [vmem:[%s2090 + $0x80] sm:$0xff]
        %v2108 = vld [vmem:[%s2090 + $0x88] sm:$0xff]
        %v2109 = vld [vmem:[%s2090 + $0x90] sm:$0xff]
        %v2110 = vld [vmem:[%s2090 + $0x98] sm:$0xff]
        %v2111 = vld [vmem:[%s2090 + $0xa0] sm:$0xff]
        %v2112 = vld [vmem:[%s2090 + $0xa8] sm:$0xff]
        %v2113 = vld [vmem:[%s2090 + $0xb0] sm:$0xff]
        %v2114 = vld [vmem:[%s2090 + $0xb8] sm:$0xff]
        %v2115 = vld [vmem:[%s2090 + $0xc0] sm:$0xff]
        %v2116 = vld [vmem:[%s2090 + $0xc8] sm:$0xff]
        %v2117 = vld [vmem:[%s2090 + $0xd0] sm:$0xff]
        %v2118 = vld [vmem:[%s2090 + $0xd8] sm:$0xff]
        %v2119 = vld [vmem:[%s2090 + $0xe0] sm:$0xff]
        %v2120 = vld [vmem:[%s2090 + $0xe8] sm:$0xff]
        %v2121 = vld [vmem:[%s2090 + $0xf0] sm:$0xff]
        %v2122 = vld [vmem:[%s2090 + $0xf8] sm:$0xff]
        %2123 = vmatpush.msra.mxu0 %v2121
        %2124 = vmatpush.msra.mxu0 %v2119
        %2125 = vmatpush.msra.mxu0 %v2117
        %2126 = vmatpush.msra.mxu0 %v2115
        %2127 = vmatpush.msra.mxu0 %v2113
        %2128 = vmatpush.msra.mxu0 %v2111
        %2129 = vmatpush.msra.mxu0 %v2109
        %2130 = vmatpush.msra.mxu0 %v2107
        %2131 = vmatpush.msra.mxu0 %v2105
        %2132 = vmatpush.msra.mxu0 %v2103
        %2133 = vmatpush.msra.mxu0 %v2101
        %2134 = vmatpush.msra.mxu0 %v2099
        %2135 = vmatpush.msra.mxu0 %v2097
        %2136 = vmatpush.msra.mxu0 %v2095
        %2137 = vmatpush.msra.mxu0 %v2093
        %2138 = vmatpush.msra.mxu0 %v2091
        %2139 = vmatmul.f32.gmra.mxu0 %v2088
        %v2140 = vpop.f32.mrf.mxu0
        %v2141 = vadd.f32 0.0, %v2140
        %2142 = vmatmul.f32.gmra.mxu0 %v2089
        %v2143 = vpop.f32.mrf.mxu0
        %v2144 = vadd.f32 0.0, %v2143
        %2145 = vdwg.mxu0
        %2146 = vmatpush.msra.mxu0 %v2122
        %2147 = vmatpush.msra.mxu0 %v2120
        %2148 = vmatpush.msra.mxu0 %v2118
        %2149 = vmatpush.msra.mxu0 %v2116
        %2150 = vmatpush.msra.mxu0 %v2114
        %2151 = vmatpush.msra.mxu0 %v2112
        %2152 = vmatpush.msra.mxu0 %v2110
        %2153 = vmatpush.msra.mxu0 %v2108
        %2154 = vmatpush.msra.mxu0 %v2106
        %2155 = vmatpush.msra.mxu0 %v2104
        %2156 = vmatpush.msra.mxu0 %v2102
        %2157 = vmatpush.msra.mxu0 %v2100
        %2158 = vmatpush.msra.mxu0 %v2098
        %2159 = vmatpush.msra.mxu0 %v2096
        %2160 = vmatpush.msra.mxu0 %v2094
        %2161 = vmatpush.msra.mxu0 %v2092
        %2162 = vmatmul.f32.gmra.mxu0 %v2088
        %v2163 = vpop.f32.mrf.mxu0
        %v2164 = vadd.f32 0.0, %v2163
        %2165 = vmatmul.f32.gmra.mxu0 %v2089
        %v2166 = vpop.f32.mrf.mxu0
        %v2167 = vadd.f32 0.0, %v2166
        %2168 = vdwg.mxu0
        %v2169 = vadd.f32 %v2084, %v2141
        %v2170 = vadd.f32 %v2085, %v2164
        %v2171 = vadd.f32 %v2086, %v2144
        %v2172 = vadd.f32 %v2087, %v2167
        %v2173 = vld [vmem:[%s6] sm:$0x3]
        %v2175 = vperm.slane %v2173, 0
        %v2176 = vperm.slane %v2173, 1
        %v2179 = vadd.f32 %v2169, %v2175
        %v2180 = vadd.f32 %v2170, %v2176
        %v2181 = vadd.f32 %v2171, %v2175
        %v2182 = vadd.f32 %v2172, %v2176
        %v2183 = vmax.f32 %v2179, 0.0
        %v2184 = vmax.f32 %v2180, 0.0
        %v2185 = vmax.f32 %v2181, 0.0
        %v2186 = vmax.f32 %v2182, 0.0
        %v2187 = vmax.f32 %v2183, %v2184
        %v2188 = vmax.f32 %v2185, %v2186
        %v2189 = vld [vmem:[%s7] sm:$0xff]
        %vm2190 = vcmask 130048
        %v2192 = vsel %vm2190, %v2189, 0
        %2194 = vmatpush.msra.mxu0 0.0
        %2195 = vmatpush.msra.mxu0 0.0
        %2196 = vmatpush.msra.mxu0 0.0
        %2197 = vmatpush.msra.mxu0 0.0
        %2198 = vmatpush.msra.mxu0 0.0
        %2199 = vmatpush.msra.mxu0 0.0
        %2200 = vmatpush.msra.mxu0 0.0
        %2201 = vmatpush.msra.mxu0 0.0
        %2202 = vmatpush.msra.mxu0 0.0
        %2203 = vmatpush.msra.mxu0 0.0
        %2204 = vmatpush.msra.mxu0 0.0
        %2205 = vmatpush.msra.mxu0 0.0
        %2206 = vmatpush.msra.mxu0 0.0
        %2207 = vmatpush.msra.mxu0 0.0
        %2208 = vmatpush.msra.mxu0 %v2188
        %2209 = vmatpush.msra.mxu0 %v2187
        %2210 = vmatmul.f32.gmra.mxu0 %v2192
        %v2211 = vpop.f32.mrf.mxu0
        %v2212 = vadd.f32 0.0, %v2211
        %2213 = vdwg.mxu0
        %v2214 = vld [vmem:[%s8] sm:$0xff]
        %v2216 = vsel %vm2190, %v2214, 0
        %2218 = vmatpush.msra.mxu0 0.0
        %2219 = vmatpush.msra.mxu0 0.0
        %2220 = vmatpush.msra.mxu0 0.0
        %2221 = vmatpush.msra.mxu0 0.0
        %2222 = vmatpush.msra.mxu0 0.0
        %2223 = vmatpush.msra.mxu0 0.0
        %2224 = vmatpush.msra.mxu0 0.0
        %2225 = vmatpush.msra.mxu0 0.0
        %2226 = vmatpush.msra.mxu0 0.0
        %2227 = vmatpush.msra.mxu0 0.0
        %2228 = vmatpush.msra.mxu0 0.0
        %2229 = vmatpush.msra.mxu0 0.0
        %2230 = vmatpush.msra.mxu0 0.0
        %2231 = vmatpush.msra.mxu0 0.0
        %2232 = vmatpush.msra.mxu0 %v2188
        %2233 = vmatpush.msra.mxu0 %v2187
        %2234 = vmatmul.f32.gmra.mxu0 %v2216
        %v2235 = vpop.f32.mrf.mxu0
        %v2236 = vadd.f32 0.0, %v2235
        %2237 = vdwg.mxu0
        %v2238 = vmax.f32 %v2212, %v2236
        %2239 = vst [vmem:[#allocation3] sm:$0xff] %v2238
        %v2240 = vld [vmem:[#allocation3] sm:$0x1]
        %v2241 = vld [vmem:[#allocation6] sm:$0xff]
        %v2242 = vld [vmem:[#allocation6 + $0x8] sm:$0xff]
        %v2243 = vld [vmem:[#allocation6 + $0x10] sm:$0xff]
        %v2244 = vld [vmem:[#allocation6 + $0x18] sm:$0xff]
        %v2245 = vld [vmem:[#allocation6 + $0x20] sm:$0xff]
        %v2246 = vld [vmem:[#allocation6 + $0x28] sm:$0xff]
        %v2247 = vld [vmem:[#allocation6 + $0x30] sm:$0xff]
        %v2248 = vld [vmem:[#allocation6 + $0x38] sm:$0xff]
        %v2249 = vld [vmem:[#allocation6 + $0x40] sm:$0xff]
        %v2250 = vld [vmem:[#allocation6 + $0x48] sm:$0xff]
        %v2251 = vld [vmem:[#allocation6 + $0x50] sm:$0xff]
        %v2252 = vld [vmem:[#allocation6 + $0x58] sm:$0xff]
        %v2253 = vld [vmem:[#allocation6 + $0x60] sm:$0xff]
        %v2254 = vld [vmem:[#allocation6 + $0x68] sm:$0xff]
        %v2255 = vld [vmem:[#allocation6 + $0x70] sm:$0xff]
        %v2256 = vld [vmem:[#allocation6 + $0x78] sm:$0xff]
        %v2257 = vld [vmem:[#allocation3 + $0x1] sm:$0x1]
        %s2258 = scalar_lea.vmem [#allocation6], 128
        %v2259 = vld [vmem:[%s2258] sm:$0xff]
        %v2260 = vld [vmem:[%s2258 + $0x8] sm:$0xff]
        %v2261 = vld [vmem:[%s2258 + $0x10] sm:$0xff]
        %v2262 = vld [vmem:[%s2258 + $0x18] sm:$0xff]
        %v2263 = vld [vmem:[%s2258 + $0x20] sm:$0xff]
        %v2264 = vld [vmem:[%s2258 + $0x28] sm:$0xff]
        %v2265 = vld [vmem:[%s2258 + $0x30] sm:$0xff]
        %v2266 = vld [vmem:[%s2258 + $0x38] sm:$0xff]
        %v2267 = vld [vmem:[%s2258 + $0x40] sm:$0xff]
        %v2268 = vld [vmem:[%s2258 + $0x48] sm:$0xff]
        %v2269 = vld [vmem:[%s2258 + $0x50] sm:$0xff]
        %v2270 = vld [vmem:[%s2258 + $0x58] sm:$0xff]
        %v2271 = vld [vmem:[%s2258 + $0x60] sm:$0xff]
        %v2272 = vld [vmem:[%s2258 + $0x68] sm:$0xff]
        %v2273 = vld [vmem:[%s2258 + $0x70] sm:$0xff]
        %v2274 = vld [vmem:[%s2258 + $0x78] sm:$0xff]
        %2275 = vmatpush.msra.mxu0 %v2274
        %2276 = vmatpush.msra.mxu0 %v2273
        %2277 = vmatpush.msra.mxu0 %v2272
        %2278 = vmatpush.msra.mxu0 %v2271
        %2279 = vmatpush.msra.mxu0 %v2270
        %2280 = vmatpush.msra.mxu0 %v2269
        %2281 = vmatpush.msra.mxu0 %v2268
        %2282 = vmatpush.msra.mxu0 %v2267
        %2283 = vmatpush.msra.mxu0 %v2266
        %2284 = vmatpush.msra.mxu0 %v2265
        %2285 = vmatpush.msra.mxu0 %v2264
        %2286 = vmatpush.msra.mxu0 %v2263
        %2287 = vmatpush.msra.mxu0 %v2262
        %2288 = vmatpush.msra.mxu0 %v2261
        %2289 = vmatpush.msra.mxu0 %v2260
        %2290 = vmatpush.msra.mxu0 %v2259
        %2291 = vmatmul.f32.gmra.mxu0 %v2257
        %v2292 = vpop.f32.mrf.mxu0
        %v2293 = vadd.f32 0.0, %v2292
        %2294 = vdwg.mxu0
        %2295 = vmatpush.msra.mxu0 %v2256
        %2296 = vmatpush.msra.mxu0 %v2255
        %2297 = vmatpush.msra.mxu0 %v2254
        %2298 = vmatpush.msra.mxu0 %v2253
        %2299 = vmatpush.msra.mxu0 %v2252
        %2300 = vmatpush.msra.mxu0 %v2251
        %2301 = vmatpush.msra.mxu0 %v2250
        %2302 = vmatpush.msra.mxu0 %v2249
        %2303 = vmatpush.msra.mxu0 %v2248
        %2304 = vmatpush.msra.mxu0 %v2247
        %2305 = vmatpush.msra.mxu0 %v2246
        %2306 = vmatpush.msra.mxu0 %v2245
        %2307 = vmatpush.msra.mxu0 %v2244
        %2308 = vmatpush.msra.mxu0 %v2243
        %2309 = vmatpush.msra.mxu0 %v2242
        %2310 = vmatpush.msra.mxu0 %v2241
        %2311 = vmatmul.f32.gmra.mxu0 %v2240
        %v2312 = vpop.f32.mrf.mxu0
        %v2313 = vadd.f32 %v2293, %v2312
        %2314 = vdwg.mxu0
        %v2315 = vld [vmem:[#allocation3 + $0x2] sm:$0x1]
        %s2316 = scalar_lea.vmem [#allocation6], 256
        %v2317 = vld [vmem:[%s2316] sm:$0xff]
        %v2318 = vld [vmem:[%s2316 + $0x8] sm:$0xff]
        %v2319 = vld [vmem:[%s2316 + $0x10] sm:$0xff]
        %v2320 = vld [vmem:[%s2316 + $0x18] sm:$0xff]
        %v2321 = vld [vmem:[%s2316 + $0x20] sm:$0xff]
        %v2322 = vld [vmem:[%s2316 + $0x28] sm:$0xff]
        %v2323 = vld [vmem:[%s2316 + $0x30] sm:$0xff]
        %v2324 = vld [vmem:[%s2316 + $0x38] sm:$0xff]
        %v2325 = vld [vmem:[%s2316 + $0x40] sm:$0xff]
        %v2326 = vld [vmem:[%s2316 + $0x48] sm:$0xff]
        %v2327 = vld [vmem:[%s2316 + $0x50] sm:$0xff]
        %v2328 = vld [vmem:[%s2316 + $0x58] sm:$0xff]
        %v2329 = vld [vmem:[%s2316 + $0x60] sm:$0xff]
        %v2330 = vld [vmem:[%s2316 + $0x68] sm:$0xff]
        %v2331 = vld [vmem:[%s2316 + $0x70] sm:$0xff]
        %v2332 = vld [vmem:[%s2316 + $0x78] sm:$0xff]
        %2333 = vmatpush.msra.mxu0 %v2332
        %2334 = vmatpush.msra.mxu0 %v2331
        %2335 = vmatpush.msra.mxu0 %v2330
        %2336 = vmatpush.msra.mxu0 %v2329
        %2337 = vmatpush.msra.mxu0 %v2328
        %2338 = vmatpush.msra.mxu0 %v2327
        %2339 = vmatpush.msra.mxu0 %v2326
        %2340 = vmatpush.msra.mxu0 %v2325
        %2341 = vmatpush.msra.mxu0 %v2324
        %2342 = vmatpush.msra.mxu0 %v2323
        %2343 = vmatpush.msra.mxu0 %v2322
        %2344 = vmatpush.msra.mxu0 %v2321
        %2345 = vmatpush.msra.mxu0 %v2320
        %2346 = vmatpush.msra.mxu0 %v2319
        %2347 = vmatpush.msra.mxu0 %v2318
        %2348 = vmatpush.msra.mxu0 %v2317
        %2349 = vmatmul.f32.gmra.mxu0 %v2315
        %v2350 = vpop.f32.mrf.mxu0
        %v2351 = vadd.f32 0.0, %v2350
        %2352 = vdwg.mxu0
        %v2353 = vadd.f32 %v2313, %v2351
        %v2354 = vld [vmem:[#allocation3 + $0x3] sm:$0x1]
        %s2355 = scalar_lea.vmem [#allocation6], 384
        %v2356 = vld [vmem:[%s2355] sm:$0xff]
        %v2357 = vld [vmem:[%s2355 + $0x8] sm:$0xff]
        %v2358 = vld [vmem:[%s2355 + $0x10] sm:$0xff]
        %v2359 = vld [vmem:[%s2355 + $0x18] sm:$0xff]
        %v2360 = vld [vmem:[%s2355 + $0x20] sm:$0xff]
        %v2361 = vld [vmem:[%s2355 + $0x28] sm:$0xff]
        %v2362 = vld [vmem:[%s2355 + $0x30] sm:$0xff]
        %v2363 = vld [vmem:[%s2355 + $0x38] sm:$0xff]
        %v2364 = vld [vmem:[%s2355 + $0x40] sm:$0xff]
        %v2365 = vld [vmem:[%s2355 + $0x48] sm:$0xff]
        %v2366 = vld [vmem:[%s2355 + $0x50] sm:$0xff]
        %v2367 = vld [vmem:[%s2355 + $0x58] sm:$0xff]
        %v2368 = vld [vmem:[%s2355 + $0x60] sm:$0xff]
        %v2369 = vld [vmem:[%s2355 + $0x68] sm:$0xff]
        %v2370 = vld [vmem:[%s2355 + $0x70] sm:$0xff]
        %v2371 = vld [vmem:[%s2355 + $0x78] sm:$0xff]
        %2372 = vmatpush.msra.mxu0 %v2371
        %2373 = vmatpush.msra.mxu0 %v2370
        %2374 = vmatpush.msra.mxu0 %v2369
        %2375 = vmatpush.msra.mxu0 %v2368
        %2376 = vmatpush.msra.mxu0 %v2367
        %2377 = vmatpush.msra.mxu0 %v2366
        %2378 = vmatpush.msra.mxu0 %v2365
        %2379 = vmatpush.msra.mxu0 %v2364
        %2380 = vmatpush.msra.mxu0 %v2363
        %2381 = vmatpush.msra.mxu0 %v2362
        %2382 = vmatpush.msra.mxu0 %v2361
        %2383 = vmatpush.msra.mxu0 %v2360
        %2384 = vmatpush.msra.mxu0 %v2359
        %2385 = vmatpush.msra.mxu0 %v2358
        %2386 = vmatpush.msra.mxu0 %v2357
        %2387 = vmatpush.msra.mxu0 %v2356
        %2388 = vmatmul.f32.gmra.mxu0 %v2354
        %v2389 = vpop.f32.mrf.mxu0
        %v2390 = vadd.f32 0.0, %v2389
        %2391 = vdwg.mxu0
        %v2392 = vadd.f32 %v2353, %v2390
        %v2393 = vld [vmem:[#allocation3 + $0x4] sm:$0x1]
        %s2394 = scalar_lea.vmem [#allocation6], 512
        %v2395 = vld [vmem:[%s2394] sm:$0xff]
        %v2396 = vld [vmem:[%s2394 + $0x8] sm:$0xff]
        %v2397 = vld [vmem:[%s2394 + $0x10] sm:$0xff]
        %v2398 = vld [vmem:[%s2394 + $0x18] sm:$0xff]
        %v2399 = vld [vmem:[%s2394 + $0x20] sm:$0xff]
        %v2400 = vld [vmem:[%s2394 + $0x28] sm:$0xff]
        %v2401 = vld [vmem:[%s2394 + $0x30] sm:$0xff]
        %v2402 = vld [vmem:[%s2394 + $0x38] sm:$0xff]
        %v2403 = vld [vmem:[%s2394 + $0x40] sm:$0xff]
        %v2404 = vld [vmem:[%s2394 + $0x48] sm:$0xff]
        %v2405 = vld [vmem:[%s2394 + $0x50] sm:$0xff]
        %v2406 = vld [vmem:[%s2394 + $0x58] sm:$0xff]
        %v2407 = vld [vmem:[%s2394 + $0x60] sm:$0xff]
        %v2408 = vld [vmem:[%s2394 + $0x68] sm:$0xff]
        %v2409 = vld [vmem:[%s2394 + $0x70] sm:$0xff]
        %v2410 = vld [vmem:[%s2394 + $0x78] sm:$0xff]
        %2411 = vmatpush.msra.mxu0 %v2410
        %2412 = vmatpush.msra.mxu0 %v2409
        %2413 = vmatpush.msra.mxu0 %v2408
        %2414 = vmatpush.msra.mxu0 %v2407
        %2415 = vmatpush.msra.mxu0 %v2406
        %2416 = vmatpush.msra.mxu0 %v2405
        %2417 = vmatpush.msra.mxu0 %v2404
        %2418 = vmatpush.msra.mxu0 %v2403
        %2419 = vmatpush.msra.mxu0 %v2402
        %2420 = vmatpush.msra.mxu0 %v2401
        %2421 = vmatpush.msra.mxu0 %v2400
        %2422 = vmatpush.msra.mxu0 %v2399
        %2423 = vmatpush.msra.mxu0 %v2398
        %2424 = vmatpush.msra.mxu0 %v2397
        %2425 = vmatpush.msra.mxu0 %v2396
        %2426 = vmatpush.msra.mxu0 %v2395
        %2427 = vmatmul.f32.gmra.mxu0 %v2393
        %v2428 = vpop.f32.mrf.mxu0
        %v2429 = vadd.f32 0.0, %v2428
        %2430 = vdwg.mxu0
        %v2431 = vadd.f32 %v2392, %v2429
        %v2432 = vld [vmem:[%s10] sm:$0x1]
        %v2433 = vadd.f32 %v2431, %v2432
        %v2434 = vmax.f32 %v2433, 0.0
        %v2435 = vperm.slane %v2434, 0
        %v2436 = vld [vmem:[#allocation8] sm:$0xff]
        %v2437 = vld [vmem:[#allocation8 + $0x8] sm:$0xff]
        %v2438 = vld [vmem:[#allocation8 + $0x10] sm:$0xff]
        %v2439 = vld [vmem:[#allocation8 + $0x18] sm:$0xff]
        %v2440 = vld [vmem:[#allocation8 + $0x20] sm:$0xff]
        %v2441 = vld [vmem:[#allocation8 + $0x28] sm:$0xff]
        %v2442 = vld [vmem:[#allocation8 + $0x30] sm:$0xff]
        %v2443 = vld [vmem:[#allocation8 + $0x38] sm:$0xff]
        %v2444 = vld [vmem:[#allocation8 + $0x40] sm:$0xff]
        %v2445 = vld [vmem:[#allocation8 + $0x48] sm:$0xff]
        %v2446 = vld [vmem:[#allocation8 + $0x50] sm:$0xff]
        %v2447 = vld [vmem:[#allocation8 + $0x58] sm:$0xff]
        %v2448 = vld [vmem:[#allocation8 + $0x60] sm:$0xff]
        %v2449 = vld [vmem:[#allocation8 + $0x68] sm:$0xff]
        %v2450 = vld [vmem:[#allocation8 + $0x70] sm:$0xff]
        %v2451 = vld [vmem:[#allocation8 + $0x78] sm:$0xff]
        %v2452 = vld [vmem:[%s12] sm:$0x1]
        %v2454 = vperm.slane %v2452, 0
        %2456 = vmatpush.msra.mxu0 %v2451
        %2457 = vmatpush.msra.mxu0 %v2450
        %2458 = vmatpush.msra.mxu0 %v2449
        %2459 = vmatpush.msra.mxu0 %v2448
        %2460 = vmatpush.msra.mxu0 %v2447
        %2461 = vmatpush.msra.mxu0 %v2446
        %2462 = vmatpush.msra.mxu0 %v2445
        %2463 = vmatpush.msra.mxu0 %v2444
        %2464 = vmatpush.msra.mxu0 %v2443
        %2465 = vmatpush.msra.mxu0 %v2442
        %2466 = vmatpush.msra.mxu0 %v2441
        %2467 = vmatpush.msra.mxu0 %v2440
        %2468 = vmatpush.msra.mxu0 %v2439
        %2469 = vmatpush.msra.mxu0 %v2438
        %2470 = vmatpush.msra.mxu0 %v2437
        %2471 = vmatpush.msra.mxu0 %v2436
        %2472 = vmatmul.f32.gmra.mxu0 %v2435
        %v2473 = vpop.f32.mrf.mxu0
        %v2474 = vadd.f32 %v2454, %v2473
        %2475 = vdwg.mxu0
        %v2476 = vmax.f32 %v2474, 0.0
        %v2477 = vld [vmem:[#allocation9] sm:$0xff]
        %v2478 = vld [vmem:[#allocation9 + $0x8] sm:$0xff]
        %v2479 = vld [vmem:[#allocation9 + $0x10] sm:$0xff]
        %v2480 = vld [vmem:[#allocation9 + $0x18] sm:$0xff]
        %v2481 = vld [vmem:[#allocation9 + $0x20] sm:$0xff]
        %v2482 = vld [vmem:[#allocation9 + $0x28] sm:$0xff]
        %v2483 = vld [vmem:[#allocation9 + $0x30] sm:$0xff]
        %v2484 = vld [vmem:[#allocation9 + $0x38] sm:$0xff]
        %v2485 = vld [vmem:[#allocation9 + $0x40] sm:$0xff]
        %v2486 = vld [vmem:[#allocation9 + $0x48] sm:$0xff]
        %v2487 = vld [vmem:[#allocation9 + $0x50] sm:$0xff]
        %v2488 = vld [vmem:[#allocation9 + $0x58] sm:$0xff]
        %v2489 = vld [vmem:[#allocation9 + $0x60] sm:$0xff]
        %v2490 = vld [vmem:[#allocation9 + $0x68] sm:$0xff]
        %v2491 = vld [vmem:[#allocation9 + $0x70] sm:$0xff]
        %v2492 = vld [vmem:[#allocation9 + $0x78] sm:$0xff]
        %v2493 = vld [vmem:[%s14] sm:$0x1]
        %v2495 = vperm.slane %v2493, 0
        %2497 = vmatpush.msra.mxu0 %v2492
        %2498 = vmatpush.msra.mxu0 %v2491
        %2499 = vmatpush.msra.mxu0 %v2490
        %2500 = vmatpush.msra.mxu0 %v2489
        %2501 = vmatpush.msra.mxu0 %v2488
        %2502 = vmatpush.msra.mxu0 %v2487
        %2503 = vmatpush.msra.mxu0 %v2486
        %2504 = vmatpush.msra.mxu0 %v2485
        %2505 = vmatpush.msra.mxu0 %v2484
        %2506 = vmatpush.msra.mxu0 %v2483
        %2507 = vmatpush.msra.mxu0 %v2482
        %2508 = vmatpush.msra.mxu0 %v2481
        %2509 = vmatpush.msra.mxu0 %v2480
        %2510 = vmatpush.msra.mxu0 %v2479
        %2511 = vmatpush.msra.mxu0 %v2478
        %2512 = vmatpush.msra.mxu0 %v2477
        %2513 = vmatmul.f32.gmra.mxu0 %v2476
        %v2514 = vpop.f32.mrf.mxu0
        %v2515 = vadd.f32 %v2495, %v2514
        %2516 = vdwg.mxu0
        %2517 = vst [vmem:[%s559] sm:$0xff] %v2515
        %p2518 = scmp.lt.s32.totalorder %s29, 1
        %s2519 = scalar_select %p2518, %s29, 1
        %s2520 = smul.addr %s2519, 8
        %s2521 = scalar_lea.vmem %s15, %s2520
        // Predicated region
        $region97: #{net_forward.1} parent=79 // pred_check
          %p2522 = pneg %p367
        $region98: #{net_forward.1} parent=79 // pred_check_branch
          %2524 = sbr.rel (%p2522) target = $region100
        $region99: #{net_forward.1} parent=79 // pred_region
          _
        $region100: #{net_forward.1} parent=79 // pred_fallthru
          _
      $region80: #{net_forward.1} parent=5 // pred_fallthru
        _
      %p2525 = scmp.le.s32.totalorder 2, %s24
      // Predicated region
      $region101: #{net_forward.1} parent=5 // pred_check
        %p2526 = pneg %p2525
      $region102: #{net_forward.1} parent=5 // pred_check_branch
        %2528 = sbr.rel (%p2526) target = $region104
      $region103: #{net_forward.1} parent=5 // pred_region
        %s2529 = ssub.s32 %s24, 2
        // Predicated region
        $region105: #{net_forward.1} parent=103 // pred_check
          %p2530 = pneg %p373
        $region106: #{net_forward.1} parent=103 // pred_check_branch
          %2532 = sbr.rel (%p2530) target = $region108
        $region107: #{net_forward.1} parent=103 // pred_region
          %p2533 = scmp.lt.s32.totalorder %s30, 1
          %s2534 = scalar_select %p2533, %s30, 1
          %s2535 = smul.addr %s2534, 8
          %s2536 = scalar_lea.vmem %s15, %s2535
        $region108: #{net_forward.1} parent=103 // pred_fallthru
          _
      $region104: #{net_forward.1} parent=5 // pred_fallthru
        _
    $region6: #{net_forward.1} parent=1 // loop_footer
      %s28 = sadd.s32 1, %s24
    $region7: #{net_forward.1} parent=1 // loop_footer_branch
      %23 = sbr.rel target = $region3
    $region8: #{net_forward.1} parent=1 // loop_exit
      _
    %2537 = vsyncpa [#allocation5], 1
    %s2538 = scalar_lea.sflag [#allocation5], 1
    %2539 = vsyncpa %s2538, 1
    %2540 = vsyncpa [#allocation7], 1
    %2541 = vsyncpa [#allocation10], 1

</llo_original>
